<compile_context>
chip_gen: v5e
topology: v5e:2x2
jax: 0.10.0
libtpu: 0.0.40
codegen_flags: <defaults>
</compile_context>

<pallas_src>
import math

import jax
import jax.numpy as jnp
from jax import lax
from jax.experimental import pallas as pl
from jax.experimental.pallas import tpu as pltpu

NEG_SLOPE = 0.01
BN_EPS = 1e-5


def _leaky(x):
    return jnp.where(x > 0, x, NEG_SLOPE * x)


def _ru(n, m):
    return ((n + m - 1) // m) * m


def _full_spec(arr):
    nd = arr.ndim
    return pl.BlockSpec(arr.shape, lambda g, _nd=nd: (0,) * _nd)


def _conv_meta(cfg):
    """Static per-conv-layer geometry (kernel, pad, pool, channel/length sizes)."""
    meta = []
    L, cin = cfg["seq_len"], 4          # conv1 kernel height (4) folded into channels
    for K, pad, p, cout in zip(cfg["kernel_widths"], cfg["paddings"],
                               cfg["pooling_widths"], cfg["num_channels"]):
        L_conv = L + 2 * pad - (K - 1)  # stride-1 conv output length
        L_out = -(-L_conv // p)         # ceil_mode pooling
        meta.append(dict(K=K, pad=pad, p=p, cin=cin, cout=cout,
                         L_in=L, L_conv=L_conv, L_out=L_out,
                         L_pad=_ru(L_conv, 8)))   # 8-aligned rows -> clean reshapes
        L, cin = L_out, cout
    return meta


# --------------------------- fused forward kernel ------------------------------
def _make_fused_kernel(meta, n_fc, seq_len, tb, out_pad):
    n_conv = len(meta)

    def kernel(*refs):
        # refs = patches1, (w2d, scale, shift)*n_conv, w1p, b1, (W, b)*(n_fc-1), out
        i = 0
        p1_ref = refs[i]; i += 1
        conv_refs = [refs[i + 3 * c: i + 3 * c + 3] for c in range(n_conv)]
        i += 3 * n_conv
        w1_ref, b1_ref = refs[i], refs[i + 1]; i += 2
        fc_refs = [refs[i + 2 * c: i + 2 * c + 2] for c in range(n_fc - 1)]
        i += 2 * (n_fc - 1)
        o_ref = refs[i]

        def conv_tail(acc2d, m, sc_ref, sh_ref, flat_last):
            """Folded BN + LeakyReLU + register-level ceil-mode MaxPool."""
            cout, p = m["cout"], m["p"]
            L_conv, L_out, L_pad = m["L_conv"], m["L_out"], m["L_pad"]
            act = _leaky(acc2d * sc_ref[...] + sh_ref[...])   # (tb*L_pad, cout)
            act3 = act.reshape(tb, L_pad, cout)               # tile-aligned split
            if flat_last:
                # last conv: build the flat FC input directly, (l-major, c-minor)
                pieces = [jnp.max(act3[:, l * p:min(l * p + p, L_conv), :], axis=1)
                          for l in range(L_out)]
                return jnp.concatenate(pieces, axis=1)         # (tb, L_out*cout)
            pieces = [jnp.max(act3[:, l * p:min(l * p + p, L_conv), :],
                              axis=1, keepdims=True)
                      for l in range(L_out)]
            return jnp.concatenate(pieces, axis=1)             # (tb, L_out, cout)

        # ---- conv1: im2col done in the wrapper -> single MXU matmul ----------
        m = meta[0]
        w_ref, sc_ref, sh_ref = conv_refs[0]
        acc = jnp.dot(p1_ref[...], w_ref[...], preferred_element_type=jnp.float32)
        h = conv_tail(acc, m, sc_ref, sh_ref, flat_last=(n_conv == 1))

        # ---- conv2..: in-kernel im2col (shifted slices + lane concat), 1 matmul
        for c in range(1, n_conv):
            m = meta[c]
            w_ref, sc_ref, sh_ref = conv_refs[c]
            K, pad, cin = m["K"], m["pad"], m["cin"]
            L_conv, L_pad = m["L_conv"], m["L_pad"]
            if pad > 0:
                z = jnp.zeros((tb, pad, cin), jnp.float32)
                hp = jnp.concatenate([z, h, z], axis=1)        # "same" zero pad
            else:
                hp = h
            patches = jnp.concatenate(
                [hp[:, k:k + L_conv, :] for k in range(K)], axis=2)  # (tb,L_conv,K*cin)
            if L_pad > L_conv:                                  # 8-align rows
                patches = jnp.concatenate(
                    [patches, jnp.zeros((tb, L_pad - L_conv, K * cin), jnp.float32)],
                    axis=1)
            acc = jnp.dot(patches.reshape(tb * L_pad, K * cin), w_ref[...],
                          preferred_element_type=jnp.float32)
            h = conv_tail(acc, m, sc_ref, sh_ref, flat_last=(c == n_conv - 1))

        # ---- encoder FC (flatten permutation folded into w1p) ----------------
        z = _leaky(jnp.dot(h, w1_ref[...], preferred_element_type=jnp.float32)
                   + b1_ref[...])

        # ---- decoder FC chain (final Linear has no activation) ---------------
        for j, (W_ref, b_ref) in enumerate(fc_refs):
            z = jnp.dot(z, W_ref[...],
                        preferred_element_type=jnp.float32) + b_ref[...]
            if j < len(fc_refs) - 1:
                z = _leaky(z)

        # ---- softmax over the 4 nucleotides (groups of seq_len lanes) --------
        rows = [z[:, a * seq_len:(a + 1) * seq_len] for a in range(4)]
        mx = jnp.maximum(jnp.maximum(rows[0], rows[1]),
                         jnp.maximum(rows[2], rows[3]))
        es = [jnp.exp(r - mx) for r in rows]
        # exact reciprocal to hold the 1e-4 row-sum check; approx=True is a free
        # EUP-slot win if a looser tolerance is acceptable.
        inv = pl.reciprocal(es[0] + es[1] + es[2] + es[3], approx=False)
        probs = jnp.concatenate([e * inv for e in es], axis=1)      # (tb, 4*L)
        if out_pad > 4 * seq_len:                                   # lane-dense store
            probs = jnp.concatenate(
                [probs, jnp.zeros((tb, out_pad - 4 * seq_len), jnp.float32)], axis=1)
        o_ref[...] = probs

    return kernel


def forward_pallas(x, params, cfg, tb=None):
    # x: (B, 1, 4, seq_len) float32, NCHW like the PyTorch module.
    B = x.shape[0]
    seq_len = cfg["seq_len"]
    meta = _conv_meta(cfg)
    n_fc = len(params["fc"])

    # ---- host-side conv1 im2col (patch columns are tap-major / channel-minor)
    m0 = meta[0]
    K1, pad1, L1, L1p = m0["K"], m0["pad"], m0["L_conv"], m0["L_pad"]
    h0 = x.reshape(B, 4, seq_len).transpose(0, 2, 1).astype(jnp.float32)  # (B, L, 4)
    hp = jnp.pad(h0, ((0, 0), (pad1, pad1), (0, 0)))
    patches1 = jnp.concatenate([hp[:, k:k + L1, :] for k in range(K1)], axis=2)
    if L1p > L1:
        patches1 = jnp.pad(patches1, ((0, 0), (0, L1p - L1), (0, 0)))

    # ---- batch tile: TB elements per grid step ------------------------------
    if tb is None:
        tb = B if B <= 128 else 128          # one step for small B, 128-wide tiles else
    if B > tb:
        tb = max(8, (tb // 8) * 8)           # multi-step grids need 8-aligned blocks
    B_pad = _ru(B, tb)
    if B_pad > B:
        patches1 = jnp.pad(patches1, ((0, B_pad - B), (0, 0), (0, 0)))
    grid = (B_pad // tb,)
    patches1 = patches1.reshape(B_pad * L1p, K1 * 4)   # 2-D slab, matmul'd directly

    call_args = [patches1]
    in_specs = [pl.BlockSpec((tb * L1p, K1 * 4), lambda g: (g, 0))]

    # conv weights reshaped for the im2col matmul; BN already folded to scale/shift
    for m, blk in zip(meta, params["conv"]):
        w2d = blk["w_taps"].reshape(m["K"] * m["cin"], m["cout"])
        for a in (w2d, blk["scale"], blk["shift"]):
            call_args.append(a)
            in_specs.append(_full_spec(a))

    # first FC: permute weight rows so the kernel's (l-major, c-minor) flatten
    # matches PyTorch's channel-major .view(B, -1) (row index c*L3 + l).
    L3, C3 = meta[-1]["L_out"], meta[-1]["cout"]
    W1, b1 = params["fc"][0]
    latent = W1.shape[1]
    w1p = W1.reshape(C3, L3, latent).transpose(1, 0, 2).reshape(L3 * C3, latent)
    for a in (w1p, b1.reshape(1, -1)):
        call_args.append(a)
        in_specs.append(_full_spec(a))
    for (W, b) in params["fc"][1:]:
        for a in (W, b.reshape(1, -1)):
            call_args.append(a)
            in_specs.append(_full_spec(a))

    out_pad = _ru(4 * seq_len, 128)          # lane-dense, unmasked output stores

    # NOTE: at tb=128 / seq_len=100 the per-step footprint (~25 MB incl. double-
    # buffered patches) fits the default scoped VMEM on all generations; raise
    # vmem_limit_bytes via CompilerParams if tb or seq_len grow substantially.
    out = pl.pallas_call(
        _make_fused_kernel(meta, n_fc, seq_len, tb, out_pad),
        out_shape=jax.ShapeDtypeStruct((B_pad, out_pad), jnp.float32),
        grid=grid,
        in_specs=in_specs,
        out_specs=pl.BlockSpec((tb, out_pad), lambda g: (g, 0)),
        compiler_params=pltpu.CompilerParams(dimension_semantics=("parallel",)),
    )(*call_args)
    return out[:B, :4 * seq_len].reshape(B, 1, 4, seq_len)


# --------------- parameter setup (deterministic, xavier-uniform-like) ----------
def init_params(key, cfg):
    seq_len = cfg["seq_len"]
    num_channels = [1] + list(cfg["num_channels"])
    kernel_widths = cfg["kernel_widths"]
    pooling_widths = cfg["pooling_widths"]
    latent_dim = cfg["latent_dim"]
    decoder_sizes = list(cfg["decoder_sizes"])

    compressed = seq_len
    for p in pooling_widths:
        compressed = math.ceil(compressed / p)
    fc_input = compressed * num_channels[-1]

    params = {"conv": [], "fc": []}
    for i, (cin, cout, K) in enumerate(zip(num_channels[:-1], num_channels[1:],
                                           kernel_widths)):
        kh = 4 if i == 0 else 1
        cin_eff = cin * kh                    # fold conv kernel height into channels
        key, k1, k2, k3 = jax.random.split(key, 4)
        bound = math.sqrt(6.0 / (cin_eff * K + cout * K))
        w_taps = jax.random.uniform(k1, (K, cin_eff, cout), jnp.float32,
                                    -bound, bound)
        bias = jnp.zeros((cout,), jnp.float32)          # PyTorch init: constant 0
        gamma = jax.random.uniform(k2, (cout,), jnp.float32, 0.9, 1.1)
        beta = 0.05 * jax.random.normal(k3, (cout,), jnp.float32)
        run_mean = jnp.zeros((cout,), jnp.float32)
        run_var = jnp.ones((cout,), jnp.float32)
        scale = gamma / jnp.sqrt(run_var + BN_EPS)
        shift = beta + (bias - run_mean) * scale
        params["conv"].append(dict(w_taps=w_taps,
                                   scale=scale.reshape(1, -1),
                                   shift=shift.reshape(1, -1)))

    # FC chain: fc_input -> latent -> fc_input -> d1 -> ... -> dn -> 4*seq_len
    layer_dims = [fc_input, latent_dim, fc_input] + decoder_sizes + [4 * seq_len]
    for din, dout in zip(layer_dims[:-1], layer_dims[1:]):
        key, kw = jax.random.split(key)
        bound = math.sqrt(6.0 / (din + dout))
        W = jax.random.uniform(kw, (din, dout), jnp.float32, -bound, bound)
        b = jnp.zeros((dout,), jnp.float32)             # PyTorch init: constant 0
        params["fc"].append((W, b))

    cfg = dict(cfg, compressed_seq_len=compressed, fc_input=fc_input)
    return params, cfg


# --------------- pure-JAX reference (for correctness check) ---------------------
def forward_reference(x, params, cfg):
    B = x.shape[0]
    seq_len = cfg["seq_len"]
    h = x.reshape(B, 4, seq_len).astype(jnp.float32)         # (B, C, L)
    for blk, pad, p in zip(params["conv"], cfg["paddings"], cfg["pooling_widths"]):
        w = jnp.transpose(blk["w_taps"], (2, 1, 0))          # (Cout, Cin, K)
        conv = lax.conv_general_dilated(
            h, w, window_strides=(1,), padding=[(pad, pad)],
            dimension_numbers=("NCH", "OIH", "NCH"),
            precision=lax.Precision.HIGHEST)
        conv = conv * blk["scale"].reshape(1, -1, 1) + blk["shift"].reshape(1, -1, 1)
        act = _leaky(conv)
        L = act.shape[-1]
        Lout = -(-L // p)
        actp = jnp.pad(act, ((0, 0), (0, 0), (0, Lout * p - L)),
                       constant_values=jnp.finfo(jnp.float32).min)
        h = actp.reshape(B, act.shape[1], Lout, p).max(axis=-1)
    flat = h.reshape(B, -1)
    for i, (W, b) in enumerate(params["fc"]):
        flat = jnp.dot(flat, W, precision=lax.Precision.HIGHEST) + b
        if i < len(params["fc"]) - 1:
            flat = _leaky(flat)
    y = flat.reshape(B, 1, 4, seq_len)
    return jax.nn.softmax(y, axis=2)


if __name__ == "__main__":
    cfg = dict(
        seq_len=100,                 # small, ceil_mode pooling exercised: 100->34->9->3
        latent_dim=16,
        num_channels=[32, 16, 8],
        kernel_widths=[19, 11, 7],
        pooling_widths=[3, 4, 4],
        decoder_sizes=[64, 128],
        dropout=0.15,                # inference: identity
    )
    cfg["paddings"] = [(k - 1) // 2 for k in cfg["kernel_widths"]]

    key = jax.random.PRNGKey(0)
    key, pkey, xkey = jax.random.split(key, 3)
    params, cfg = init_params(pkey, cfg)

    B = 2
    x = jax.random.normal(xkey, (B, 1, 4, cfg["seq_len"]), jnp.float32)

    out = jax.block_until_ready(forward_pallas(x, params, cfg))
    ref = jax.block_until_ready(forward_reference(x, params, cfg))

    assert out.shape == (B, 1, 4, cfg["seq_len"])
    assert bool(jnp.all(jnp.isfinite(out)))
    assert bool(jnp.allclose(jnp.sum(out, axis=2), 1.0, atol=1e-4))   # softmax dim=2
    assert bool(jnp.allclose(out, ref, atol=2e-3, rtol=2e-3))
    print("KERNEL_OK")
</pallas_src>

<mosaic_0001>
module attributes {stable_mosaic.version = 11 : i64} {
  func.func @kernel(%arg0: i32, %arg1: memref<208x76xf32, #tpu.memory_space<vmem>>, %arg2: memref<76x32xf32, #tpu.memory_space<vmem>>, %arg3: memref<1x32xf32, #tpu.memory_space<vmem>>, %arg4: memref<1x32xf32, #tpu.memory_space<vmem>>, %arg5: memref<352x16xf32, #tpu.memory_space<vmem>>, %arg6: memref<1x16xf32, #tpu.memory_space<vmem>>, %arg7: memref<1x16xf32, #tpu.memory_space<vmem>>, %arg8: memref<112x8xf32, #tpu.memory_space<vmem>>, %arg9: memref<1x8xf32, #tpu.memory_space<vmem>>, %arg10: memref<1x8xf32, #tpu.memory_space<vmem>>, %arg11: memref<24x16xf32, #tpu.memory_space<vmem>>, %arg12: memref<1x16xf32, #tpu.memory_space<vmem>>, %arg13: memref<16x24xf32, #tpu.memory_space<vmem>>, %arg14: memref<1x24xf32, #tpu.memory_space<vmem>>, %arg15: memref<24x64xf32, #tpu.memory_space<vmem>>, %arg16: memref<1x64xf32, #tpu.memory_space<vmem>>, %arg17: memref<64x128xf32, #tpu.memory_space<vmem>>, %arg18: memref<1x128xf32, #tpu.memory_space<vmem>>, %arg19: memref<128x400xf32, #tpu.memory_space<vmem>>, %arg20: memref<1x400xf32, #tpu.memory_space<vmem>>, %arg21: memref<2x512xf32, #tpu.memory_space<vmem>>) attributes {dimension_semantics = [#tpu.dimension_semantics<parallel>], iteration_bounds = array<i64: 1>, scalar_prefetch = 0 : i64, scratch_operands = 0 : i64, tpu.core_type = #tpu.core_type<tc>, window_params = [{transform_indices = @transform_0, window_bounds = array<i64: 208, 76>}, {pipeline_mode = #tpu.pipeline_mode<synchronous>, transform_indices = @transform_1, window_bounds = array<i64: 76, 32>}, {pipeline_mode = #tpu.pipeline_mode<synchronous>, transform_indices = @transform_2, window_bounds = array<i64: 1, 32>}, {pipeline_mode = #tpu.pipeline_mode<synchronous>, transform_indices = @transform_3, window_bounds = array<i64: 1, 32>}, {pipeline_mode = #tpu.pipeline_mode<synchronous>, transform_indices = @transform_4, window_bounds = array<i64: 352, 16>}, {pipeline_mode = #tpu.pipeline_mode<synchronous>, transform_indices = @transform_5, window_bounds = array<i64: 1, 16>}, {pipeline_mode = #tpu.pipeline_mode<synchronous>, transform_indices = @transform_6, window_bounds = array<i64: 1, 16>}, {pipeline_mode = #tpu.pipeline_mode<synchronous>, transform_indices = @transform_7, window_bounds = array<i64: 112, 8>}, {pipeline_mode = #tpu.pipeline_mode<synchronous>, transform_indices = @transform_8, window_bounds = array<i64: 1, 8>}, {pipeline_mode = #tpu.pipeline_mode<synchronous>, transform_indices = @transform_9, window_bounds = array<i64: 1, 8>}, {pipeline_mode = #tpu.pipeline_mode<synchronous>, transform_indices = @transform_10, window_bounds = array<i64: 24, 16>}, {pipeline_mode = #tpu.pipeline_mode<synchronous>, transform_indices = @transform_11, window_bounds = array<i64: 1, 16>}, {pipeline_mode = #tpu.pipeline_mode<synchronous>, transform_indices = @transform_12, window_bounds = array<i64: 16, 24>}, {pipeline_mode = #tpu.pipeline_mode<synchronous>, transform_indices = @transform_13, window_bounds = array<i64: 1, 24>}, {pipeline_mode = #tpu.pipeline_mode<synchronous>, transform_indices = @transform_14, window_bounds = array<i64: 24, 64>}, {pipeline_mode = #tpu.pipeline_mode<synchronous>, transform_indices = @transform_15, window_bounds = array<i64: 1, 64>}, {pipeline_mode = #tpu.pipeline_mode<synchronous>, transform_indices = @transform_16, window_bounds = array<i64: 64, 128>}, {pipeline_mode = #tpu.pipeline_mode<synchronous>, transform_indices = @transform_17, window_bounds = array<i64: 1, 128>}, {pipeline_mode = #tpu.pipeline_mode<synchronous>, transform_indices = @transform_18, window_bounds = array<i64: 128, 400>}, {pipeline_mode = #tpu.pipeline_mode<synchronous>, transform_indices = @transform_19, window_bounds = array<i64: 1, 400>}, {transform_indices = @transform_20, window_bounds = array<i64: 2, 512>}]} {
    %c0 = arith.constant 0 : index
    %c0_0 = arith.constant 0 : index
    %0 = vector.load %arg1[%c0, %c0_0] : memref<208x76xf32, #tpu.memory_space<vmem>>, vector<208x76xf32>
    %c0_1 = arith.constant 0 : index
    %c0_2 = arith.constant 0 : index
    %1 = vector.load %arg2[%c0_1, %c0_2] : memref<76x32xf32, #tpu.memory_space<vmem>>, vector<76x32xf32>
    %cst = arith.constant dense<0.000000e+00> : vector<208x32xf32>
    %2 = tpu.matmul %0, %1, %cst {dimension_numbers = #tpu.dot_dimension_numbers<[1], [0], [0], [1], [0, 0, 1, 1], [], []>} : vector<208x76xf32>, vector<76x32xf32>, vector<208x32xf32> -> vector<208x32xf32>
    %c0_3 = arith.constant 0 : index
    %c0_4 = arith.constant 0 : index
    %3 = vector.load %arg3[%c0_3, %c0_4] : memref<1x32xf32, #tpu.memory_space<vmem>>, vector<1x32xf32>
    %4 = vector.broadcast %3 : vector<1x32xf32> to vector<208x32xf32>
    %5 = arith.mulf %2, %4 : vector<208x32xf32>
    %c0_5 = arith.constant 0 : index
    %c0_6 = arith.constant 0 : index
    %6 = vector.load %arg4[%c0_5, %c0_6] : memref<1x32xf32, #tpu.memory_space<vmem>>, vector<1x32xf32>
    %7 = vector.broadcast %6 : vector<1x32xf32> to vector<208x32xf32>
    %8 = arith.addf %5, %7 : vector<208x32xf32>
    %cst_7 = arith.constant 0.000000e+00 : f32
    %9 = vector.broadcast %cst_7 : f32 to vector<208x32xf32>
    %10 = arith.cmpf ogt, %8, %9 : vector<208x32xf32>
    %cst_8 = arith.constant 0.00999999977 : f32
    %11 = vector.broadcast %cst_8 : f32 to vector<208x32xf32>
    %12 = arith.mulf %11, %8 : vector<208x32xf32>
    %13 = arith.select %10, %8, %12 : vector<208x32xi1>, vector<208x32xf32>
    %14 = vector.shape_cast %13 : vector<208x32xf32> to vector<2x104x32xf32>
    %15 = vector.extract_strided_slice %14 {offsets = [0, 0, 0], sizes = [2, 3, 32], strides = [1, 1, 1]} : vector<2x104x32xf32> to vector<2x3x32xf32>
    %cst_9 = arith.constant dense<0xFF800000> : vector<2x32xf32>
    %16 = vector.multi_reduction <maximumf>, %15, %cst_9 [1] : vector<2x3x32xf32> to vector<2x32xf32>
    %17 = vector.shape_cast %16 : vector<2x32xf32> to vector<2x1x32xf32>
    %18 = vector.extract_strided_slice %14 {offsets = [0, 3, 0], sizes = [2, 3, 32], strides = [1, 1, 1]} : vector<2x104x32xf32> to vector<2x3x32xf32>
    %cst_10 = arith.constant dense<0xFF800000> : vector<2x32xf32>
    %19 = vector.multi_reduction <maximumf>, %18, %cst_10 [1] : vector<2x3x32xf32> to vector<2x32xf32>
    %20 = vector.shape_cast %19 : vector<2x32xf32> to vector<2x1x32xf32>
    %21 = vector.extract_strided_slice %14 {offsets = [0, 6, 0], sizes = [2, 3, 32], strides = [1, 1, 1]} : vector<2x104x32xf32> to vector<2x3x32xf32>
    %cst_11 = arith.constant dense<0xFF800000> : vector<2x32xf32>
    %22 = vector.multi_reduction <maximumf>, %21, %cst_11 [1] : vector<2x3x32xf32> to vector<2x32xf32>
    %23 = vector.shape_cast %22 : vector<2x32xf32> to vector<2x1x32xf32>
    %24 = vector.extract_strided_slice %14 {offsets = [0, 9, 0], sizes = [2, 3, 32], strides = [1, 1, 1]} : vector<2x104x32xf32> to vector<2x3x32xf32>
    %cst_12 = arith.constant dense<0xFF800000> : vector<2x32xf32>
    %25 = vector.multi_reduction <maximumf>, %24, %cst_12 [1] : vector<2x3x32xf32> to vector<2x32xf32>
    %26 = vector.shape_cast %25 : vector<2x32xf32> to vector<2x1x32xf32>
    %27 = vector.extract_strided_slice %14 {offsets = [0, 12, 0], sizes = [2, 3, 32], strides = [1, 1, 1]} : vector<2x104x32xf32> to vector<2x3x32xf32>
    %cst_13 = arith.constant dense<0xFF800000> : vector<2x32xf32>
    %28 = vector.multi_reduction <maximumf>, %27, %cst_13 [1] : vector<2x3x32xf32> to vector<2x32xf32>
    %29 = vector.shape_cast %28 : vector<2x32xf32> to vector<2x1x32xf32>
    %30 = vector.extract_strided_slice %14 {offsets = [0, 15, 0], sizes = [2, 3, 32], strides = [1, 1, 1]} : vector<2x104x32xf32> to vector<2x3x32xf32>
    %cst_14 = arith.constant dense<0xFF800000> : vector<2x32xf32>
    %31 = vector.multi_reduction <maximumf>, %30, %cst_14 [1] : vector<2x3x32xf32> to vector<2x32xf32>
    %32 = vector.shape_cast %31 : vector<2x32xf32> to vector<2x1x32xf32>
    %33 = vector.extract_strided_slice %14 {offsets = [0, 18, 0], sizes = [2, 3, 32], strides = [1, 1, 1]} : vector<2x104x32xf32> to vector<2x3x32xf32>
    %cst_15 = arith.constant dense<0xFF800000> : vector<2x32xf32>
    %34 = vector.multi_reduction <maximumf>, %33, %cst_15 [1] : vector<2x3x32xf32> to vector<2x32xf32>
    %35 = vector.shape_cast %34 : vector<2x32xf32> to vector<2x1x32xf32>
    %36 = vector.extract_strided_slice %14 {offsets = [0, 21, 0], sizes = [2, 3, 32], strides = [1, 1, 1]} : vector<2x104x32xf32> to vector<2x3x32xf32>
    %cst_16 = arith.constant dense<0xFF800000> : vector<2x32xf32>
    %37 = vector.multi_reduction <maximumf>, %36, %cst_16 [1] : vector<2x3x32xf32> to vector<2x32xf32>
    %38 = vector.shape_cast %37 : vector<2x32xf32> to vector<2x1x32xf32>
    %39 = vector.extract_strided_slice %14 {offsets = [0, 24, 0], sizes = [2, 3, 32], strides = [1, 1, 1]} : vector<2x104x32xf32> to vector<2x3x32xf32>
    %cst_17 = arith.constant dense<0xFF800000> : vector<2x32xf32>
    %40 = vector.multi_reduction <maximumf>, %39, %cst_17 [1] : vector<2x3x32xf32> to vector<2x32xf32>
    %41 = vector.shape_cast %40 : vector<2x32xf32> to vector<2x1x32xf32>
    %42 = vector.extract_strided_slice %14 {offsets = [0, 27, 0], sizes = [2, 3, 32], strides = [1, 1, 1]} : vector<2x104x32xf32> to vector<2x3x32xf32>
    %cst_18 = arith.constant dense<0xFF800000> : vector<2x32xf32>
    %43 = vector.multi_reduction <maximumf>, %42, %cst_18 [1] : vector<2x3x32xf32> to vector<2x32xf32>
    %44 = vector.shape_cast %43 : vector<2x32xf32> to vector<2x1x32xf32>
    %45 = vector.extract_strided_slice %14 {offsets = [0, 30, 0], sizes = [2, 3, 32], strides = [1, 1, 1]} : vector<2x104x32xf32> to vector<2x3x32xf32>
    %cst_19 = arith.constant dense<0xFF800000> : vector<2x32xf32>
    %46 = vector.multi_reduction <maximumf>, %45, %cst_19 [1] : vector<2x3x32xf32> to vector<2x32xf32>
    %47 = vector.shape_cast %46 : vector<2x32xf32> to vector<2x1x32xf32>
    %48 = vector.extract_strided_slice %14 {offsets = [0, 33, 0], sizes = [2, 3, 32], strides = [1, 1, 1]} : vector<2x104x32xf32> to vector<2x3x32xf32>
    %cst_20 = arith.constant dense<0xFF800000> : vector<2x32xf32>
    %49 = vector.multi_reduction <maximumf>, %48, %cst_20 [1] : vector<2x3x32xf32> to vector<2x32xf32>
    %50 = vector.shape_cast %49 : vector<2x32xf32> to vector<2x1x32xf32>
    %51 = vector.extract_strided_slice %14 {offsets = [0, 36, 0], sizes = [2, 3, 32], strides = [1, 1, 1]} : vector<2x104x32xf32> to vector<2x3x32xf32>
    %cst_21 = arith.constant dense<0xFF800000> : vector<2x32xf32>
    %52 = vector.multi_reduction <maximumf>, %51, %cst_21 [1] : vector<2x3x32xf32> to vector<2x32xf32>
    %53 = vector.shape_cast %52 : vector<2x32xf32> to vector<2x1x32xf32>
    %54 = vector.extract_strided_slice %14 {offsets = [0, 39, 0], sizes = [2, 3, 32], strides = [1, 1, 1]} : vector<2x104x32xf32> to vector<2x3x32xf32>
    %cst_22 = arith.constant dense<0xFF800000> : vector<2x32xf32>
    %55 = vector.multi_reduction <maximumf>, %54, %cst_22 [1] : vector<2x3x32xf32> to vector<2x32xf32>
    %56 = vector.shape_cast %55 : vector<2x32xf32> to vector<2x1x32xf32>
    %57 = vector.extract_strided_slice %14 {offsets = [0, 42, 0], sizes = [2, 3, 32], strides = [1, 1, 1]} : vector<2x104x32xf32> to vector<2x3x32xf32>
    %cst_23 = arith.constant dense<0xFF800000> : vector<2x32xf32>
    %58 = vector.multi_reduction <maximumf>, %57, %cst_23 [1] : vector<2x3x32xf32> to vector<2x32xf32>
    %59 = vector.shape_cast %58 : vector<2x32xf32> to vector<2x1x32xf32>
    %60 = vector.extract_strided_slice %14 {offsets = [0, 45, 0], sizes = [2, 3, 32], strides = [1, 1, 1]} : vector<2x104x32xf32> to vector<2x3x32xf32>
    %cst_24 = arith.constant dense<0xFF800000> : vector<2x32xf32>
    %61 = vector.multi_reduction <maximumf>, %60, %cst_24 [1] : vector<2x3x32xf32> to vector<2x32xf32>
    %62 = vector.shape_cast %61 : vector<2x32xf32> to vector<2x1x32xf32>
    %63 = vector.extract_strided_slice %14 {offsets = [0, 48, 0], sizes = [2, 3, 32], strides = [1, 1, 1]} : vector<2x104x32xf32> to vector<2x3x32xf32>
    %cst_25 = arith.constant dense<0xFF800000> : vector<2x32xf32>
    %64 = vector.multi_reduction <maximumf>, %63, %cst_25 [1] : vector<2x3x32xf32> to vector<2x32xf32>
    %65 = vector.shape_cast %64 : vector<2x32xf32> to vector<2x1x32xf32>
    %66 = vector.extract_strided_slice %14 {offsets = [0, 51, 0], sizes = [2, 3, 32], strides = [1, 1, 1]} : vector<2x104x32xf32> to vector<2x3x32xf32>
    %cst_26 = arith.constant dense<0xFF800000> : vector<2x32xf32>
    %67 = vector.multi_reduction <maximumf>, %66, %cst_26 [1] : vector<2x3x32xf32> to vector<2x32xf32>
    %68 = vector.shape_cast %67 : vector<2x32xf32> to vector<2x1x32xf32>
    %69 = vector.extract_strided_slice %14 {offsets = [0, 54, 0], sizes = [2, 3, 32], strides = [1, 1, 1]} : vector<2x104x32xf32> to vector<2x3x32xf32>
    %cst_27 = arith.constant dense<0xFF800000> : vector<2x32xf32>
    %70 = vector.multi_reduction <maximumf>, %69, %cst_27 [1] : vector<2x3x32xf32> to vector<2x32xf32>
    %71 = vector.shape_cast %70 : vector<2x32xf32> to vector<2x1x32xf32>
    %72 = vector.extract_strided_slice %14 {offsets = [0, 57, 0], sizes = [2, 3, 32], strides = [1, 1, 1]} : vector<2x104x32xf32> to vector<2x3x32xf32>
    %cst_28 = arith.constant dense<0xFF800000> : vector<2x32xf32>
    %73 = vector.multi_reduction <maximumf>, %72, %cst_28 [1] : vector<2x3x32xf32> to vector<2x32xf32>
    %74 = vector.shape_cast %73 : vector<2x32xf32> to vector<2x1x32xf32>
    %75 = vector.extract_strided_slice %14 {offsets = [0, 60, 0], sizes = [2, 3, 32], strides = [1, 1, 1]} : vector<2x104x32xf32> to vector<2x3x32xf32>
    %cst_29 = arith.constant dense<0xFF800000> : vector<2x32xf32>
    %76 = vector.multi_reduction <maximumf>, %75, %cst_29 [1] : vector<2x3x32xf32> to vector<2x32xf32>
    %77 = vector.shape_cast %76 : vector<2x32xf32> to vector<2x1x32xf32>
    %78 = vector.extract_strided_slice %14 {offsets = [0, 63, 0], sizes = [2, 3, 32], strides = [1, 1, 1]} : vector<2x104x32xf32> to vector<2x3x32xf32>
    %cst_30 = arith.constant dense<0xFF800000> : vector<2x32xf32>
    %79 = vector.multi_reduction <maximumf>, %78, %cst_30 [1] : vector<2x3x32xf32> to vector<2x32xf32>
    %80 = vector.shape_cast %79 : vector<2x32xf32> to vector<2x1x32xf32>
    %81 = vector.extract_strided_slice %14 {offsets = [0, 66, 0], sizes = [2, 3, 32], strides = [1, 1, 1]} : vector<2x104x32xf32> to vector<2x3x32xf32>
    %cst_31 = arith.constant dense<0xFF800000> : vector<2x32xf32>
    %82 = vector.multi_reduction <maximumf>, %81, %cst_31 [1] : vector<2x3x32xf32> to vector<2x32xf32>
    %83 = vector.shape_cast %82 : vector<2x32xf32> to vector<2x1x32xf32>
    %84 = vector.extract_strided_slice %14 {offsets = [0, 69, 0], sizes = [2, 3, 32], strides = [1, 1, 1]} : vector<2x104x32xf32> to vector<2x3x32xf32>
    %cst_32 = arith.constant dense<0xFF800000> : vector<2x32xf32>
    %85 = vector.multi_reduction <maximumf>, %84, %cst_32 [1] : vector<2x3x32xf32> to vector<2x32xf32>
    %86 = vector.shape_cast %85 : vector<2x32xf32> to vector<2x1x32xf32>
    %87 = vector.extract_strided_slice %14 {offsets = [0, 72, 0], sizes = [2, 3, 32], strides = [1, 1, 1]} : vector<2x104x32xf32> to vector<2x3x32xf32>
    %cst_33 = arith.constant dense<0xFF800000> : vector<2x32xf32>
    %88 = vector.multi_reduction <maximumf>, %87, %cst_33 [1] : vector<2x3x32xf32> to vector<2x32xf32>
    %89 = vector.shape_cast %88 : vector<2x32xf32> to vector<2x1x32xf32>
    %90 = vector.extract_strided_slice %14 {offsets = [0, 75, 0], sizes = [2, 3, 32], strides = [1, 1, 1]} : vector<2x104x32xf32> to vector<2x3x32xf32>
    %cst_34 = arith.constant dense<0xFF800000> : vector<2x32xf32>
    %91 = vector.multi_reduction <maximumf>, %90, %cst_34 [1] : vector<2x3x32xf32> to vector<2x32xf32>
    %92 = vector.shape_cast %91 : vector<2x32xf32> to vector<2x1x32xf32>
    %93 = vector.extract_strided_slice %14 {offsets = [0, 78, 0], sizes = [2, 3, 32], strides = [1, 1, 1]} : vector<2x104x32xf32> to vector<2x3x32xf32>
    %cst_35 = arith.constant dense<0xFF800000> : vector<2x32xf32>
    %94 = vector.multi_reduction <maximumf>, %93, %cst_35 [1] : vector<2x3x32xf32> to vector<2x32xf32>
    %95 = vector.shape_cast %94 : vector<2x32xf32> to vector<2x1x32xf32>
    %96 = vector.extract_strided_slice %14 {offsets = [0, 81, 0], sizes = [2, 3, 32], strides = [1, 1, 1]} : vector<2x104x32xf32> to vector<2x3x32xf32>
    %cst_36 = arith.constant dense<0xFF800000> : vector<2x32xf32>
    %97 = vector.multi_reduction <maximumf>, %96, %cst_36 [1] : vector<2x3x32xf32> to vector<2x32xf32>
    %98 = vector.shape_cast %97 : vector<2x32xf32> to vector<2x1x32xf32>
    %99 = vector.extract_strided_slice %14 {offsets = [0, 84, 0], sizes = [2, 3, 32], strides = [1, 1, 1]} : vector<2x104x32xf32> to vector<2x3x32xf32>
    %cst_37 = arith.constant dense<0xFF800000> : vector<2x32xf32>
    %100 = vector.multi_reduction <maximumf>, %99, %cst_37 [1] : vector<2x3x32xf32> to vector<2x32xf32>
    %101 = vector.shape_cast %100 : vector<2x32xf32> to vector<2x1x32xf32>
    %102 = vector.extract_strided_slice %14 {offsets = [0, 87, 0], sizes = [2, 3, 32], strides = [1, 1, 1]} : vector<2x104x32xf32> to vector<2x3x32xf32>
    %cst_38 = arith.constant dense<0xFF800000> : vector<2x32xf32>
    %103 = vector.multi_reduction <maximumf>, %102, %cst_38 [1] : vector<2x3x32xf32> to vector<2x32xf32>
    %104 = vector.shape_cast %103 : vector<2x32xf32> to vector<2x1x32xf32>
    %105 = vector.extract_strided_slice %14 {offsets = [0, 90, 0], sizes = [2, 3, 32], strides = [1, 1, 1]} : vector<2x104x32xf32> to vector<2x3x32xf32>
    %cst_39 = arith.constant dense<0xFF800000> : vector<2x32xf32>
    %106 = vector.multi_reduction <maximumf>, %105, %cst_39 [1] : vector<2x3x32xf32> to vector<2x32xf32>
    %107 = vector.shape_cast %106 : vector<2x32xf32> to vector<2x1x32xf32>
    %108 = vector.extract_strided_slice %14 {offsets = [0, 93, 0], sizes = [2, 3, 32], strides = [1, 1, 1]} : vector<2x104x32xf32> to vector<2x3x32xf32>
    %cst_40 = arith.constant dense<0xFF800000> : vector<2x32xf32>
    %109 = vector.multi_reduction <maximumf>, %108, %cst_40 [1] : vector<2x3x32xf32> to vector<2x32xf32>
    %110 = vector.shape_cast %109 : vector<2x32xf32> to vector<2x1x32xf32>
    %111 = vector.extract_strided_slice %14 {offsets = [0, 96, 0], sizes = [2, 3, 32], strides = [1, 1, 1]} : vector<2x104x32xf32> to vector<2x3x32xf32>
    %cst_41 = arith.constant dense<0xFF800000> : vector<2x32xf32>
    %112 = vector.multi_reduction <maximumf>, %111, %cst_41 [1] : vector<2x3x32xf32> to vector<2x32xf32>
    %113 = vector.shape_cast %112 : vector<2x32xf32> to vector<2x1x32xf32>
    %114 = vector.extract_strided_slice %14 {offsets = [0, 99, 0], sizes = [2, 1, 32], strides = [1, 1, 1]} : vector<2x104x32xf32> to vector<2x1x32xf32>
    %cst_42 = arith.constant dense<0xFF800000> : vector<2x32xf32>
    %115 = vector.multi_reduction <maximumf>, %114, %cst_42 [1] : vector<2x1x32xf32> to vector<2x32xf32>
    %116 = vector.shape_cast %115 : vector<2x32xf32> to vector<2x1x32xf32>
    %117 = tpu.concatenate %17, %20, %23, %26, %29, %32, %35, %38, %41, %44, %47, %50, %53, %56, %59, %62 in 1 : vector<2x1x32xf32>, vector<2x1x32xf32>, vector<2x1x32xf32>, vector<2x1x32xf32>, vector<2x1x32xf32>, vector<2x1x32xf32>, vector<2x1x32xf32>, vector<2x1x32xf32>, vector<2x1x32xf32>, vector<2x1x32xf32>, vector<2x1x32xf32>, vector<2x1x32xf32>, vector<2x1x32xf32>, vector<2x1x32xf32>, vector<2x1x32xf32>, vector<2x1x32xf32> -> vector<2x16x32xf32>
    %118 = tpu.concatenate %65, %68, %71, %74, %77, %80, %83, %86, %89, %92, %95, %98, %101, %104, %107, %110 in 1 : vector<2x1x32xf32>, vector<2x1x32xf32>, vector<2x1x32xf32>, vector<2x1x32xf32>, vector<2x1x32xf32>, vector<2x1x32xf32>, vector<2x1x32xf32>, vector<2x1x32xf32>, vector<2x1x32xf32>, vector<2x1x32xf32>, vector<2x1x32xf32>, vector<2x1x32xf32>, vector<2x1x32xf32>, vector<2x1x32xf32>, vector<2x1x32xf32>, vector<2x1x32xf32> -> vector<2x16x32xf32>
    %119 = tpu.concatenate %113, %116 in 1 : vector<2x1x32xf32>, vector<2x1x32xf32> -> vector<2x2x32xf32>
    %120 = tpu.concatenate %117, %118, %119 in 1 : vector<2x16x32xf32>, vector<2x16x32xf32>, vector<2x2x32xf32> -> vector<2x34x32xf32>
    %cst_43 = arith.constant 0.000000e+00 : f32
    %121 = vector.broadcast %cst_43 : f32 to vector<2x5x32xf32>
    %122 = tpu.concatenate %121, %120, %121 in 1 : vector<2x5x32xf32>, vector<2x34x32xf32>, vector<2x5x32xf32> -> vector<2x44x32xf32>
    %123 = vector.extract_strided_slice %122 {offsets = [0, 0, 0], sizes = [2, 34, 32], strides = [1, 1, 1]} : vector<2x44x32xf32> to vector<2x34x32xf32>
    %124 = vector.extract_strided_slice %122 {offsets = [0, 1, 0], sizes = [2, 34, 32], strides = [1, 1, 1]} : vector<2x44x32xf32> to vector<2x34x32xf32>
    %125 = vector.extract_strided_slice %122 {offsets = [0, 2, 0], sizes = [2, 34, 32], strides = [1, 1, 1]} : vector<2x44x32xf32> to vector<2x34x32xf32>
    %126 = vector.extract_strided_slice %122 {offsets = [0, 3, 0], sizes = [2, 34, 32], strides = [1, 1, 1]} : vector<2x44x32xf32> to vector<2x34x32xf32>
    %127 = vector.extract_strided_slice %122 {offsets = [0, 4, 0], sizes = [2, 34, 32], strides = [1, 1, 1]} : vector<2x44x32xf32> to vector<2x34x32xf32>
    %128 = vector.extract_strided_slice %122 {offsets = [0, 5, 0], sizes = [2, 34, 32], strides = [1, 1, 1]} : vector<2x44x32xf32> to vector<2x34x32xf32>
    %129 = vector.extract_strided_slice %122 {offsets = [0, 6, 0], sizes = [2, 34, 32], strides = [1, 1, 1]} : vector<2x44x32xf32> to vector<2x34x32xf32>
    %130 = vector.extract_strided_slice %122 {offsets = [0, 7, 0], sizes = [2, 34, 32], strides = [1, 1, 1]} : vector<2x44x32xf32> to vector<2x34x32xf32>
    %131 = vector.extract_strided_slice %122 {offsets = [0, 8, 0], sizes = [2, 34, 32], strides = [1, 1, 1]} : vector<2x44x32xf32> to vector<2x34x32xf32>
    %132 = vector.extract_strided_slice %122 {offsets = [0, 9, 0], sizes = [2, 34, 32], strides = [1, 1, 1]} : vector<2x44x32xf32> to vector<2x34x32xf32>
    %133 = vector.extract_strided_slice %122 {offsets = [0, 10, 0], sizes = [2, 34, 32], strides = [1, 1, 1]} : vector<2x44x32xf32> to vector<2x34x32xf32>
    %134 = tpu.concatenate %123, %124, %125, %126, %127, %128, %129, %130, %131, %132, %133 in 2 : vector<2x34x32xf32>, vector<2x34x32xf32>, vector<2x34x32xf32>, vector<2x34x32xf32>, vector<2x34x32xf32>, vector<2x34x32xf32>, vector<2x34x32xf32>, vector<2x34x32xf32>, vector<2x34x32xf32>, vector<2x34x32xf32>, vector<2x34x32xf32> -> vector<2x34x352xf32>
    %cst_44 = arith.constant 0.000000e+00 : f32
    %135 = vector.broadcast %cst_44 : f32 to vector<2x6x352xf32>
    %136 = tpu.concatenate %134, %135 in 1 : vector<2x34x352xf32>, vector<2x6x352xf32> -> vector<2x40x352xf32>
    %137 = vector.shape_cast %136 : vector<2x40x352xf32> to vector<80x352xf32>
    %c0_45 = arith.constant 0 : index
    %c0_46 = arith.constant 0 : index
    %138 = vector.load %arg5[%c0_45, %c0_46] : memref<352x16xf32, #tpu.memory_space<vmem>>, vector<352x16xf32>
    %cst_47 = arith.constant dense<0.000000e+00> : vector<80x16xf32>
    %139 = tpu.matmul %137, %138, %cst_47 {dimension_numbers = #tpu.dot_dimension_numbers<[1], [0], [0], [1], [0, 0, 1, 1], [], []>} : vector<80x352xf32>, vector<352x16xf32>, vector<80x16xf32> -> vector<80x16xf32>
    %c0_48 = arith.constant 0 : index
    %c0_49 = arith.constant 0 : index
    %140 = vector.load %arg6[%c0_48, %c0_49] : memref<1x16xf32, #tpu.memory_space<vmem>>, vector<1x16xf32>
    %141 = vector.broadcast %140 : vector<1x16xf32> to vector<80x16xf32>
    %142 = arith.mulf %139, %141 : vector<80x16xf32>
    %c0_50 = arith.constant 0 : index
    %c0_51 = arith.constant 0 : index
    %143 = vector.load %arg7[%c0_50, %c0_51] : memref<1x16xf32, #tpu.memory_space<vmem>>, vector<1x16xf32>
    %144 = vector.broadcast %143 : vector<1x16xf32> to vector<80x16xf32>
    %145 = arith.addf %142, %144 : vector<80x16xf32>
    %cst_52 = arith.constant 0.000000e+00 : f32
    %146 = vector.broadcast %cst_52 : f32 to vector<80x16xf32>
    %147 = arith.cmpf ogt, %145, %146 : vector<80x16xf32>
    %cst_53 = arith.constant 0.00999999977 : f32
    %148 = vector.broadcast %cst_53 : f32 to vector<80x16xf32>
    %149 = arith.mulf %148, %145 : vector<80x16xf32>
    %150 = arith.select %147, %145, %149 : vector<80x16xi1>, vector<80x16xf32>
    %151 = vector.shape_cast %150 : vector<80x16xf32> to vector<2x40x16xf32>
    %152 = vector.extract_strided_slice %151 {offsets = [0, 0, 0], sizes = [2, 4, 16], strides = [1, 1, 1]} : vector<2x40x16xf32> to vector<2x4x16xf32>
    %cst_54 = arith.constant dense<0xFF800000> : vector<2x16xf32>
    %153 = vector.multi_reduction <maximumf>, %152, %cst_54 [1] : vector<2x4x16xf32> to vector<2x16xf32>
    %154 = vector.shape_cast %153 : vector<2x16xf32> to vector<2x1x16xf32>
    %155 = vector.extract_strided_slice %151 {offsets = [0, 4, 0], sizes = [2, 4, 16], strides = [1, 1, 1]} : vector<2x40x16xf32> to vector<2x4x16xf32>
    %cst_55 = arith.constant dense<0xFF800000> : vector<2x16xf32>
    %156 = vector.multi_reduction <maximumf>, %155, %cst_55 [1] : vector<2x4x16xf32> to vector<2x16xf32>
    %157 = vector.shape_cast %156 : vector<2x16xf32> to vector<2x1x16xf32>
    %158 = vector.extract_strided_slice %151 {offsets = [0, 8, 0], sizes = [2, 4, 16], strides = [1, 1, 1]} : vector<2x40x16xf32> to vector<2x4x16xf32>
    %cst_56 = arith.constant dense<0xFF800000> : vector<2x16xf32>
    %159 = vector.multi_reduction <maximumf>, %158, %cst_56 [1] : vector<2x4x16xf32> to vector<2x16xf32>
    %160 = vector.shape_cast %159 : vector<2x16xf32> to vector<2x1x16xf32>
    %161 = vector.extract_strided_slice %151 {offsets = [0, 12, 0], sizes = [2, 4, 16], strides = [1, 1, 1]} : vector<2x40x16xf32> to vector<2x4x16xf32>
    %cst_57 = arith.constant dense<0xFF800000> : vector<2x16xf32>
    %162 = vector.multi_reduction <maximumf>, %161, %cst_57 [1] : vector<2x4x16xf32> to vector<2x16xf32>
    %163 = vector.shape_cast %162 : vector<2x16xf32> to vector<2x1x16xf32>
    %164 = vector.extract_strided_slice %151 {offsets = [0, 16, 0], sizes = [2, 4, 16], strides = [1, 1, 1]} : vector<2x40x16xf32> to vector<2x4x16xf32>
    %cst_58 = arith.constant dense<0xFF800000> : vector<2x16xf32>
    %165 = vector.multi_reduction <maximumf>, %164, %cst_58 [1] : vector<2x4x16xf32> to vector<2x16xf32>
    %166 = vector.shape_cast %165 : vector<2x16xf32> to vector<2x1x16xf32>
    %167 = vector.extract_strided_slice %151 {offsets = [0, 20, 0], sizes = [2, 4, 16], strides = [1, 1, 1]} : vector<2x40x16xf32> to vector<2x4x16xf32>
    %cst_59 = arith.constant dense<0xFF800000> : vector<2x16xf32>
    %168 = vector.multi_reduction <maximumf>, %167, %cst_59 [1] : vector<2x4x16xf32> to vector<2x16xf32>
    %169 = vector.shape_cast %168 : vector<2x16xf32> to vector<2x1x16xf32>
    %170 = vector.extract_strided_slice %151 {offsets = [0, 24, 0], sizes = [2, 4, 16], strides = [1, 1, 1]} : vector<2x40x16xf32> to vector<2x4x16xf32>
    %cst_60 = arith.constant dense<0xFF800000> : vector<2x16xf32>
    %171 = vector.multi_reduction <maximumf>, %170, %cst_60 [1] : vector<2x4x16xf32> to vector<2x16xf32>
    %172 = vector.shape_cast %171 : vector<2x16xf32> to vector<2x1x16xf32>
    %173 = vector.extract_strided_slice %151 {offsets = [0, 28, 0], sizes = [2, 4, 16], strides = [1, 1, 1]} : vector<2x40x16xf32> to vector<2x4x16xf32>
    %cst_61 = arith.constant dense<0xFF800000> : vector<2x16xf32>
    %174 = vector.multi_reduction <maximumf>, %173, %cst_61 [1] : vector<2x4x16xf32> to vector<2x16xf32>
    %175 = vector.shape_cast %174 : vector<2x16xf32> to vector<2x1x16xf32>
    %176 = vector.extract_strided_slice %151 {offsets = [0, 32, 0], sizes = [2, 2, 16], strides = [1, 1, 1]} : vector<2x40x16xf32> to vector<2x2x16xf32>
    %cst_62 = arith.constant dense<0xFF800000> : vector<2x16xf32>
    %177 = vector.multi_reduction <maximumf>, %176, %cst_62 [1] : vector<2x2x16xf32> to vector<2x16xf32>
    %178 = vector.shape_cast %177 : vector<2x16xf32> to vector<2x1x16xf32>
    %179 = tpu.concatenate %154, %157, %160, %163, %166, %169, %172, %175, %178 in 1 : vector<2x1x16xf32>, vector<2x1x16xf32>, vector<2x1x16xf32>, vector<2x1x16xf32>, vector<2x1x16xf32>, vector<2x1x16xf32>, vector<2x1x16xf32>, vector<2x1x16xf32>, vector<2x1x16xf32> -> vector<2x9x16xf32>
    %cst_63 = arith.constant 0.000000e+00 : f32
    %180 = vector.broadcast %cst_63 : f32 to vector<2x3x16xf32>
    %181 = tpu.concatenate %180, %179, %180 in 1 : vector<2x3x16xf32>, vector<2x9x16xf32>, vector<2x3x16xf32> -> vector<2x15x16xf32>
    %182 = vector.extract_strided_slice %181 {offsets = [0, 0, 0], sizes = [2, 9, 16], strides = [1, 1, 1]} : vector<2x15x16xf32> to vector<2x9x16xf32>
    %183 = vector.extract_strided_slice %181 {offsets = [0, 1, 0], sizes = [2, 9, 16], strides = [1, 1, 1]} : vector<2x15x16xf32> to vector<2x9x16xf32>
    %184 = vector.extract_strided_slice %181 {offsets = [0, 2, 0], sizes = [2, 9, 16], strides = [1, 1, 1]} : vector<2x15x16xf32> to vector<2x9x16xf32>
    %185 = vector.extract_strided_slice %181 {offsets = [0, 3, 0], sizes = [2, 9, 16], strides = [1, 1, 1]} : vector<2x15x16xf32> to vector<2x9x16xf32>
    %186 = vector.extract_strided_slice %181 {offsets = [0, 4, 0], sizes = [2, 9, 16], strides = [1, 1, 1]} : vector<2x15x16xf32> to vector<2x9x16xf32>
    %187 = vector.extract_strided_slice %181 {offsets = [0, 5, 0], sizes = [2, 9, 16], strides = [1, 1, 1]} : vector<2x15x16xf32> to vector<2x9x16xf32>
    %188 = vector.extract_strided_slice %181 {offsets = [0, 6, 0], sizes = [2, 9, 16], strides = [1, 1, 1]} : vector<2x15x16xf32> to vector<2x9x16xf32>
    %189 = tpu.concatenate %182, %183, %184, %185, %186, %187, %188 in 2 : vector<2x9x16xf32>, vector<2x9x16xf32>, vector<2x9x16xf32>, vector<2x9x16xf32>, vector<2x9x16xf32>, vector<2x9x16xf32>, vector<2x9x16xf32> -> vector<2x9x112xf32>
    %cst_64 = arith.constant 0.000000e+00 : f32
    %190 = vector.broadcast %cst_64 : f32 to vector<2x7x112xf32>
    %191 = tpu.concatenate %189, %190 in 1 : vector<2x9x112xf32>, vector<2x7x112xf32> -> vector<2x16x112xf32>
    %192 = vector.shape_cast %191 : vector<2x16x112xf32> to vector<32x112xf32>
    %c0_65 = arith.constant 0 : index
    %c0_66 = arith.constant 0 : index
    %193 = vector.load %arg8[%c0_65, %c0_66] : memref<112x8xf32, #tpu.memory_space<vmem>>, vector<112x8xf32>
    %cst_67 = arith.constant dense<0.000000e+00> : vector<32x8xf32>
    %194 = tpu.matmul %192, %193, %cst_67 {dimension_numbers = #tpu.dot_dimension_numbers<[1], [0], [0], [1], [0, 0, 1, 1], [], []>} : vector<32x112xf32>, vector<112x8xf32>, vector<32x8xf32> -> vector<32x8xf32>
    %c0_68 = arith.constant 0 : index
    %c0_69 = arith.constant 0 : index
    %195 = vector.load %arg9[%c0_68, %c0_69] : memref<1x8xf32, #tpu.memory_space<vmem>>, vector<1x8xf32>
    %196 = vector.broadcast %195 : vector<1x8xf32> to vector<32x8xf32>
    %197 = arith.mulf %194, %196 : vector<32x8xf32>
    %c0_70 = arith.constant 0 : index
    %c0_71 = arith.constant 0 : index
    %198 = vector.load %arg10[%c0_70, %c0_71] : memref<1x8xf32, #tpu.memory_space<vmem>>, vector<1x8xf32>
    %199 = vector.broadcast %198 : vector<1x8xf32> to vector<32x8xf32>
    %200 = arith.addf %197, %199 : vector<32x8xf32>
    %cst_72 = arith.constant 0.000000e+00 : f32
    %201 = vector.broadcast %cst_72 : f32 to vector<32x8xf32>
    %202 = arith.cmpf ogt, %200, %201 : vector<32x8xf32>
    %cst_73 = arith.constant 0.00999999977 : f32
    %203 = vector.broadcast %cst_73 : f32 to vector<32x8xf32>
    %204 = arith.mulf %203, %200 : vector<32x8xf32>
    %205 = arith.select %202, %200, %204 : vector<32x8xi1>, vector<32x8xf32>
    %206 = vector.shape_cast %205 : vector<32x8xf32> to vector<2x16x8xf32>
    %207 = vector.extract_strided_slice %206 {offsets = [0, 0, 0], sizes = [2, 4, 8], strides = [1, 1, 1]} : vector<2x16x8xf32> to vector<2x4x8xf32>
    %cst_74 = arith.constant dense<0xFF800000> : vector<2x8xf32>
    %208 = vector.multi_reduction <maximumf>, %207, %cst_74 [1] : vector<2x4x8xf32> to vector<2x8xf32>
    %209 = vector.extract_strided_slice %206 {offsets = [0, 4, 0], sizes = [2, 4, 8], strides = [1, 1, 1]} : vector<2x16x8xf32> to vector<2x4x8xf32>
    %cst_75 = arith.constant dense<0xFF800000> : vector<2x8xf32>
    %210 = vector.multi_reduction <maximumf>, %209, %cst_75 [1] : vector<2x4x8xf32> to vector<2x8xf32>
    %211 = vector.extract_strided_slice %206 {offsets = [0, 8, 0], sizes = [2, 1, 8], strides = [1, 1, 1]} : vector<2x16x8xf32> to vector<2x1x8xf32>
    %cst_76 = arith.constant dense<0xFF800000> : vector<2x8xf32>
    %212 = vector.multi_reduction <maximumf>, %211, %cst_76 [1] : vector<2x1x8xf32> to vector<2x8xf32>
    %213 = tpu.concatenate %208, %210, %212 in 1 : vector<2x8xf32>, vector<2x8xf32>, vector<2x8xf32> -> vector<2x24xf32>
    %c0_77 = arith.constant 0 : index
    %c0_78 = arith.constant 0 : index
    %214 = vector.load %arg11[%c0_77, %c0_78] : memref<24x16xf32, #tpu.memory_space<vmem>>, vector<24x16xf32>
    %cst_79 = arith.constant dense<0.000000e+00> : vector<2x16xf32>
    %215 = tpu.matmul %213, %214, %cst_79 {dimension_numbers = #tpu.dot_dimension_numbers<[1], [0], [0], [1], [0, 0, 1, 1], [], []>} : vector<2x24xf32>, vector<24x16xf32>, vector<2x16xf32> -> vector<2x16xf32>
    %c0_80 = arith.constant 0 : index
    %c0_81 = arith.constant 0 : index
    %216 = vector.load %arg12[%c0_80, %c0_81] : memref<1x16xf32, #tpu.memory_space<vmem>>, vector<1x16xf32>
    %217 = vector.broadcast %216 : vector<1x16xf32> to vector<2x16xf32>
    %218 = arith.addf %215, %217 : vector<2x16xf32>
    %cst_82 = arith.constant 0.000000e+00 : f32
    %219 = vector.broadcast %cst_82 : f32 to vector<2x16xf32>
    %220 = arith.cmpf ogt, %218, %219 : vector<2x16xf32>
    %cst_83 = arith.constant 0.00999999977 : f32
    %221 = vector.broadcast %cst_83 : f32 to vector<2x16xf32>
    %222 = arith.mulf %221, %218 : vector<2x16xf32>
    %223 = arith.select %220, %218, %222 : vector<2x16xi1>, vector<2x16xf32>
    %c0_84 = arith.constant 0 : index
    %c0_85 = arith.constant 0 : index
    %224 = vector.load %arg13[%c0_84, %c0_85] : memref<16x24xf32, #tpu.memory_space<vmem>>, vector<16x24xf32>
    %cst_86 = arith.constant dense<0.000000e+00> : vector<2x24xf32>
    %225 = tpu.matmul %223, %224, %cst_86 {dimension_numbers = #tpu.dot_dimension_numbers<[1], [0], [0], [1], [0, 0, 1, 1], [], []>} : vector<2x16xf32>, vector<16x24xf32>, vector<2x24xf32> -> vector<2x24xf32>
    %c0_87 = arith.constant 0 : index
    %c0_88 = arith.constant 0 : index
    %226 = vector.load %arg14[%c0_87, %c0_88] : memref<1x24xf32, #tpu.memory_space<vmem>>, vector<1x24xf32>
    %227 = vector.broadcast %226 : vector<1x24xf32> to vector<2x24xf32>
    %228 = arith.addf %225, %227 : vector<2x24xf32>
    %cst_89 = arith.constant 0.000000e+00 : f32
    %229 = vector.broadcast %cst_89 : f32 to vector<2x24xf32>
    %230 = arith.cmpf ogt, %228, %229 : vector<2x24xf32>
    %cst_90 = arith.constant 0.00999999977 : f32
    %231 = vector.broadcast %cst_90 : f32 to vector<2x24xf32>
    %232 = arith.mulf %231, %228 : vector<2x24xf32>
    %233 = arith.select %230, %228, %232 : vector<2x24xi1>, vector<2x24xf32>
    %c0_91 = arith.constant 0 : index
    %c0_92 = arith.constant 0 : index
    %234 = vector.load %arg15[%c0_91, %c0_92] : memref<24x64xf32, #tpu.memory_space<vmem>>, vector<24x64xf32>
    %cst_93 = arith.constant dense<0.000000e+00> : vector<2x64xf32>
    %235 = tpu.matmul %233, %234, %cst_93 {dimension_numbers = #tpu.dot_dimension_numbers<[1], [0], [0], [1], [0, 0, 1, 1], [], []>} : vector<2x24xf32>, vector<24x64xf32>, vector<2x64xf32> -> vector<2x64xf32>
    %c0_94 = arith.constant 0 : index
    %c0_95 = arith.constant 0 : index
    %236 = vector.load %arg16[%c0_94, %c0_95] : memref<1x64xf32, #tpu.memory_space<vmem>>, vector<1x64xf32>
    %237 = vector.broadcast %236 : vector<1x64xf32> to vector<2x64xf32>
    %238 = arith.addf %235, %237 : vector<2x64xf32>
    %cst_96 = arith.constant 0.000000e+00 : f32
    %239 = vector.broadcast %cst_96 : f32 to vector<2x64xf32>
    %240 = arith.cmpf ogt, %238, %239 : vector<2x64xf32>
    %cst_97 = arith.constant 0.00999999977 : f32
    %241 = vector.broadcast %cst_97 : f32 to vector<2x64xf32>
    %242 = arith.mulf %241, %238 : vector<2x64xf32>
    %243 = arith.select %240, %238, %242 : vector<2x64xi1>, vector<2x64xf32>
    %c0_98 = arith.constant 0 : index
    %c0_99 = arith.constant 0 : index
    %244 = vector.load %arg17[%c0_98, %c0_99] : memref<64x128xf32, #tpu.memory_space<vmem>>, vector<64x128xf32>
    %cst_100 = arith.constant dense<0.000000e+00> : vector<2x128xf32>
    %245 = tpu.matmul %243, %244, %cst_100 {dimension_numbers = #tpu.dot_dimension_numbers<[1], [0], [0], [1], [0, 0, 1, 1], [], []>} : vector<2x64xf32>, vector<64x128xf32>, vector<2x128xf32> -> vector<2x128xf32>
    %c0_101 = arith.constant 0 : index
    %c0_102 = arith.constant 0 : index
    %246 = vector.load %arg18[%c0_101, %c0_102] : memref<1x128xf32, #tpu.memory_space<vmem>>, vector<1x128xf32>
    %247 = vector.broadcast %246 : vector<1x128xf32> to vector<2x128xf32>
    %248 = arith.addf %245, %247 : vector<2x128xf32>
    %cst_103 = arith.constant 0.000000e+00 : f32
    %249 = vector.broadcast %cst_103 : f32 to vector<2x128xf32>
    %250 = arith.cmpf ogt, %248, %249 : vector<2x128xf32>
    %cst_104 = arith.constant 0.00999999977 : f32
    %251 = vector.broadcast %cst_104 : f32 to vector<2x128xf32>
    %252 = arith.mulf %251, %248 : vector<2x128xf32>
    %253 = arith.select %250, %248, %252 : vector<2x128xi1>, vector<2x128xf32>
    %c0_105 = arith.constant 0 : index
    %c0_106 = arith.constant 0 : index
    %254 = vector.load %arg19[%c0_105, %c0_106] : memref<128x400xf32, #tpu.memory_space<vmem>>, vector<128x400xf32>
    %cst_107 = arith.constant dense<0.000000e+00> : vector<2x400xf32>
    %255 = tpu.matmul %253, %254, %cst_107 {dimension_numbers = #tpu.dot_dimension_numbers<[1], [0], [0], [1], [0, 0, 1, 1], [], []>} : vector<2x128xf32>, vector<128x400xf32>, vector<2x400xf32> -> vector<2x400xf32>
    %c0_108 = arith.constant 0 : index
    %c0_109 = arith.constant 0 : index
    %256 = vector.load %arg20[%c0_108, %c0_109] : memref<1x400xf32, #tpu.memory_space<vmem>>, vector<1x400xf32>
    %257 = vector.broadcast %256 : vector<1x400xf32> to vector<2x400xf32>
    %258 = arith.addf %255, %257 : vector<2x400xf32>
    %259 = vector.extract_strided_slice %258 {offsets = [0, 0], sizes = [2, 100], strides = [1, 1]} : vector<2x400xf32> to vector<2x100xf32>
    %260 = vector.extract_strided_slice %258 {offsets = [0, 100], sizes = [2, 100], strides = [1, 1]} : vector<2x400xf32> to vector<2x100xf32>
    %261 = vector.extract_strided_slice %258 {offsets = [0, 200], sizes = [2, 100], strides = [1, 1]} : vector<2x400xf32> to vector<2x100xf32>
    %262 = vector.extract_strided_slice %258 {offsets = [0, 300], sizes = [2, 100], strides = [1, 1]} : vector<2x400xf32> to vector<2x100xf32>
    %263 = arith.maximumf %259, %260 : vector<2x100xf32>
    %264 = arith.maximumf %261, %262 : vector<2x100xf32>
    %265 = arith.maximumf %263, %264 : vector<2x100xf32>
    %266 = arith.subf %259, %265 : vector<2x100xf32>
    %267 = math.exp %266 : vector<2x100xf32>
    %268 = arith.subf %260, %265 : vector<2x100xf32>
    %269 = math.exp %268 : vector<2x100xf32>
    %270 = arith.subf %261, %265 : vector<2x100xf32>
    %271 = math.exp %270 : vector<2x100xf32>
    %272 = arith.subf %262, %265 : vector<2x100xf32>
    %273 = math.exp %272 : vector<2x100xf32>
    %274 = arith.addf %267, %269 : vector<2x100xf32>
    %275 = arith.addf %274, %271 : vector<2x100xf32>
    %276 = arith.addf %275, %273 : vector<2x100xf32>
    %277 = tpu.reciprocal %276 : vector<2x100xf32> -> vector<2x100xf32>
    %278 = arith.mulf %267, %277 : vector<2x100xf32>
    %279 = arith.mulf %269, %277 : vector<2x100xf32>
    %280 = arith.mulf %271, %277 : vector<2x100xf32>
    %281 = arith.mulf %273, %277 : vector<2x100xf32>
    %282 = tpu.concatenate %278, %279, %280, %281 in 1 : vector<2x100xf32>, vector<2x100xf32>, vector<2x100xf32>, vector<2x100xf32> -> vector<2x400xf32>
    %cst_110 = arith.constant 0.000000e+00 : f32
    %283 = vector.broadcast %cst_110 : f32 to vector<2x112xf32>
    %284 = tpu.concatenate %282, %283 in 1 : vector<2x400xf32>, vector<2x112xf32> -> vector<2x512xf32>
    %c0_111 = arith.constant 0 : index
    %c0_112 = arith.constant 0 : index
    %285 = vector.load %arg21[%c0_111, %c0_112] : memref<2x512xf32, #tpu.memory_space<vmem>>, vector<2x512xf32>
    tpu.vector_store %arg21[%c0_111, %c0_112], %284 {strides = array<i32>} : memref<2x512xf32, #tpu.memory_space<vmem>>, vector<2x512xf32>,
    return
  }
  func.func @transform_0(%arg0: i32) -> (i32, i32) {
    %c0_i32 = arith.constant 0 : i32
    %c0_i32_0 = arith.constant 0 : i32
    return %arg0, %c0_i32 : i32, i32
  }
  func.func @transform_1(%arg0: i32) -> (i32, i32) {
    %c0_i32 = arith.constant 0 : i32
    %c0_i32_0 = arith.constant 0 : i32
    %c0_i32_1 = arith.constant 0 : i32
    return %c0_i32, %c0_i32_0 : i32, i32
  }
  func.func @transform_2(%arg0: i32) -> (i32, i32) {
    %c0_i32 = arith.constant 0 : i32
    %c0_i32_0 = arith.constant 0 : i32
    %c0_i32_1 = arith.constant 0 : i32
    return %c0_i32, %c0_i32_0 : i32, i32
  }
  func.func @transform_3(%arg0: i32) -> (i32, i32) {
    %c0_i32 = arith.constant 0 : i32
    %c0_i32_0 = arith.constant 0 : i32
    %c0_i32_1 = arith.constant 0 : i32
    return %c0_i32, %c0_i32_0 : i32, i32
  }
  func.func @transform_4(%arg0: i32) -> (i32, i32) {
    %c0_i32 = arith.constant 0 : i32
    %c0_i32_0 = arith.constant 0 : i32
    %c0_i32_1 = arith.constant 0 : i32
    return %c0_i32, %c0_i32_0 : i32, i32
  }
  func.func @transform_5(%arg0: i32) -> (i32, i32) {
    %c0_i32 = arith.constant 0 : i32
    %c0_i32_0 = arith.constant 0 : i32
    %c0_i32_1 = arith.constant 0 : i32
    return %c0_i32, %c0_i32_0 : i32, i32
  }
  func.func @transform_6(%arg0: i32) -> (i32, i32) {
    %c0_i32 = arith.constant 0 : i32
    %c0_i32_0 = arith.constant 0 : i32
    %c0_i32_1 = arith.constant 0 : i32
    return %c0_i32, %c0_i32_0 : i32, i32
  }
  func.func @transform_7(%arg0: i32) -> (i32, i32) {
    %c0_i32 = arith.constant 0 : i32
    %c0_i32_0 = arith.constant 0 : i32
    %c0_i32_1 = arith.constant 0 : i32
    return %c0_i32, %c0_i32_0 : i32, i32
  }
  func.func @transform_8(%arg0: i32) -> (i32, i32) {
    %c0_i32 = arith.constant 0 : i32
    %c0_i32_0 = arith.constant 0 : i32
    %c0_i32_1 = arith.constant 0 : i32
    return %c0_i32, %c0_i32_0 : i32, i32
  }
  func.func @transform_9(%arg0: i32) -> (i32, i32) {
    %c0_i32 = arith.constant 0 : i32
    %c0_i32_0 = arith.constant 0 : i32
    %c0_i32_1 = arith.constant 0 : i32
    return %c0_i32, %c0_i32_0 : i32, i32
  }
  func.func @transform_10(%arg0: i32) -> (i32, i32) {
    %c0_i32 = arith.constant 0 : i32
    %c0_i32_0 = arith.constant 0 : i32
    %c0_i32_1 = arith.constant 0 : i32
    return %c0_i32, %c0_i32_0 : i32, i32
  }
  func.func @transform_11(%arg0: i32) -> (i32, i32) {
    %c0_i32 = arith.constant 0 : i32
    %c0_i32_0 = arith.constant 0 : i32
    %c0_i32_1 = arith.constant 0 : i32
    return %c0_i32, %c0_i32_0 : i32, i32
  }
  func.func @transform_12(%arg0: i32) -> (i32, i32) {
    %c0_i32 = arith.constant 0 : i32
    %c0_i32_0 = arith.constant 0 : i32
    %c0_i32_1 = arith.constant 0 : i32
    return %c0_i32, %c0_i32_0 : i32, i32
  }
  func.func @transform_13(%arg0: i32) -> (i32, i32) {
    %c0_i32 = arith.constant 0 : i32
    %c0_i32_0 = arith.constant 0 : i32
    %c0_i32_1 = arith.constant 0 : i32
    return %c0_i32, %c0_i32_0 : i32, i32
  }
  func.func @transform_14(%arg0: i32) -> (i32, i32) {
    %c0_i32 = arith.constant 0 : i32
    %c0_i32_0 = arith.constant 0 : i32
    %c0_i32_1 = arith.constant 0 : i32
    return %c0_i32, %c0_i32_0 : i32, i32
  }
  func.func @transform_15(%arg0: i32) -> (i32, i32) {
    %c0_i32 = arith.constant 0 : i32
    %c0_i32_0 = arith.constant 0 : i32
    %c0_i32_1 = arith.constant 0 : i32
    return %c0_i32, %c0_i32_0 : i32, i32
  }
  func.func @transform_16(%arg0: i32) -> (i32, i32) {
    %c0_i32 = arith.constant 0 : i32
    %c0_i32_0 = arith.constant 0 : i32
    %c0_i32_1 = arith.constant 0 : i32
    return %c0_i32, %c0_i32_0 : i32, i32
  }
  func.func @transform_17(%arg0: i32) -> (i32, i32) {
    %c0_i32 = arith.constant 0 : i32
    %c0_i32_0 = arith.constant 0 : i32
    %c0_i32_1 = arith.constant 0 : i32
    return %c0_i32, %c0_i32_0 : i32, i32
  }
  func.func @transform_18(%arg0: i32) -> (i32, i32) {
    %c0_i32 = arith.constant 0 : i32
    %c0_i32_0 = arith.constant 0 : i32
    %c0_i32_1 = arith.constant 0 : i32
    return %c0_i32, %c0_i32_0 : i32, i32
  }
  func.func @transform_19(%arg0: i32) -> (i32, i32) {
    %c0_i32 = arith.constant 0 : i32
    %c0_i32_0 = arith.constant 0 : i32
    %c0_i32_1 = arith.constant 0 : i32
    return %c0_i32, %c0_i32_0 : i32, i32
  }
  func.func @transform_20(%arg0: i32) -> (i32, i32) {
    %c0_i32 = arith.constant 0 : i32
    %c0_i32_0 = arith.constant 0 : i32
    return %arg0, %c0_i32 : i32, i32
  }
}

</mosaic_0001>

<llo_original>
// kernel: tpu_custom_call.1
$region0: #{tpu_custom_call.1}
  #allocation0 [shape = 'u32[]', space=smem, size = 0x4, offset = 0x4, fixed_abs, tag = 'smem constant byte address 0x4 - core index']
  #allocation1 [shape = 'u32[72,128]{1,0:T(1,128)}', space=vmem, size = 0x9000, scoped, tag = 'internal scratch']
  %s0 = inlined_call_operand.vmem [shape: f32[208,76], index: 0, kind: input, shape index: {}]
  %s1 = inlined_call_operand.vmem [shape: f32[76,32], index: 1, kind: input, shape index: {}]
  %s2 = inlined_call_operand.vmem [shape: f32[1,32], index: 2, kind: input, shape index: {}]
  %s3 = inlined_call_operand.vmem [shape: f32[1,32], index: 3, kind: input, shape index: {}]
  %s4 = inlined_call_operand.vmem [shape: f32[352,16], index: 4, kind: input, shape index: {}]
  %s5 = inlined_call_operand.vmem [shape: f32[1,16], index: 5, kind: input, shape index: {}]
  %s6 = inlined_call_operand.vmem [shape: f32[1,16], index: 6, kind: input, shape index: {}]
  %s7 = inlined_call_operand.vmem [shape: f32[112,8], index: 7, kind: input, shape index: {}]
  %s8 = inlined_call_operand.vmem [shape: f32[1,8], index: 8, kind: input, shape index: {}]
  %s9 = inlined_call_operand.vmem [shape: f32[1,8], index: 9, kind: input, shape index: {}]
  %s10 = inlined_call_operand.vmem [shape: f32[24,16], index: 10, kind: input, shape index: {}]
  %s11 = inlined_call_operand.vmem [shape: f32[1,16], index: 11, kind: input, shape index: {}]
  %s12 = inlined_call_operand.vmem [shape: f32[16,24], index: 12, kind: input, shape index: {}]
  %s13 = inlined_call_operand.vmem [shape: f32[1,24], index: 13, kind: input, shape index: {}]
  %s14 = inlined_call_operand.vmem [shape: f32[24,64], index: 14, kind: input, shape index: {}]
  %s15 = inlined_call_operand.vmem [shape: f32[1,64], index: 15, kind: input, shape index: {}]
  %s16 = inlined_call_operand.vmem [shape: f32[64,128], index: 16, kind: input, shape index: {}]
  %s17 = inlined_call_operand.vmem [shape: f32[1,128], index: 17, kind: input, shape index: {}]
  %s18 = inlined_call_operand.vmem [shape: f32[128,400], index: 18, kind: input, shape index: {}]
  %s19 = inlined_call_operand.vmem [shape: f32[1,400], index: 19, kind: input, shape index: {}]
  %s20 = inlined_call_operand.hbm [shape: f32[2,512], index: 20, kind: output, shape index: {}]
  %s21 = sld [smem:[#allocation0]]
  $region90: #{tpu_custom_call.1} parent=0
    _
  %s23 = ssub.s32 1, %s21
  %s24 = scalar_select 0, %s23, %s21
  $region1: #{tpu_custom_call.1} parent=0
    #allocation2 [shape = 'u8[4096]{0}', space=vmem, size = 0x1000, scoped, tag = 'output window, operand 0, single buffered']
    #allocation3 [shape = 's32[1]{0}', space=sflag, size = 0x4, scoped, tag = 'scoped memory for tpu_custom_call.1']
    %25 = vsyncpa [#allocation3], 0
    // Predicated region
    $region2: #{tpu_custom_call.1} parent=1 // pred_check
      _
    $region3: #{tpu_custom_call.1} parent=1 // pred_check_branch
      %27 = sbr.rel (0) target = $region5
    $region4: #{tpu_custom_call.1} parent=1 // pred_region
      _
    $region5: #{tpu_custom_call.1} parent=1 // pred_fallthru
      _
    // Predicated region
    $region6: #{tpu_custom_call.1} parent=1 // pred_check
      _
    $region7: #{tpu_custom_call.1} parent=1 // pred_check_branch
      %29 = sbr.rel (0) target = $region9
    $region8: #{tpu_custom_call.1} parent=1 // pred_region
      _
    $region9: #{tpu_custom_call.1} parent=1 // pred_fallthru
      _
    // Predicated region
    $region10: #{tpu_custom_call.1} parent=1 // pred_check
      _
    $region11: #{tpu_custom_call.1} parent=1 // pred_check_branch
      %31 = sbr.rel (0) target = $region13
    $region12: #{tpu_custom_call.1} parent=1 // pred_region
      _
    $region13: #{tpu_custom_call.1} parent=1 // pred_fallthru
      _
    // Predicated region
    $region14: #{tpu_custom_call.1} parent=1 // pred_check
      _
    $region15: #{tpu_custom_call.1} parent=1 // pred_check_branch
      %33 = sbr.rel (0) target = $region17
    $region16: #{tpu_custom_call.1} parent=1 // pred_region
      _
    $region17: #{tpu_custom_call.1} parent=1 // pred_fallthru
      _
    // Predicated region
    $region18: #{tpu_custom_call.1} parent=1 // pred_check
      _
    $region19: #{tpu_custom_call.1} parent=1 // pred_check_branch
      %35 = sbr.rel (0) target = $region21
    $region20: #{tpu_custom_call.1} parent=1 // pred_region
      _
    $region21: #{tpu_custom_call.1} parent=1 // pred_fallthru
      _
    // Predicated region
    $region22: #{tpu_custom_call.1} parent=1 // pred_check
      _
    $region23: #{tpu_custom_call.1} parent=1 // pred_check_branch
      %37 = sbr.rel (0) target = $region25
    $region24: #{tpu_custom_call.1} parent=1 // pred_region
      _
    $region25: #{tpu_custom_call.1} parent=1 // pred_fallthru
      _
    // Predicated region
    $region26: #{tpu_custom_call.1} parent=1 // pred_check
      _
    $region27: #{tpu_custom_call.1} parent=1 // pred_check_branch
      %39 = sbr.rel (0) target = $region29
    $region28: #{tpu_custom_call.1} parent=1 // pred_region
      _
    $region29: #{tpu_custom_call.1} parent=1 // pred_fallthru
      _
    // Predicated region
    $region30: #{tpu_custom_call.1} parent=1 // pred_check
      _
    $region31: #{tpu_custom_call.1} parent=1 // pred_check_branch
      %41 = sbr.rel (0) target = $region33
    $region32: #{tpu_custom_call.1} parent=1 // pred_region
      _
    $region33: #{tpu_custom_call.1} parent=1 // pred_fallthru
      _
    // Predicated region
    $region34: #{tpu_custom_call.1} parent=1 // pred_check
      _
    $region35: #{tpu_custom_call.1} parent=1 // pred_check_branch
      %43 = sbr.rel (0) target = $region37
    $region36: #{tpu_custom_call.1} parent=1 // pred_region
      _
    $region37: #{tpu_custom_call.1} parent=1 // pred_fallthru
      _
    // Predicated region
    $region38: #{tpu_custom_call.1} parent=1 // pred_check
      _
    $region39: #{tpu_custom_call.1} parent=1 // pred_check_branch
      %45 = sbr.rel (0) target = $region41
    $region40: #{tpu_custom_call.1} parent=1 // pred_region
      _
    $region41: #{tpu_custom_call.1} parent=1 // pred_fallthru
      _
    // Predicated region
    $region42: #{tpu_custom_call.1} parent=1 // pred_check
      _
    $region43: #{tpu_custom_call.1} parent=1 // pred_check_branch
      %47 = sbr.rel (0) target = $region45
    $region44: #{tpu_custom_call.1} parent=1 // pred_region
      _
    $region45: #{tpu_custom_call.1} parent=1 // pred_fallthru
      _
    // Predicated region
    $region46: #{tpu_custom_call.1} parent=1 // pred_check
      _
    $region47: #{tpu_custom_call.1} parent=1 // pred_check_branch
      %49 = sbr.rel (0) target = $region49
    $region48: #{tpu_custom_call.1} parent=1 // pred_region
      _
    $region49: #{tpu_custom_call.1} parent=1 // pred_fallthru
      _
    // Predicated region
    $region50: #{tpu_custom_call.1} parent=1 // pred_check
      _
    $region51: #{tpu_custom_call.1} parent=1 // pred_check_branch
      %51 = sbr.rel (0) target = $region53
    $region52: #{tpu_custom_call.1} parent=1 // pred_region
      _
    $region53: #{tpu_custom_call.1} parent=1 // pred_fallthru
      _
    // Predicated region
    $region54: #{tpu_custom_call.1} parent=1 // pred_check
      _
    $region55: #{tpu_custom_call.1} parent=1 // pred_check_branch
      %53 = sbr.rel (0) target = $region57
    $region56: #{tpu_custom_call.1} parent=1 // pred_region
      _
    $region57: #{tpu_custom_call.1} parent=1 // pred_fallthru
      _
    // Predicated region
    $region58: #{tpu_custom_call.1} parent=1 // pred_check
      _
    $region59: #{tpu_custom_call.1} parent=1 // pred_check_branch
      %55 = sbr.rel (0) target = $region61
    $region60: #{tpu_custom_call.1} parent=1 // pred_region
      _
    $region61: #{tpu_custom_call.1} parent=1 // pred_fallthru
      _
    // Predicated region
    $region62: #{tpu_custom_call.1} parent=1 // pred_check
      _
    $region63: #{tpu_custom_call.1} parent=1 // pred_check_branch
      %57 = sbr.rel (0) target = $region65
    $region64: #{tpu_custom_call.1} parent=1 // pred_region
      _
    $region65: #{tpu_custom_call.1} parent=1 // pred_fallthru
      _
    // Predicated region
    $region66: #{tpu_custom_call.1} parent=1 // pred_check
      _
    $region67: #{tpu_custom_call.1} parent=1 // pred_check_branch
      %59 = sbr.rel (0) target = $region69
    $region68: #{tpu_custom_call.1} parent=1 // pred_region
      _
    $region69: #{tpu_custom_call.1} parent=1 // pred_fallthru
      _
    // Predicated region
    $region70: #{tpu_custom_call.1} parent=1 // pred_check
      _
    $region71: #{tpu_custom_call.1} parent=1 // pred_check_branch
      %61 = sbr.rel (0) target = $region73
    $region72: #{tpu_custom_call.1} parent=1 // pred_region
      _
    $region73: #{tpu_custom_call.1} parent=1 // pred_fallthru
      _
    // Predicated region
    $region74: #{tpu_custom_call.1} parent=1 // pred_check
      _
    $region75: #{tpu_custom_call.1} parent=1 // pred_check_branch
      %63 = sbr.rel (0) target = $region77
    $region76: #{tpu_custom_call.1} parent=1 // pred_region
      _
    $region77: #{tpu_custom_call.1} parent=1 // pred_fallthru
      _
    // Predicated region
    $region78: #{tpu_custom_call.1} parent=1 // pred_check
      _
    $region79: #{tpu_custom_call.1} parent=1 // pred_check_branch
      %65 = sbr.rel (0) target = $region81
    $region80: #{tpu_custom_call.1} parent=1 // pred_region
      _
    $region81: #{tpu_custom_call.1} parent=1 // pred_fallthru
      _
    %v66 = vld [vmem:[%s0] sm:$0xff]
    %v67 = vld [vmem:[%s0 + $0x8] sm:$0xff]
    %v68 = vld [vmem:[%s0 + $0x10] sm:$0xff]
    %v69 = vld [vmem:[%s0 + $0x18] sm:$0xff]
    %v70 = vld [vmem:[%s0 + $0x20] sm:$0xff]
    %v71 = vld [vmem:[%s0 + $0x28] sm:$0xff]
    %v72 = vld [vmem:[%s0 + $0x30] sm:$0xff]
    %v73 = vld [vmem:[%s0 + $0x38] sm:$0xff]
    %v74 = vld [vmem:[%s0 + $0x40] sm:$0xff]
    %v75 = vld [vmem:[%s0 + $0x48] sm:$0xff]
    %v76 = vld [vmem:[%s0 + $0x50] sm:$0xff]
    %v77 = vld [vmem:[%s0 + $0x58] sm:$0xff]
    %v78 = vld [vmem:[%s0 + $0x60] sm:$0xff]
    %v79 = vld [vmem:[%s0 + $0x68] sm:$0xff]
    %v80 = vld [vmem:[%s0 + $0x70] sm:$0xff]
    %v81 = vld [vmem:[%s0 + $0x78] sm:$0xff]
    %v82 = vld [vmem:[%s0 + $0x80] sm:$0xff]
    %v83 = vld [vmem:[%s0 + $0x88] sm:$0xff]
    %v84 = vld [vmem:[%s0 + $0x90] sm:$0xff]
    %v85 = vld [vmem:[%s0 + $0x98] sm:$0xff]
    %v86 = vld [vmem:[%s0 + $0xa0] sm:$0xff]
    %v87 = vld [vmem:[%s0 + $0xa8] sm:$0xff]
    %v88 = vld [vmem:[%s0 + $0xb0] sm:$0xff]
    %v89 = vld [vmem:[%s0 + $0xb8] sm:$0xff]
    %v90 = vld [vmem:[%s0 + $0xc0] sm:$0xff]
    %v91 = vld [vmem:[%s0 + $0xc8] sm:$0xff]
    %v92 = vld [vmem:[%s1] sm:$0xff]
    %v93 = vld [vmem:[%s1 + $0x8] sm:$0xff]
    %v94 = vld [vmem:[%s1 + $0x10] sm:$0xff]
    %v95 = vld [vmem:[%s1 + $0x18] sm:$0xff]
    %v96 = vld [vmem:[%s1 + $0x20] sm:$0xff]
    %v97 = vld [vmem:[%s1 + $0x28] sm:$0xff]
    %v98 = vld [vmem:[%s1 + $0x30] sm:$0xff]
    %v99 = vld [vmem:[%s1 + $0x38] sm:$0xff]
    %v100 = vld [vmem:[%s1 + $0x40] sm:$0xff]
    %v101 = vld [vmem:[%s1 + $0x48] sm:$0xf]
    %vm102 = vcmask 621568
    %v104 = vsel %vm102, %v66, 0
    %v107 = vsel %vm102, %v67, 0
    %v110 = vsel %vm102, %v68, 0
    %v113 = vsel %vm102, %v69, 0
    %v116 = vsel %vm102, %v70, 0
    %v119 = vsel %vm102, %v71, 0
    %v122 = vsel %vm102, %v72, 0
    %v125 = vsel %vm102, %v73, 0
    %v128 = vsel %vm102, %v74, 0
    %v131 = vsel %vm102, %v75, 0
    %v134 = vsel %vm102, %v76, 0
    %v137 = vsel %vm102, %v77, 0
    %v140 = vsel %vm102, %v78, 0
    %v143 = vsel %vm102, %v79, 0
    %v146 = vsel %vm102, %v80, 0
    %v149 = vsel %vm102, %v81, 0
    %v152 = vsel %vm102, %v82, 0
    %v155 = vsel %vm102, %v83, 0
    %v158 = vsel %vm102, %v84, 0
    %v161 = vsel %vm102, %v85, 0
    %v164 = vsel %vm102, %v86, 0
    %v167 = vsel %vm102, %v87, 0
    %v170 = vsel %vm102, %v88, 0
    %v173 = vsel %vm102, %v89, 0
    %v176 = vsel %vm102, %v90, 0
    %v179 = vsel %vm102, %v91, 0
    %vm181 = vcmask 1043456
    %v183 = vsel %vm181, %v101, 0
    %185 = vmatpush.msra.mxu0 0.0
    %186 = vmatpush.msra.mxu0 0.0
    %187 = vmatpush.msra.mxu0 0.0
    %188 = vmatpush.msra.mxu0 0.0
    %189 = vmatpush.msra.mxu0 0.0
    %190 = vmatpush.msra.mxu0 0.0
    %191 = vmatpush.msra.mxu0 %v183
    %192 = vmatpush.msra.mxu0 %v100
    %193 = vmatpush.msra.mxu0 %v99
    %194 = vmatpush.msra.mxu0 %v98
    %195 = vmatpush.msra.mxu0 %v97
    %196 = vmatpush.msra.mxu0 %v96
    %197 = vmatpush.msra.mxu0 %v95
    %198 = vmatpush.msra.mxu0 %v94
    %199 = vmatpush.msra.mxu0 %v93
    %200 = vmatpush.msra.mxu0 %v92
    %201 = vmatmul.f32.gmra.mxu0 %v104
    %v202 = vpop.f32.mrf.mxu0
    %v203 = vadd.f32 0.0, %v202
    %204 = vmatmul.f32.gmra.mxu0 %v107
    %v205 = vpop.f32.mrf.mxu0
    %v206 = vadd.f32 0.0, %v205
    %207 = vmatmul.f32.gmra.mxu0 %v110
    %v208 = vpop.f32.mrf.mxu0
    %v209 = vadd.f32 0.0, %v208
    %210 = vmatmul.f32.gmra.mxu0 %v113
    %v211 = vpop.f32.mrf.mxu0
    %v212 = vadd.f32 0.0, %v211
    %213 = vmatmul.f32.gmra.mxu0 %v116
    %v214 = vpop.f32.mrf.mxu0
    %v215 = vadd.f32 0.0, %v214
    %216 = vmatmul.f32.gmra.mxu0 %v119
    %v217 = vpop.f32.mrf.mxu0
    %v218 = vadd.f32 0.0, %v217
    %219 = vmatmul.f32.gmra.mxu0 %v122
    %v220 = vpop.f32.mrf.mxu0
    %v221 = vadd.f32 0.0, %v220
    %222 = vmatmul.f32.gmra.mxu0 %v125
    %v223 = vpop.f32.mrf.mxu0
    %v224 = vadd.f32 0.0, %v223
    %225 = vmatmul.f32.gmra.mxu0 %v128
    %v226 = vpop.f32.mrf.mxu0
    %v227 = vadd.f32 0.0, %v226
    %228 = vmatmul.f32.gmra.mxu0 %v131
    %v229 = vpop.f32.mrf.mxu0
    %v230 = vadd.f32 0.0, %v229
    %231 = vmatmul.f32.gmra.mxu0 %v134
    %v232 = vpop.f32.mrf.mxu0
    %v233 = vadd.f32 0.0, %v232
    %234 = vmatmul.f32.gmra.mxu0 %v137
    %v235 = vpop.f32.mrf.mxu0
    %v236 = vadd.f32 0.0, %v235
    %237 = vmatmul.f32.gmra.mxu0 %v140
    %v238 = vpop.f32.mrf.mxu0
    %v239 = vadd.f32 0.0, %v238
    %240 = vmatmul.f32.gmra.mxu0 %v143
    %v241 = vpop.f32.mrf.mxu0
    %v242 = vadd.f32 0.0, %v241
    %243 = vmatmul.f32.gmra.mxu0 %v146
    %v244 = vpop.f32.mrf.mxu0
    %v245 = vadd.f32 0.0, %v244
    %246 = vmatmul.f32.gmra.mxu0 %v149
    %v247 = vpop.f32.mrf.mxu0
    %v248 = vadd.f32 0.0, %v247
    %249 = vmatmul.f32.gmra.mxu0 %v152
    %v250 = vpop.f32.mrf.mxu0
    %v251 = vadd.f32 0.0, %v250
    %252 = vmatmul.f32.gmra.mxu0 %v155
    %v253 = vpop.f32.mrf.mxu0
    %v254 = vadd.f32 0.0, %v253
    %255 = vmatmul.f32.gmra.mxu0 %v158
    %v256 = vpop.f32.mrf.mxu0
    %v257 = vadd.f32 0.0, %v256
    %258 = vmatmul.f32.gmra.mxu0 %v161
    %v259 = vpop.f32.mrf.mxu0
    %v260 = vadd.f32 0.0, %v259
    %261 = vmatmul.f32.gmra.mxu0 %v164
    %v262 = vpop.f32.mrf.mxu0
    %v263 = vadd.f32 0.0, %v262
    %264 = vmatmul.f32.gmra.mxu0 %v167
    %v265 = vpop.f32.mrf.mxu0
    %v266 = vadd.f32 0.0, %v265
    %267 = vmatmul.f32.gmra.mxu0 %v170
    %v268 = vpop.f32.mrf.mxu0
    %v269 = vadd.f32 0.0, %v268
    %270 = vmatmul.f32.gmra.mxu0 %v173
    %v271 = vpop.f32.mrf.mxu0
    %v272 = vadd.f32 0.0, %v271
    %273 = vmatmul.f32.gmra.mxu0 %v176
    %v274 = vpop.f32.mrf.mxu0
    %v275 = vadd.f32 0.0, %v274
    %276 = vmatmul.f32.gmra.mxu0 %v179
    %v277 = vpop.f32.mrf.mxu0
    %v278 = vadd.f32 0.0, %v277
    %279 = vdwg.mxu0
    %v280 = vld [vmem:[%s2] sm:$0x1]
    %v282 = vperm.slane %v280, 0
    %v284 = vmul.f32 %v203, %v282
    %v285 = vmul.f32 %v206, %v282
    %v286 = vmul.f32 %v209, %v282
    %v287 = vmul.f32 %v212, %v282
    %v288 = vmul.f32 %v215, %v282
    %v289 = vmul.f32 %v218, %v282
    %v290 = vmul.f32 %v221, %v282
    %v291 = vmul.f32 %v224, %v282
    %v292 = vmul.f32 %v227, %v282
    %v293 = vmul.f32 %v230, %v282
    %v294 = vmul.f32 %v233, %v282
    %v295 = vmul.f32 %v236, %v282
    %v296 = vmul.f32 %v239, %v282
    %v297 = vmul.f32 %v242, %v282
    %v298 = vmul.f32 %v245, %v282
    %v299 = vmul.f32 %v248, %v282
    %v300 = vmul.f32 %v251, %v282
    %v301 = vmul.f32 %v254, %v282
    %v302 = vmul.f32 %v257, %v282
    %v303 = vmul.f32 %v260, %v282
    %v304 = vmul.f32 %v263, %v282
    %v305 = vmul.f32 %v266, %v282
    %v306 = vmul.f32 %v269, %v282
    %v307 = vmul.f32 %v272, %v282
    %v308 = vmul.f32 %v275, %v282
    %v309 = vmul.f32 %v278, %v282
    %v310 = vld [vmem:[%s3] sm:$0x1]
    %v312 = vperm.slane %v310, 0
    %v314 = vadd.f32 %v284, %v312
    %v315 = vadd.f32 %v285, %v312
    %v316 = vadd.f32 %v286, %v312
    %v317 = vadd.f32 %v287, %v312
    %v318 = vadd.f32 %v288, %v312
    %v319 = vadd.f32 %v289, %v312
    %v320 = vadd.f32 %v290, %v312
    %v321 = vadd.f32 %v291, %v312
    %v322 = vadd.f32 %v292, %v312
    %v323 = vadd.f32 %v293, %v312
    %v324 = vadd.f32 %v294, %v312
    %v325 = vadd.f32 %v295, %v312
    %v326 = vadd.f32 %v296, %v312
    %v327 = vadd.f32 %v297, %v312
    %v328 = vadd.f32 %v298, %v312
    %v329 = vadd.f32 %v299, %v312
    %v330 = vadd.f32 %v300, %v312
    %v331 = vadd.f32 %v301, %v312
    %v332 = vadd.f32 %v302, %v312
    %v333 = vadd.f32 %v303, %v312
    %v334 = vadd.f32 %v304, %v312
    %v335 = vadd.f32 %v305, %v312
    %v336 = vadd.f32 %v306, %v312
    %v337 = vadd.f32 %v307, %v312
    %v338 = vadd.f32 %v308, %v312
    %v339 = vadd.f32 %v309, %v312
    %vm340 = vcmp.gt.f32.partialorder %v314, 0.0
    %vm341 = vcmp.gt.f32.partialorder %v315, 0.0
    %vm342 = vcmp.gt.f32.partialorder %v316, 0.0
    %vm343 = vcmp.gt.f32.partialorder %v317, 0.0
    %vm344 = vcmp.gt.f32.partialorder %v318, 0.0
    %vm345 = vcmp.gt.f32.partialorder %v319, 0.0
    %vm346 = vcmp.gt.f32.partialorder %v320, 0.0
    %vm347 = vcmp.gt.f32.partialorder %v321, 0.0
    %vm348 = vcmp.gt.f32.partialorder %v322, 0.0
    %vm349 = vcmp.gt.f32.partialorder %v323, 0.0
    %vm350 = vcmp.gt.f32.partialorder %v324, 0.0
    %vm351 = vcmp.gt.f32.partialorder %v325, 0.0
    %vm352 = vcmp.gt.f32.partialorder %v326, 0.0
    %vm353 = vcmp.gt.f32.partialorder %v327, 0.0
    %vm354 = vcmp.gt.f32.partialorder %v328, 0.0
    %vm355 = vcmp.gt.f32.partialorder %v329, 0.0
    %vm356 = vcmp.gt.f32.partialorder %v330, 0.0
    %vm357 = vcmp.gt.f32.partialorder %v331, 0.0
    %vm358 = vcmp.gt.f32.partialorder %v332, 0.0
    %vm359 = vcmp.gt.f32.partialorder %v333, 0.0
    %vm360 = vcmp.gt.f32.partialorder %v334, 0.0
    %vm361 = vcmp.gt.f32.partialorder %v335, 0.0
    %vm362 = vcmp.gt.f32.partialorder %v336, 0.0
    %vm363 = vcmp.gt.f32.partialorder %v337, 0.0
    %vm364 = vcmp.gt.f32.partialorder %v338, 0.0
    %vm365 = vcmp.gt.f32.partialorder %v339, 0.0
    %v366 = vmul.f32 %v314, 0.01
    %v367 = vmul.f32 %v315, 0.01
    %v368 = vmul.f32 %v316, 0.01
    %v369 = vmul.f32 %v317, 0.01
    %v370 = vmul.f32 %v318, 0.01
    %v371 = vmul.f32 %v319, 0.01
    %v372 = vmul.f32 %v320, 0.01
    %v373 = vmul.f32 %v321, 0.01
    %v374 = vmul.f32 %v322, 0.01
    %v375 = vmul.f32 %v323, 0.01
    %v376 = vmul.f32 %v324, 0.01
    %v377 = vmul.f32 %v325, 0.01
    %v378 = vmul.f32 %v326, 0.01
    %v379 = vmul.f32 %v327, 0.01
    %v380 = vmul.f32 %v328, 0.01
    %v381 = vmul.f32 %v329, 0.01
    %v382 = vmul.f32 %v330, 0.01
    %v383 = vmul.f32 %v331, 0.01
    %v384 = vmul.f32 %v332, 0.01
    %v385 = vmul.f32 %v333, 0.01
    %v386 = vmul.f32 %v334, 0.01
    %v387 = vmul.f32 %v335, 0.01
    %v388 = vmul.f32 %v336, 0.01
    %v389 = vmul.f32 %v337, 0.01
    %v390 = vmul.f32 %v338, 0.01
    %v391 = vmul.f32 %v339, 0.01
    %v392 = vsel %vm340, %v314, %v366
    %v393 = vsel %vm341, %v315, %v367
    %v394 = vsel %vm342, %v316, %v368
    %v395 = vsel %vm343, %v317, %v369
    %v396 = vsel %vm344, %v318, %v370
    %v397 = vsel %vm345, %v319, %v371
    %v398 = vsel %vm346, %v320, %v372
    %v399 = vsel %vm347, %v321, %v373
    %v400 = vsel %vm348, %v322, %v374
    %v401 = vsel %vm349, %v323, %v375
    %v402 = vsel %vm350, %v324, %v376
    %v403 = vsel %vm351, %v325, %v377
    %v404 = vsel %vm352, %v326, %v378
    %v405 = vsel %vm353, %v327, %v379
    %v406 = vsel %vm354, %v328, %v380
    %v407 = vsel %vm355, %v329, %v381
    %v408 = vsel %vm356, %v330, %v382
    %v409 = vsel %vm357, %v331, %v383
    %v410 = vsel %vm358, %v332, %v384
    %v411 = vsel %vm359, %v333, %v385
    %v412 = vsel %vm360, %v334, %v386
    %v413 = vsel %vm361, %v335, %v387
    %v414 = vsel %vm362, %v336, %v388
    %v415 = vsel %vm363, %v337, %v389
    %v416 = vsel %vm364, %v338, %v390
    %v417 = vsel %vm365, %v339, %v391
    %vm418 = vcmask 256000
    %v419 = vsel %vm418, %v392, -inf
    %v420 = vrot.slane %v419, 4
    %v421 = vmax.f32 %v419, %v420
    %v422 = vrot.slane %v421, 2
    %v423 = vmax.f32 %v421, %v422
    %v424 = vrot.slane %v423, 1
    %v425 = vmax.f32 %v423, %v424
    %v426 = vsel %vm418, %v405, -inf
    %v427 = vrot.slane %v426, 4
    %v428 = vmax.f32 %v426, %v427
    %v429 = vrot.slane %v428, 2
    %v430 = vmax.f32 %v428, %v429
    %v431 = vrot.slane %v430, 1
    %v432 = vmax.f32 %v430, %v431
    %vm433 = vcmask 259075
    %v434 = vsel %vm433, %v392, -inf
    %v435 = vrot.slane %v434, 4
    %v436 = vmax.f32 %v434, %v435
    %v437 = vrot.slane %v436, 2
    %v438 = vmax.f32 %v436, %v437
    %v439 = vrot.slane %v438, 1
    %v440 = vmax.f32 %v438, %v439
    %v441 = vsel %vm433, %v405, -inf
    %v442 = vrot.slane %v441, 4
    %v443 = vmax.f32 %v441, %v442
    %v444 = vrot.slane %v443, 2
    %v445 = vmax.f32 %v443, %v444
    %v446 = vrot.slane %v445, 1
    %v447 = vmax.f32 %v445, %v446
    %vm448 = vcmask 261126
    %v449 = vsel %vm448, %v392, -inf
    %vm450 = vcmask 253952
    %v451 = vsel %vm450, %v393, -inf
    %v452 = vmax.f32 %v449, %v451
    %v453 = vrot.slane %v452, 4
    %v454 = vmax.f32 %v452, %v453
    %v455 = vrot.slane %v454, 2
    %v456 = vmax.f32 %v454, %v455
    %v457 = vrot.slane %v456, 1
    %v458 = vmax.f32 %v456, %v457
    %v459 = vsel %vm448, %v405, -inf
    %v460 = vsel %vm450, %v406, -inf
    %v461 = vmax.f32 %v459, %v460
    %v462 = vrot.slane %v461, 4
    %v463 = vmax.f32 %v461, %v462
    %v464 = vrot.slane %v463, 2
    %v465 = vmax.f32 %v463, %v464
    %v466 = vrot.slane %v465, 1
    %v467 = vmax.f32 %v465, %v466
    %vm468 = vcmask 257025
    %v469 = vsel %vm468, %v393, -inf
    %v470 = vrot.slane %v469, 4
    %v471 = vmax.f32 %v469, %v470
    %v472 = vrot.slane %v471, 2
    %v473 = vmax.f32 %v471, %v472
    %v474 = vrot.slane %v473, 1
    %v475 = vmax.f32 %v473, %v474
    %v476 = vsel %vm468, %v406, -inf
    %v477 = vrot.slane %v476, 4
    %v478 = vmax.f32 %v476, %v477
    %v479 = vrot.slane %v478, 2
    %v480 = vmax.f32 %v478, %v479
    %v481 = vrot.slane %v480, 1
    %v482 = vmax.f32 %v480, %v481
    %vm483 = vcmask 260100
    %v484 = vsel %vm483, %v393, -inf
    %v485 = vrot.slane %v484, 4
    %v486 = vmax.f32 %v484, %v485
    %v487 = vrot.slane %v486, 2
    %v488 = vmax.f32 %v486, %v487
    %v489 = vrot.slane %v488, 1
    %v490 = vmax.f32 %v488, %v489
    %v491 = vsel %vm483, %v406, -inf
    %v492 = vrot.slane %v491, 4
    %v493 = vmax.f32 %v491, %v492
    %v494 = vrot.slane %v493, 2
    %v495 = vmax.f32 %v493, %v494
    %v496 = vrot.slane %v495, 1
    %v497 = vmax.f32 %v495, %v496
    %vm498 = vcmask 261127
    %v499 = vsel %vm498, %v393, -inf
    %vm500 = vcmask 254976
    %v501 = vsel %vm500, %v394, -inf
    %v502 = vmax.f32 %v499, %v501
    %v503 = vrot.slane %v502, 4
    %v504 = vmax.f32 %v502, %v503
    %v505 = vrot.slane %v504, 2
    %v506 = vmax.f32 %v504, %v505
    %v507 = vrot.slane %v506, 1
    %v508 = vmax.f32 %v506, %v507
    %v509 = vsel %vm498, %v406, -inf
    %v510 = vsel %vm500, %v407, -inf
    %v511 = vmax.f32 %v509, %v510
    %v512 = vrot.slane %v511, 4
    %v513 = vmax.f32 %v511, %v512
    %v514 = vrot.slane %v513, 2
    %v515 = vmax.f32 %v513, %v514
    %v516 = vrot.slane %v515, 1
    %v517 = vmax.f32 %v515, %v516
    %vm518 = vcmask 258050
    %v519 = vsel %vm518, %v394, -inf
    %v520 = vrot.slane %v519, 4
    %v521 = vmax.f32 %v519, %v520
    %v522 = vrot.slane %v521, 2
    %v523 = vmax.f32 %v521, %v522
    %v524 = vrot.slane %v523, 1
    %v525 = vmax.f32 %v523, %v524
    %v526 = vsel %vm518, %v407, -inf
    %v527 = vrot.slane %v526, 4
    %v528 = vmax.f32 %v526, %v527
    %v529 = vrot.slane %v528, 2
    %v530 = vmax.f32 %v528, %v529
    %v531 = vrot.slane %v530, 1
    %v532 = vmax.f32 %v530, %v531
    %vm533 = vcmask 261125
    %v534 = vsel %vm533, %v394, -inf
    %v535 = vrot.slane %v534, 4
    %v536 = vmax.f32 %v534, %v535
    %v537 = vrot.slane %v536, 2
    %v538 = vmax.f32 %v536, %v537
    %v539 = vrot.slane %v538, 1
    %v540 = vmax.f32 %v538, %v539
    %v541 = vsel %vm533, %v407, -inf
    %v542 = vrot.slane %v541, 4
    %v543 = vmax.f32 %v541, %v542
    %v544 = vrot.slane %v543, 2
    %v545 = vmax.f32 %v543, %v544
    %v546 = vrot.slane %v545, 1
    %v547 = vmax.f32 %v545, %v546
    %v548 = vsel %vm418, %v395, -inf
    %v549 = vrot.slane %v548, 4
    %v550 = vmax.f32 %v548, %v549
    %v551 = vrot.slane %v550, 2
    %v552 = vmax.f32 %v550, %v551
    %v553 = vrot.slane %v552, 1
    %v554 = vmax.f32 %v552, %v553
    %v555 = vsel %vm418, %v408, -inf
    %v556 = vrot.slane %v555, 4
    %v557 = vmax.f32 %v555, %v556
    %v558 = vrot.slane %v557, 2
    %v559 = vmax.f32 %v557, %v558
    %v560 = vrot.slane %v559, 1
    %v561 = vmax.f32 %v559, %v560
    %v562 = vsel %vm433, %v395, -inf
    %v563 = vrot.slane %v562, 4
    %v564 = vmax.f32 %v562, %v563
    %v565 = vrot.slane %v564, 2
    %v566 = vmax.f32 %v564, %v565
    %v567 = vrot.slane %v566, 1
    %v568 = vmax.f32 %v566, %v567
    %v569 = vsel %vm433, %v408, -inf
    %v570 = vrot.slane %v569, 4
    %v571 = vmax.f32 %v569, %v570
    %v572 = vrot.slane %v571, 2
    %v573 = vmax.f32 %v571, %v572
    %v574 = vrot.slane %v573, 1
    %v575 = vmax.f32 %v573, %v574
    %v576 = vsel %vm448, %v395, -inf
    %v577 = vsel %vm450, %v396, -inf
    %v578 = vmax.f32 %v576, %v577
    %v579 = vrot.slane %v578, 4
    %v580 = vmax.f32 %v578, %v579
    %v581 = vrot.slane %v580, 2
    %v582 = vmax.f32 %v580, %v581
    %v583 = vrot.slane %v582, 1
    %v584 = vmax.f32 %v582, %v583
    %v585 = vsel %vm448, %v408, -inf
    %v586 = vsel %vm450, %v409, -inf
    %v587 = vmax.f32 %v585, %v586
    %v588 = vrot.slane %v587, 4
    %v589 = vmax.f32 %v587, %v588
    %v590 = vrot.slane %v589, 2
    %v591 = vmax.f32 %v589, %v590
    %v592 = vrot.slane %v591, 1
    %v593 = vmax.f32 %v591, %v592
    %v594 = vsel %vm468, %v396, -inf
    %v595 = vrot.slane %v594, 4
    %v596 = vmax.f32 %v594, %v595
    %v597 = vrot.slane %v596, 2
    %v598 = vmax.f32 %v596, %v597
    %v599 = vrot.slane %v598, 1
    %v600 = vmax.f32 %v598, %v599
    %v601 = vsel %vm468, %v409, -inf
    %v602 = vrot.slane %v601, 4
    %v603 = vmax.f32 %v601, %v602
    %v604 = vrot.slane %v603, 2
    %v605 = vmax.f32 %v603, %v604
    %v606 = vrot.slane %v605, 1
    %v607 = vmax.f32 %v605, %v606
    %v608 = vsel %vm483, %v396, -inf
    %v609 = vrot.slane %v608, 4
    %v610 = vmax.f32 %v608, %v609
    %v611 = vrot.slane %v610, 2
    %v612 = vmax.f32 %v610, %v611
    %v613 = vrot.slane %v612, 1
    %v614 = vmax.f32 %v612, %v613
    %v615 = vsel %vm483, %v409, -inf
    %v616 = vrot.slane %v615, 4
    %v617 = vmax.f32 %v615, %v616
    %v618 = vrot.slane %v617, 2
    %v619 = vmax.f32 %v617, %v618
    %v620 = vrot.slane %v619, 1
    %v621 = vmax.f32 %v619, %v620
    %v622 = vsel %vm498, %v396, -inf
    %v623 = vsel %vm500, %v397, -inf
    %v624 = vmax.f32 %v622, %v623
    %v625 = vrot.slane %v624, 4
    %v626 = vmax.f32 %v624, %v625
    %v627 = vrot.slane %v626, 2
    %v628 = vmax.f32 %v626, %v627
    %v629 = vrot.slane %v628, 1
    %v630 = vmax.f32 %v628, %v629
    %v631 = vsel %vm498, %v409, -inf
    %v632 = vsel %vm500, %v410, -inf
    %v633 = vmax.f32 %v631, %v632
    %v634 = vrot.slane %v633, 4
    %v635 = vmax.f32 %v633, %v634
    %v636 = vrot.slane %v635, 2
    %v637 = vmax.f32 %v635, %v636
    %v638 = vrot.slane %v637, 1
    %v639 = vmax.f32 %v637, %v638
    %v640 = vsel %vm518, %v397, -inf
    %v641 = vrot.slane %v640, 4
    %v642 = vmax.f32 %v640, %v641
    %v643 = vrot.slane %v642, 2
    %v644 = vmax.f32 %v642, %v643
    %v645 = vrot.slane %v644, 1
    %v646 = vmax.f32 %v644, %v645
    %v647 = vsel %vm518, %v410, -inf
    %v648 = vrot.slane %v647, 4
    %v649 = vmax.f32 %v647, %v648
    %v650 = vrot.slane %v649, 2
    %v651 = vmax.f32 %v649, %v650
    %v652 = vrot.slane %v651, 1
    %v653 = vmax.f32 %v651, %v652
    %v654 = vsel %vm533, %v397, -inf
    %v655 = vrot.slane %v654, 4
    %v656 = vmax.f32 %v654, %v655
    %v657 = vrot.slane %v656, 2
    %v658 = vmax.f32 %v656, %v657
    %v659 = vrot.slane %v658, 1
    %v660 = vmax.f32 %v658, %v659
    %v661 = vsel %vm533, %v410, -inf
    %v662 = vrot.slane %v661, 4
    %v663 = vmax.f32 %v661, %v662
    %v664 = vrot.slane %v663, 2
    %v665 = vmax.f32 %v663, %v664
    %v666 = vrot.slane %v665, 1
    %v667 = vmax.f32 %v665, %v666
    %v668 = vsel %vm418, %v398, -inf
    %v669 = vrot.slane %v668, 4
    %v670 = vmax.f32 %v668, %v669
    %v671 = vrot.slane %v670, 2
    %v672 = vmax.f32 %v670, %v671
    %v673 = vrot.slane %v672, 1
    %v674 = vmax.f32 %v672, %v673
    %v675 = vsel %vm418, %v411, -inf
    %v676 = vrot.slane %v675, 4
    %v677 = vmax.f32 %v675, %v676
    %v678 = vrot.slane %v677, 2
    %v679 = vmax.f32 %v677, %v678
    %v680 = vrot.slane %v679, 1
    %v681 = vmax.f32 %v679, %v680
    %v682 = vsel %vm433, %v398, -inf
    %v683 = vrot.slane %v682, 4
    %v684 = vmax.f32 %v682, %v683
    %v685 = vrot.slane %v684, 2
    %v686 = vmax.f32 %v684, %v685
    %v687 = vrot.slane %v686, 1
    %v688 = vmax.f32 %v686, %v687
    %v689 = vsel %vm433, %v411, -inf
    %v690 = vrot.slane %v689, 4
    %v691 = vmax.f32 %v689, %v690
    %v692 = vrot.slane %v691, 2
    %v693 = vmax.f32 %v691, %v692
    %v694 = vrot.slane %v693, 1
    %v695 = vmax.f32 %v693, %v694
    %v696 = vsel %vm448, %v398, -inf
    %v697 = vsel %vm450, %v399, -inf
    %v698 = vmax.f32 %v696, %v697
    %v699 = vrot.slane %v698, 4
    %v700 = vmax.f32 %v698, %v699
    %v701 = vrot.slane %v700, 2
    %v702 = vmax.f32 %v700, %v701
    %v703 = vrot.slane %v702, 1
    %v704 = vmax.f32 %v702, %v703
    %v705 = vsel %vm448, %v411, -inf
    %v706 = vsel %vm450, %v412, -inf
    %v707 = vmax.f32 %v705, %v706
    %v708 = vrot.slane %v707, 4
    %v709 = vmax.f32 %v707, %v708
    %v710 = vrot.slane %v709, 2
    %v711 = vmax.f32 %v709, %v710
    %v712 = vrot.slane %v711, 1
    %v713 = vmax.f32 %v711, %v712
    %v714 = vsel %vm468, %v399, -inf
    %v715 = vrot.slane %v714, 4
    %v716 = vmax.f32 %v714, %v715
    %v717 = vrot.slane %v716, 2
    %v718 = vmax.f32 %v716, %v717
    %v719 = vrot.slane %v718, 1
    %v720 = vmax.f32 %v718, %v719
    %v721 = vsel %vm468, %v412, -inf
    %v722 = vrot.slane %v721, 4
    %v723 = vmax.f32 %v721, %v722
    %v724 = vrot.slane %v723, 2
    %v725 = vmax.f32 %v723, %v724
    %v726 = vrot.slane %v725, 1
    %v727 = vmax.f32 %v725, %v726
    %v728 = vsel %vm483, %v399, -inf
    %v729 = vrot.slane %v728, 4
    %v730 = vmax.f32 %v728, %v729
    %v731 = vrot.slane %v730, 2
    %v732 = vmax.f32 %v730, %v731
    %v733 = vrot.slane %v732, 1
    %v734 = vmax.f32 %v732, %v733
    %v735 = vsel %vm483, %v412, -inf
    %v736 = vrot.slane %v735, 4
    %v737 = vmax.f32 %v735, %v736
    %v738 = vrot.slane %v737, 2
    %v739 = vmax.f32 %v737, %v738
    %v740 = vrot.slane %v739, 1
    %v741 = vmax.f32 %v739, %v740
    %v742 = vsel %vm498, %v399, -inf
    %v743 = vsel %vm500, %v400, -inf
    %v744 = vmax.f32 %v742, %v743
    %v745 = vrot.slane %v744, 4
    %v746 = vmax.f32 %v744, %v745
    %v747 = vrot.slane %v746, 2
    %v748 = vmax.f32 %v746, %v747
    %v749 = vrot.slane %v748, 1
    %v750 = vmax.f32 %v748, %v749
    %v751 = vsel %vm498, %v412, -inf
    %v752 = vsel %vm500, %v413, -inf
    %v753 = vmax.f32 %v751, %v752
    %v754 = vrot.slane %v753, 4
    %v755 = vmax.f32 %v753, %v754
    %v756 = vrot.slane %v755, 2
    %v757 = vmax.f32 %v755, %v756
    %v758 = vrot.slane %v757, 1
    %v759 = vmax.f32 %v757, %v758
    %v760 = vsel %vm518, %v400, -inf
    %v761 = vrot.slane %v760, 4
    %v762 = vmax.f32 %v760, %v761
    %v763 = vrot.slane %v762, 2
    %v764 = vmax.f32 %v762, %v763
    %v765 = vrot.slane %v764, 1
    %v766 = vmax.f32 %v764, %v765
    %v767 = vsel %vm518, %v413, -inf
    %v768 = vrot.slane %v767, 4
    %v769 = vmax.f32 %v767, %v768
    %v770 = vrot.slane %v769, 2
    %v771 = vmax.f32 %v769, %v770
    %v772 = vrot.slane %v771, 1
    %v773 = vmax.f32 %v771, %v772
    %v774 = vsel %vm533, %v400, -inf
    %v775 = vrot.slane %v774, 4
    %v776 = vmax.f32 %v774, %v775
    %v777 = vrot.slane %v776, 2
    %v778 = vmax.f32 %v776, %v777
    %v779 = vrot.slane %v778, 1
    %v780 = vmax.f32 %v778, %v779
    %v781 = vsel %vm533, %v413, -inf
    %v782 = vrot.slane %v781, 4
    %v783 = vmax.f32 %v781, %v782
    %v784 = vrot.slane %v783, 2
    %v785 = vmax.f32 %v783, %v784
    %v786 = vrot.slane %v785, 1
    %v787 = vmax.f32 %v785, %v786
    %v788 = vsel %vm418, %v401, -inf
    %v789 = vrot.slane %v788, 4
    %v790 = vmax.f32 %v788, %v789
    %v791 = vrot.slane %v790, 2
    %v792 = vmax.f32 %v790, %v791
    %v793 = vrot.slane %v792, 1
    %v794 = vmax.f32 %v792, %v793
    %v795 = vsel %vm418, %v414, -inf
    %v796 = vrot.slane %v795, 4
    %v797 = vmax.f32 %v795, %v796
    %v798 = vrot.slane %v797, 2
    %v799 = vmax.f32 %v797, %v798
    %v800 = vrot.slane %v799, 1
    %v801 = vmax.f32 %v799, %v800
    %v802 = vsel %vm433, %v401, -inf
    %v803 = vrot.slane %v802, 4
    %v804 = vmax.f32 %v802, %v803
    %v805 = vrot.slane %v804, 2
    %v806 = vmax.f32 %v804, %v805
    %v807 = vrot.slane %v806, 1
    %v808 = vmax.f32 %v806, %v807
    %v809 = vsel %vm433, %v414, -inf
    %v810 = vrot.slane %v809, 4
    %v811 = vmax.f32 %v809, %v810
    %v812 = vrot.slane %v811, 2
    %v813 = vmax.f32 %v811, %v812
    %v814 = vrot.slane %v813, 1
    %v815 = vmax.f32 %v813, %v814
    %v816 = vsel %vm448, %v401, -inf
    %v817 = vsel %vm450, %v402, -inf
    %v818 = vmax.f32 %v816, %v817
    %v819 = vrot.slane %v818, 4
    %v820 = vmax.f32 %v818, %v819
    %v821 = vrot.slane %v820, 2
    %v822 = vmax.f32 %v820, %v821
    %v823 = vrot.slane %v822, 1
    %v824 = vmax.f32 %v822, %v823
    %v825 = vsel %vm448, %v414, -inf
    %v826 = vsel %vm450, %v415, -inf
    %v827 = vmax.f32 %v825, %v826
    %v828 = vrot.slane %v827, 4
    %v829 = vmax.f32 %v827, %v828
    %v830 = vrot.slane %v829, 2
    %v831 = vmax.f32 %v829, %v830
    %v832 = vrot.slane %v831, 1
    %v833 = vmax.f32 %v831, %v832
    %v834 = vsel %vm468, %v402, -inf
    %v835 = vrot.slane %v834, 4
    %v836 = vmax.f32 %v834, %v835
    %v837 = vrot.slane %v836, 2
    %v838 = vmax.f32 %v836, %v837
    %v839 = vrot.slane %v838, 1
    %v840 = vmax.f32 %v838, %v839
    %v841 = vsel %vm468, %v415, -inf
    %v842 = vrot.slane %v841, 4
    %v843 = vmax.f32 %v841, %v842
    %v844 = vrot.slane %v843, 2
    %v845 = vmax.f32 %v843, %v844
    %v846 = vrot.slane %v845, 1
    %v847 = vmax.f32 %v845, %v846
    %v848 = vsel %vm483, %v402, -inf
    %v849 = vrot.slane %v848, 4
    %v850 = vmax.f32 %v848, %v849
    %v851 = vrot.slane %v850, 2
    %v852 = vmax.f32 %v850, %v851
    %v853 = vrot.slane %v852, 1
    %v854 = vmax.f32 %v852, %v853
    %v855 = vsel %vm483, %v415, -inf
    %v856 = vrot.slane %v855, 4
    %v857 = vmax.f32 %v855, %v856
    %v858 = vrot.slane %v857, 2
    %v859 = vmax.f32 %v857, %v858
    %v860 = vrot.slane %v859, 1
    %v861 = vmax.f32 %v859, %v860
    %v862 = vsel %vm498, %v402, -inf
    %v863 = vsel %vm500, %v403, -inf
    %v864 = vmax.f32 %v862, %v863
    %v865 = vrot.slane %v864, 4
    %v866 = vmax.f32 %v864, %v865
    %v867 = vrot.slane %v866, 2
    %v868 = vmax.f32 %v866, %v867
    %v869 = vrot.slane %v868, 1
    %v870 = vmax.f32 %v868, %v869
    %v871 = vsel %vm498, %v415, -inf
    %v872 = vsel %vm500, %v416, -inf
    %v873 = vmax.f32 %v871, %v872
    %v874 = vrot.slane %v873, 4
    %v875 = vmax.f32 %v873, %v874
    %v876 = vrot.slane %v875, 2
    %v877 = vmax.f32 %v875, %v876
    %v878 = vrot.slane %v877, 1
    %v879 = vmax.f32 %v877, %v878
    %v880 = vsel %vm518, %v403, -inf
    %v881 = vrot.slane %v880, 4
    %v882 = vmax.f32 %v880, %v881
    %v883 = vrot.slane %v882, 2
    %v884 = vmax.f32 %v882, %v883
    %v885 = vrot.slane %v884, 1
    %v886 = vmax.f32 %v884, %v885
    %v887 = vsel %vm518, %v416, -inf
    %v888 = vrot.slane %v887, 4
    %v889 = vmax.f32 %v887, %v888
    %v890 = vrot.slane %v889, 2
    %v891 = vmax.f32 %v889, %v890
    %v892 = vrot.slane %v891, 1
    %v893 = vmax.f32 %v891, %v892
    %v894 = vsel %vm533, %v403, -inf
    %v895 = vrot.slane %v894, 4
    %v896 = vmax.f32 %v894, %v895
    %v897 = vrot.slane %v896, 2
    %v898 = vmax.f32 %v896, %v897
    %v899 = vrot.slane %v898, 1
    %v900 = vmax.f32 %v898, %v899
    %v901 = vsel %vm533, %v416, -inf
    %v902 = vrot.slane %v901, 4
    %v903 = vmax.f32 %v901, %v902
    %v904 = vrot.slane %v903, 2
    %v905 = vmax.f32 %v903, %v904
    %v906 = vrot.slane %v905, 1
    %v907 = vmax.f32 %v905, %v906
    %v908 = vsel %vm418, %v404, -inf
    %v909 = vrot.slane %v908, 4
    %v910 = vmax.f32 %v908, %v909
    %v911 = vrot.slane %v910, 2
    %v912 = vmax.f32 %v910, %v911
    %v913 = vrot.slane %v912, 1
    %v914 = vmax.f32 %v912, %v913
    %v915 = vsel %vm418, %v417, -inf
    %v916 = vrot.slane %v915, 4
    %v917 = vmax.f32 %v915, %v916
    %v918 = vrot.slane %v917, 2
    %v919 = vmax.f32 %v917, %v918
    %v920 = vrot.slane %v919, 1
    %v921 = vmax.f32 %v919, %v920
    %vm922 = vcmask 1040384
    %v923 = vsel %vm922, %v425, %v440
    %v924 = vsel %vm922, %v432, %v447
    %vm925 = vcmask 1041408
    %v926 = vsel %vm925, %v923, %v458
    %v927 = vsel %vm925, %v924, %v467
    %vm928 = vcmask 1042432
    %v929 = vsel %vm928, %v926, %v475
    %v930 = vsel %vm928, %v927, %v482
    %v931 = vsel %vm181, %v929, %v490
    %v932 = vsel %vm181, %v930, %v497
    %vm933 = vcmask 1044480
    %v934 = vsel %vm933, %v931, %v508
    %v935 = vsel %vm933, %v932, %v517
    %vm936 = vcmask 1045504
    %v937 = vsel %vm936, %v934, %v525
    %v938 = vsel %vm936, %v935, %v532
    %vm939 = vcmask 1046528
    %v940 = vsel %vm939, %v937, %v540
    %v941 = vsel %vm939, %v938, %v547
    %v942 = vsel %vm922, %v554, %v568
    %v943 = vsel %vm922, %v561, %v575
    %v944 = vsel %vm925, %v942, %v584
    %v945 = vsel %vm925, %v943, %v593
    %v946 = vsel %vm928, %v944, %v600
    %v947 = vsel %vm928, %v945, %v607
    %v948 = vsel %vm181, %v946, %v614
    %v949 = vsel %vm181, %v947, %v621
    %v950 = vsel %vm933, %v948, %v630
    %v951 = vsel %vm933, %v949, %v639
    %v952 = vsel %vm936, %v950, %v646
    %v953 = vsel %vm936, %v951, %v653
    %v954 = vsel %vm939, %v952, %v660
    %v955 = vsel %vm939, %v953, %v667
    %v956 = vsel %vm922, %v674, %v688
    %v957 = vsel %vm922, %v681, %v695
    %v958 = vsel %vm925, %v956, %v704
    %v959 = vsel %vm925, %v957, %v713
    %v960 = vsel %vm928, %v958, %v720
    %v961 = vsel %vm928, %v959, %v727
    %v962 = vsel %vm181, %v960, %v734
    %v963 = vsel %vm181, %v961, %v741
    %v964 = vsel %vm933, %v962, %v750
    %v965 = vsel %vm933, %v963, %v759
    %v966 = vsel %vm936, %v964, %v766
    %v967 = vsel %vm936, %v965, %v773
    %v968 = vsel %vm939, %v966, %v780
    %v969 = vsel %vm939, %v967, %v787
    %v970 = vsel %vm922, %v794, %v808
    %v971 = vsel %vm922, %v801, %v815
    %v972 = vsel %vm925, %v970, %v824
    %v973 = vsel %vm925, %v971, %v833
    %v974 = vsel %vm928, %v972, %v840
    %v975 = vsel %vm928, %v973, %v847
    %v976 = vsel %vm181, %v974, %v854
    %v977 = vsel %vm181, %v975, %v861
    %v978 = vsel %vm933, %v976, %v870
    %v979 = vsel %vm933, %v977, %v879
    %v980 = vsel %vm936, %v978, %v886
    %v981 = vsel %vm936, %v979, %v893
    %v982 = vsel %vm939, %v980, %v900
    %v983 = vsel %vm939, %v981, %v907
    %v986 = vrot.slane %v404, 2
    %v987 = vrot.slane %v417, 2
    %v990 = vsel %vm922, %v914, %v986
    %v991 = vsel %vm922, %v921, %v987
    %v1002 = vrot.slane %v940, 3
    %v1003 = vrot.slane %v954, 3
    %v1004 = vsel %vm933, %v1002, %v1003
    %v1005 = vrot.slane %v968, 3
    %v1006 = vsel %vm933, %v1003, %v1005
    %v1007 = vrot.slane %v982, 3
    %v1008 = vsel %vm933, %v1005, %v1007
    %v1009 = vrot.slane %v990, 3
    %v1010 = vsel %vm933, %v1007, %v1009
    %v1011 = vrot.slane %v941, 3
    %v1012 = vrot.slane %v955, 3
    %v1013 = vsel %vm933, %v1011, %v1012
    %v1014 = vrot.slane %v969, 3
    %v1015 = vsel %vm933, %v1012, %v1014
    %v1016 = vrot.slane %v983, 3
    %v1017 = vsel %vm933, %v1014, %v1016
    %v1018 = vrot.slane %v991, 3
    %v1019 = vsel %vm933, %v1016, %v1018
    %v1030 = vsel %vm933, 0.0, %v1002
    %v1031 = vsel %vm933, 0.0, %v1011
    %v1032 = vsel %vm939, %v1010, 0.0
    %v1033 = vsel %vm939, %v1019, 0.0
    %v1038 = vrot.slane %v1030, 1
    %v1039 = vrot.slane %v1004, 1
    %v1040 = vsel %vm939, %v1038, %v1039
    %v1041 = vrot.slane %v1006, 1
    %v1042 = vsel %vm939, %v1039, %v1041
    %v1043 = vrot.slane %v1008, 1
    %v1044 = vsel %vm939, %v1041, %v1043
    %v1045 = vrot.slane %v1032, 1
    %v1046 = vsel %vm939, %v1043, %v1045
    %v1047 = vrot.slane %v1031, 1
    %v1048 = vrot.slane %v1013, 1
    %v1049 = vsel %vm939, %v1047, %v1048
    %v1050 = vrot.slane %v1015, 1
    %v1051 = vsel %vm939, %v1048, %v1050
    %v1052 = vrot.slane %v1017, 1
    %v1053 = vsel %vm939, %v1050, %v1052
    %v1054 = vrot.slane %v1033, 1
    %v1055 = vsel %vm939, %v1052, %v1054
    %1056 = vrot.lane.b32.xlu0 %v1040, 32
    %v1057 = vpop.permute.xlu0 %1056
    %1058 = vrot.lane.b32.xlu0 %v1042, 32
    %v1059 = vpop.permute.xlu0 %1058
    %1060 = vrot.lane.b32.xlu0 %v1044, 32
    %v1061 = vpop.permute.xlu0 %1060
    %1062 = vrot.lane.b32.xlu0 %v1046, 32
    %v1063 = vpop.permute.xlu0 %1062
    %1064 = vrot.lane.b32.xlu0 %v1045, 32
    %v1065 = vpop.permute.xlu0 %1064
    %1066 = vrot.lane.b32.xlu0 %v1049, 32
    %v1067 = vpop.permute.xlu0 %1066
    %1068 = vrot.lane.b32.xlu0 %v1051, 32
    %v1069 = vpop.permute.xlu0 %1068
    %1070 = vrot.lane.b32.xlu0 %v1053, 32
    %v1071 = vpop.permute.xlu0 %1070
    %1072 = vrot.lane.b32.xlu0 %v1055, 32
    %v1073 = vpop.permute.xlu0 %1072
    %1074 = vrot.lane.b32.xlu0 %v1054, 32
    %v1075 = vpop.permute.xlu0 %1074
    %v1086 = vrot.slane %v1030, 2
    %v1087 = vrot.slane %v1004, 2
    %v1088 = vsel %vm936, %v1086, %v1087
    %v1089 = vrot.slane %v1006, 2
    %v1090 = vsel %vm936, %v1087, %v1089
    %v1091 = vrot.slane %v1008, 2
    %v1092 = vsel %vm936, %v1089, %v1091
    %v1093 = vrot.slane %v1032, 2
    %v1094 = vsel %vm936, %v1091, %v1093
    %v1095 = vrot.slane %v1031, 2
    %v1096 = vrot.slane %v1013, 2
    %v1097 = vsel %vm936, %v1095, %v1096
    %v1098 = vrot.slane %v1015, 2
    %v1099 = vsel %vm936, %v1096, %v1098
    %v1100 = vrot.slane %v1017, 2
    %v1101 = vsel %vm936, %v1098, %v1100
    %v1102 = vrot.slane %v1033, 2
    %v1103 = vsel %vm936, %v1100, %v1102
    %1104 = vrot.lane.b32.xlu0 %v1088, 64
    %v1105 = vpop.permute.xlu0 %1104
    %1106 = vrot.lane.b32.xlu0 %v1090, 64
    %v1107 = vpop.permute.xlu0 %1106
    %1108 = vrot.lane.b32.xlu0 %v1092, 64
    %v1109 = vpop.permute.xlu0 %1108
    %1110 = vrot.lane.b32.xlu0 %v1094, 64
    %v1111 = vpop.permute.xlu0 %1110
    %1112 = vrot.lane.b32.xlu0 %v1093, 64
    %v1113 = vpop.permute.xlu0 %1112
    %1114 = vrot.lane.b32.xlu0 %v1097, 64
    %v1115 = vpop.permute.xlu0 %1114
    %1116 = vrot.lane.b32.xlu0 %v1099, 64
    %v1117 = vpop.permute.xlu0 %1116
    %1118 = vrot.lane.b32.xlu0 %v1101, 64
    %v1119 = vpop.permute.xlu0 %1118
    %1120 = vrot.lane.b32.xlu0 %v1103, 64
    %v1121 = vpop.permute.xlu0 %1120
    %1122 = vrot.lane.b32.xlu0 %v1102, 64
    %v1123 = vpop.permute.xlu0 %1122
    %v1134 = vrot.slane %v1030, 3
    %v1135 = vrot.slane %v1004, 3
    %v1136 = vsel %vm933, %v1134, %v1135
    %v1137 = vrot.slane %v1006, 3
    %v1138 = vsel %vm933, %v1135, %v1137
    %v1139 = vrot.slane %v1008, 3
    %v1140 = vsel %vm933, %v1137, %v1139
    %v1141 = vrot.slane %v1032, 3
    %v1142 = vsel %vm933, %v1139, %v1141
    %v1143 = vrot.slane %v1031, 3
    %v1144 = vrot.slane %v1013, 3
    %v1145 = vsel %vm933, %v1143, %v1144
    %v1146 = vrot.slane %v1015, 3
    %v1147 = vsel %vm933, %v1144, %v1146
    %v1148 = vrot.slane %v1017, 3
    %v1149 = vsel %vm933, %v1146, %v1148
    %v1150 = vrot.slane %v1033, 3
    %v1151 = vsel %vm933, %v1148, %v1150
    %1152 = vrot.lane.b32.xlu0 %v1136, 96
    %v1153 = vpop.permute.xlu0 %1152
    %1154 = vrot.lane.b32.xlu0 %v1138, 96
    %v1155 = vpop.permute.xlu0 %1154
    %1156 = vrot.lane.b32.xlu0 %v1140, 96
    %v1157 = vpop.permute.xlu0 %1156
    %1158 = vrot.lane.b32.xlu0 %v1142, 96
    %v1159 = vpop.permute.xlu0 %1158
    %1160 = vrot.lane.b32.xlu0 %v1141, 96
    %v1161 = vpop.permute.xlu0 %1160
    %1162 = vrot.lane.b32.xlu0 %v1145, 96
    %v1163 = vpop.permute.xlu0 %1162
    %1164 = vrot.lane.b32.xlu0 %v1147, 96
    %v1165 = vpop.permute.xlu0 %1164
    %1166 = vrot.lane.b32.xlu0 %v1149, 96
    %v1167 = vpop.permute.xlu0 %1166
    %1168 = vrot.lane.b32.xlu0 %v1151, 96
    %v1169 = vpop.permute.xlu0 %1168
    %1170 = vrot.lane.b32.xlu0 %v1150, 96
    %v1171 = vpop.permute.xlu0 %1170
    %v1182 = vrot.slane %v1030, 4
    %v1183 = vrot.slane %v1004, 4
    %v1184 = vsel %vm181, %v1182, %v1183
    %v1185 = vrot.slane %v1006, 4
    %v1186 = vsel %vm181, %v1183, %v1185
    %v1187 = vrot.slane %v1008, 4
    %v1188 = vsel %vm181, %v1185, %v1187
    %v1189 = vrot.slane %v1032, 4
    %v1190 = vsel %vm181, %v1187, %v1189
    %v1191 = vrot.slane %v1031, 4
    %v1192 = vrot.slane %v1013, 4
    %v1193 = vsel %vm181, %v1191, %v1192
    %v1194 = vrot.slane %v1015, 4
    %v1195 = vsel %vm181, %v1192, %v1194
    %v1196 = vrot.slane %v1017, 4
    %v1197 = vsel %vm181, %v1194, %v1196
    %v1198 = vrot.slane %v1033, 4
    %v1199 = vsel %vm181, %v1196, %v1198
    %v1210 = vrot.slane %v1030, 5
    %v1211 = vrot.slane %v1004, 5
    %v1212 = vsel %vm928, %v1210, %v1211
    %v1213 = vrot.slane %v1006, 5
    %v1214 = vsel %vm928, %v1211, %v1213
    %v1215 = vrot.slane %v1008, 5
    %v1216 = vsel %vm928, %v1213, %v1215
    %v1217 = vrot.slane %v1032, 5
    %v1218 = vsel %vm928, %v1215, %v1217
    %v1219 = vrot.slane %v1031, 5
    %v1220 = vrot.slane %v1013, 5
    %v1221 = vsel %vm928, %v1219, %v1220
    %v1222 = vrot.slane %v1015, 5
    %v1223 = vsel %vm928, %v1220, %v1222
    %v1224 = vrot.slane %v1017, 5
    %v1225 = vsel %vm928, %v1222, %v1224
    %v1226 = vrot.slane %v1033, 5
    %v1227 = vsel %vm928, %v1224, %v1226
    %1228 = vrot.lane.b32.xlu0 %v1212, 32
    %v1229 = vpop.permute.xlu0 %1228
    %1230 = vrot.lane.b32.xlu0 %v1214, 32
    %v1231 = vpop.permute.xlu0 %1230
    %1232 = vrot.lane.b32.xlu0 %v1216, 32
    %v1233 = vpop.permute.xlu0 %1232
    %1234 = vrot.lane.b32.xlu0 %v1218, 32
    %v1235 = vpop.permute.xlu0 %1234
    %1236 = vrot.lane.b32.xlu0 %v1217, 32
    %v1237 = vpop.permute.xlu0 %1236
    %1238 = vrot.lane.b32.xlu0 %v1221, 32
    %v1239 = vpop.permute.xlu0 %1238
    %1240 = vrot.lane.b32.xlu0 %v1223, 32
    %v1241 = vpop.permute.xlu0 %1240
    %1242 = vrot.lane.b32.xlu0 %v1225, 32
    %v1243 = vpop.permute.xlu0 %1242
    %1244 = vrot.lane.b32.xlu0 %v1227, 32
    %v1245 = vpop.permute.xlu0 %1244
    %1246 = vrot.lane.b32.xlu0 %v1226, 32
    %v1247 = vpop.permute.xlu0 %1246
    %v1258 = vrot.slane %v1030, 6
    %v1259 = vrot.slane %v1004, 6
    %v1260 = vsel %vm925, %v1258, %v1259
    %v1261 = vrot.slane %v1006, 6
    %v1262 = vsel %vm925, %v1259, %v1261
    %v1263 = vrot.slane %v1008, 6
    %v1264 = vsel %vm925, %v1261, %v1263
    %v1265 = vrot.slane %v1032, 6
    %v1266 = vsel %vm925, %v1263, %v1265
    %v1267 = vrot.slane %v1031, 6
    %v1268 = vrot.slane %v1013, 6
    %v1269 = vsel %vm925, %v1267, %v1268
    %v1270 = vrot.slane %v1015, 6
    %v1271 = vsel %vm925, %v1268, %v1270
    %v1272 = vrot.slane %v1017, 6
    %v1273 = vsel %vm925, %v1270, %v1272
    %v1274 = vrot.slane %v1033, 6
    %v1275 = vsel %vm925, %v1272, %v1274
    %1276 = vrot.lane.b32.xlu0 %v1260, 64
    %v1277 = vpop.permute.xlu0 %1276
    %1278 = vrot.lane.b32.xlu0 %v1262, 64
    %v1279 = vpop.permute.xlu0 %1278
    %1280 = vrot.lane.b32.xlu0 %v1264, 64
    %v1281 = vpop.permute.xlu0 %1280
    %1282 = vrot.lane.b32.xlu0 %v1266, 64
    %v1283 = vpop.permute.xlu0 %1282
    %1284 = vrot.lane.b32.xlu0 %v1265, 64
    %v1285 = vpop.permute.xlu0 %1284
    %1286 = vrot.lane.b32.xlu0 %v1269, 64
    %v1287 = vpop.permute.xlu0 %1286
    %1288 = vrot.lane.b32.xlu0 %v1271, 64
    %v1289 = vpop.permute.xlu0 %1288
    %1290 = vrot.lane.b32.xlu0 %v1273, 64
    %v1291 = vpop.permute.xlu0 %1290
    %1292 = vrot.lane.b32.xlu0 %v1275, 64
    %v1293 = vpop.permute.xlu0 %1292
    %1294 = vrot.lane.b32.xlu0 %v1274, 64
    %v1295 = vpop.permute.xlu0 %1294
    %v1307 = vrot.slane %v1030, 7
    %v1308 = vrot.slane %v1004, 7
    %v1309 = vsel %vm922, %v1307, %v1308
    %v1310 = vrot.slane %v1006, 7
    %v1311 = vsel %vm922, %v1308, %v1310
    %v1312 = vrot.slane %v1008, 7
    %v1313 = vsel %vm922, %v1310, %v1312
    %v1314 = vrot.slane %v1032, 7
    %v1315 = vsel %vm922, %v1312, %v1314
    %v1316 = vrot.slane 0.0, 7
    %v1317 = vsel %vm922, %v1314, %v1316
    %v1318 = vrot.slane %v1031, 7
    %v1319 = vrot.slane %v1013, 7
    %v1320 = vsel %vm922, %v1318, %v1319
    %v1321 = vrot.slane %v1015, 7
    %v1322 = vsel %vm922, %v1319, %v1321
    %v1323 = vrot.slane %v1017, 7
    %v1324 = vsel %vm922, %v1321, %v1323
    %v1325 = vrot.slane %v1033, 7
    %v1326 = vsel %vm922, %v1323, %v1325
    %v1327 = vsel %vm922, %v1325, %v1316
    %1328 = vrot.lane.b32.xlu0 %v1309, 96
    %v1329 = vpop.permute.xlu0 %1328
    %1330 = vrot.lane.b32.xlu0 %v1311, 96
    %v1331 = vpop.permute.xlu0 %1330
    %1332 = vrot.lane.b32.xlu0 %v1313, 96
    %v1333 = vpop.permute.xlu0 %1332
    %1334 = vrot.lane.b32.xlu0 %v1315, 96
    %v1335 = vpop.permute.xlu0 %1334
    %1336 = vrot.lane.b32.xlu0 %v1317, 96
    %v1337 = vpop.permute.xlu0 %1336
    %1338 = vrot.lane.b32.xlu0 %v1320, 96
    %v1339 = vpop.permute.xlu0 %1338
    %1340 = vrot.lane.b32.xlu0 %v1322, 96
    %v1341 = vpop.permute.xlu0 %1340
    %1342 = vrot.lane.b32.xlu0 %v1324, 96
    %v1343 = vpop.permute.xlu0 %1342
    %1344 = vrot.lane.b32.xlu0 %v1326, 96
    %v1345 = vpop.permute.xlu0 %1344
    %1346 = vrot.lane.b32.xlu0 %v1327, 96
    %v1347 = vpop.permute.xlu0 %1346
    %v1358 = vrot.slane 0.0, 1
    %v1359 = vsel %vm939, %v1045, %v1358
    %v1360 = vsel %vm939, %v1054, %v1358
    %1361 = vrot.lane.b32.xlu0 %v1359, 32
    %v1362 = vpop.permute.xlu0 %1361
    %1363 = vrot.lane.b32.xlu0 %v1358, 32
    %v1364 = vpop.permute.xlu0 %1363
    %1365 = vrot.lane.b32.xlu0 %v1360, 32
    %v1366 = vpop.permute.xlu0 %1365
    %v1370 = vrot.slane 0.0, 2
    %v1371 = vsel %vm936, %v1093, %v1370
    %v1372 = vsel %vm936, %v1102, %v1370
    %1373 = vrot.lane.b32.xlu0 %v1371, 64
    %v1374 = vpop.permute.xlu0 %1373
    %1375 = vrot.lane.b32.xlu0 %v1370, 64
    %v1376 = vpop.permute.xlu0 %1375
    %1377 = vrot.lane.b32.xlu0 %v1372, 64
    %v1378 = vpop.permute.xlu0 %1377
    %vm1382 = vcmask 261120
    %v1383 = vsel %vm1382, %v1030, %v1057
    %v1384 = vsel %vm1382, %v1004, %v1059
    %v1385 = vsel %vm1382, %v1006, %v1061
    %v1386 = vsel %vm1382, %v1008, %v1063
    %v1387 = vsel %vm1382, %v1032, %v1065
    %v1388 = vsel %vm1382, %v1031, %v1067
    %v1389 = vsel %vm1382, %v1013, %v1069
    %v1390 = vsel %vm1382, %v1015, %v1071
    %v1391 = vsel %vm1382, %v1017, %v1073
    %v1392 = vsel %vm1382, %v1033, %v1075
    %vm1393 = vcmask 523264
    %v1394 = vsel %vm1393, %v1383, %v1105
    %v1395 = vsel %vm1393, %v1384, %v1107
    %v1396 = vsel %vm1393, %v1385, %v1109
    %v1397 = vsel %vm1393, %v1386, %v1111
    %v1398 = vsel %vm1393, %v1387, %v1113
    %v1399 = vsel %vm1393, %v1388, %v1115
    %v1400 = vsel %vm1393, %v1389, %v1117
    %v1401 = vsel %vm1393, %v1390, %v1119
    %v1402 = vsel %vm1393, %v1391, %v1121
    %v1403 = vsel %vm1393, %v1392, %v1123
    %vm1404 = vcmask 785408
    %v1405 = vsel %vm1404, %v1394, %v1153
    %v1406 = vsel %vm1404, %v1395, %v1155
    %v1407 = vsel %vm1404, %v1396, %v1157
    %v1408 = vsel %vm1404, %v1397, %v1159
    %v1409 = vsel %vm1404, %v1398, %v1161
    %v1410 = vsel %vm1404, %v1399, %v1163
    %v1411 = vsel %vm1404, %v1400, %v1165
    %v1412 = vsel %vm1404, %v1401, %v1167
    %v1413 = vsel %vm1404, %v1402, %v1169
    %v1414 = vsel %vm1404, %v1403, %v1171
    %v1415 = vsel %vm1382, %v1184, %v1229
    %v1416 = vsel %vm1382, %v1186, %v1231
    %v1417 = vsel %vm1382, %v1188, %v1233
    %v1418 = vsel %vm1382, %v1190, %v1235
    %v1419 = vsel %vm1382, %v1189, %v1237
    %v1420 = vsel %vm1382, %v1193, %v1239
    %v1421 = vsel %vm1382, %v1195, %v1241
    %v1422 = vsel %vm1382, %v1197, %v1243
    %v1423 = vsel %vm1382, %v1199, %v1245
    %v1424 = vsel %vm1382, %v1198, %v1247
    %v1425 = vsel %vm1393, %v1415, %v1277
    %v1426 = vsel %vm1393, %v1416, %v1279
    %v1427 = vsel %vm1393, %v1417, %v1281
    %v1428 = vsel %vm1393, %v1418, %v1283
    %v1429 = vsel %vm1393, %v1419, %v1285
    %v1430 = vsel %vm1393, %v1420, %v1287
    %v1431 = vsel %vm1393, %v1421, %v1289
    %v1432 = vsel %vm1393, %v1422, %v1291
    %v1433 = vsel %vm1393, %v1423, %v1293
    %v1434 = vsel %vm1393, %v1424, %v1295
    %v1435 = vsel %vm1404, %v1425, %v1329
    %v1436 = vsel %vm1404, %v1426, %v1331
    %v1437 = vsel %vm1404, %v1427, %v1333
    %v1438 = vsel %vm1404, %v1428, %v1335
    %v1439 = vsel %vm1404, %v1429, %v1337
    %v1440 = vsel %vm1404, %v1430, %v1339
    %v1441 = vsel %vm1404, %v1431, %v1341
    %v1442 = vsel %vm1404, %v1432, %v1343
    %v1443 = vsel %vm1404, %v1433, %v1345
    %v1444 = vsel %vm1404, %v1434, %v1347
    %v1445 = vsel %vm1382, %v1032, %v1362
    %v1446 = vsel %vm1382, 0.0, %v1364
    %v1447 = vsel %vm1382, %v1033, %v1366
    %v1448 = vsel %vm1393, %v1445, %v1374
    %v1449 = vsel %vm1393, %v1446, %v1376
    %v1450 = vsel %vm1393, %v1447, %v1378
    %v1451 = vsel %vm925, %v1409, 0.0
    %v1452 = vsel %vm925, %v1439, 0.0
    %v1453 = vsel %vm925, %v1449, 0.0
    %v1454 = vsel %vm925, %v1414, 0.0
    %v1455 = vsel %vm925, %v1444, 0.0
    %v1456 = vld [vmem:[%s4] sm:$0xff]
    %v1457 = vld [vmem:[%s4 + $0x8] sm:$0xff]
    %v1458 = vld [vmem:[%s4 + $0x10] sm:$0xff]
    %v1459 = vld [vmem:[%s4 + $0x18] sm:$0xff]
    %v1460 = vld [vmem:[%s4 + $0x20] sm:$0xff]
    %v1461 = vld [vmem:[%s4 + $0x28] sm:$0xff]
    %v1462 = vld [vmem:[%s4 + $0x30] sm:$0xff]
    %v1463 = vld [vmem:[%s4 + $0x38] sm:$0xff]
    %v1464 = vld [vmem:[%s4 + $0x40] sm:$0xff]
    %v1465 = vld [vmem:[%s4 + $0x48] sm:$0xff]
    %v1466 = vld [vmem:[%s4 + $0x50] sm:$0xff]
    %v1467 = vld [vmem:[%s4 + $0x58] sm:$0xff]
    %v1468 = vld [vmem:[%s4 + $0x60] sm:$0xff]
    %v1469 = vld [vmem:[%s4 + $0x68] sm:$0xff]
    %v1470 = vld [vmem:[%s4 + $0x70] sm:$0xff]
    %v1471 = vld [vmem:[%s4 + $0x78] sm:$0xff]
    %v1472 = vld [vmem:[%s4 + $0x80] sm:$0xff]
    %v1473 = vld [vmem:[%s4 + $0x88] sm:$0xff]
    %v1474 = vld [vmem:[%s4 + $0x90] sm:$0xff]
    %v1475 = vld [vmem:[%s4 + $0x98] sm:$0xff]
    %v1476 = vld [vmem:[%s4 + $0xa0] sm:$0xff]
    %v1477 = vld [vmem:[%s4 + $0xa8] sm:$0xff]
    %v1478 = vld [vmem:[%s4 + $0xb0] sm:$0xff]
    %v1479 = vld [vmem:[%s4 + $0xb8] sm:$0xff]
    %v1480 = vld [vmem:[%s4 + $0xc0] sm:$0xff]
    %v1481 = vld [vmem:[%s4 + $0xc8] sm:$0xff]
    %v1482 = vld [vmem:[%s4 + $0xd0] sm:$0xff]
    %v1483 = vld [vmem:[%s4 + $0xd8] sm:$0xff]
    %v1484 = vld [vmem:[%s4 + $0xe0] sm:$0xff]
    %v1485 = vld [vmem:[%s4 + $0xe8] sm:$0xff]
    %v1486 = vld [vmem:[%s4 + $0xf0] sm:$0xff]
    %v1487 = vld [vmem:[%s4 + $0xf8] sm:$0xff]
    %v1488 = vld [vmem:[%s4 + $0x100] sm:$0xff]
    %v1489 = vld [vmem:[%s4 + $0x108] sm:$0xff]
    %v1490 = vld [vmem:[%s4 + $0x110] sm:$0xff]
    %v1491 = vld [vmem:[%s4 + $0x118] sm:$0xff]
    %v1492 = vld [vmem:[%s4 + $0x120] sm:$0xff]
    %v1493 = vld [vmem:[%s4 + $0x128] sm:$0xff]
    %v1494 = vld [vmem:[%s4 + $0x130] sm:$0xff]
    %v1495 = vld [vmem:[%s4 + $0x138] sm:$0xff]
    %v1496 = vld [vmem:[%s4 + $0x140] sm:$0xff]
    %v1497 = vld [vmem:[%s4 + $0x148] sm:$0xff]
    %v1498 = vld [vmem:[%s4 + $0x150] sm:$0xff]
    %v1499 = vld [vmem:[%s4 + $0x158] sm:$0xff]
    %v1501 = vsel %vm1404, %v1395, 0
    %v1504 = vsel %vm1404, %v1396, 0
    %v1507 = vsel %vm1404, %v1397, 0
    %v1510 = vsel %vm1404, %v1448, 0
    %v1513 = vsel %vm1404, %v1453, 0
    %v1516 = vsel %vm1404, %v1400, 0
    %v1519 = vsel %vm1404, %v1401, 0
    %v1522 = vsel %vm1404, %v1402, 0
    %v1525 = vsel %vm1404, %v1450, 0
    %1527 = vmatpush.msra.mxu0 %v1471
    %1528 = vmatpush.msra.mxu0 %v1470
    %1529 = vmatpush.msra.mxu0 %v1469
    %1530 = vmatpush.msra.mxu0 %v1468
    %1531 = vmatpush.msra.mxu0 %v1467
    %1532 = vmatpush.msra.mxu0 %v1466
    %1533 = vmatpush.msra.mxu0 %v1465
    %1534 = vmatpush.msra.mxu0 %v1464
    %1535 = vmatpush.msra.mxu0 %v1463
    %1536 = vmatpush.msra.mxu0 %v1462
    %1537 = vmatpush.msra.mxu0 %v1461
    %1538 = vmatpush.msra.mxu0 %v1460
    %1539 = vmatpush.msra.mxu0 %v1459
    %1540 = vmatpush.msra.mxu0 %v1458
    %1541 = vmatpush.msra.mxu0 %v1457
    %1542 = vmatpush.msra.mxu0 %v1456
    %1543 = vmatmul.f32.gmra.mxu0 %v1405
    %v1544 = vpop.f32.mrf.mxu0
    %v1545 = vadd.f32 0.0, %v1544
    %1546 = vmatmul.f32.gmra.mxu0 %v1406
    %v1547 = vpop.f32.mrf.mxu0
    %v1548 = vadd.f32 0.0, %v1547
    %1549 = vmatmul.f32.gmra.mxu0 %v1407
    %v1550 = vpop.f32.mrf.mxu0
    %v1551 = vadd.f32 0.0, %v1550
    %1552 = vmatmul.f32.gmra.mxu0 %v1408
    %v1553 = vpop.f32.mrf.mxu0
    %v1554 = vadd.f32 0.0, %v1553
    %1555 = vmatmul.f32.gmra.mxu0 %v1451
    %v1556 = vpop.f32.mrf.mxu0
    %v1557 = vadd.f32 0.0, %v1556
    %1558 = vmatmul.f32.gmra.mxu0 %v1410
    %v1559 = vpop.f32.mrf.mxu0
    %v1560 = vadd.f32 0.0, %v1559
    %1561 = vmatmul.f32.gmra.mxu0 %v1411
    %v1562 = vpop.f32.mrf.mxu0
    %v1563 = vadd.f32 0.0, %v1562
    %1564 = vmatmul.f32.gmra.mxu0 %v1412
    %v1565 = vpop.f32.mrf.mxu0
    %v1566 = vadd.f32 0.0, %v1565
    %1567 = vmatmul.f32.gmra.mxu0 %v1413
    %v1568 = vpop.f32.mrf.mxu0
    %v1569 = vadd.f32 0.0, %v1568
    %1570 = vmatmul.f32.gmra.mxu0 %v1454
    %v1571 = vpop.f32.mrf.mxu0
    %v1572 = vadd.f32 0.0, %v1571
    %1573 = vdwg.mxu0
    %1574 = vmatpush.msra.mxu0 %v1487
    %1575 = vmatpush.msra.mxu0 %v1486
    %1576 = vmatpush.msra.mxu0 %v1485
    %1577 = vmatpush.msra.mxu0 %v1484
    %1578 = vmatpush.msra.mxu0 %v1483
    %1579 = vmatpush.msra.mxu0 %v1482
    %1580 = vmatpush.msra.mxu0 %v1481
    %1581 = vmatpush.msra.mxu0 %v1480
    %1582 = vmatpush.msra.mxu0 %v1479
    %1583 = vmatpush.msra.mxu0 %v1478
    %1584 = vmatpush.msra.mxu0 %v1477
    %1585 = vmatpush.msra.mxu0 %v1476
    %1586 = vmatpush.msra.mxu0 %v1475
    %1587 = vmatpush.msra.mxu0 %v1474
    %1588 = vmatpush.msra.mxu0 %v1473
    %1589 = vmatpush.msra.mxu0 %v1472
    %1590 = vmatmul.f32.gmra.mxu0 %v1435
    %v1591 = vpop.f32.mrf.mxu0
    %v1592 = vadd.f32 %v1545, %v1591
    %1593 = vmatmul.f32.gmra.mxu0 %v1436
    %v1594 = vpop.f32.mrf.mxu0
    %v1595 = vadd.f32 %v1548, %v1594
    %1596 = vmatmul.f32.gmra.mxu0 %v1437
    %v1597 = vpop.f32.mrf.mxu0
    %v1598 = vadd.f32 %v1551, %v1597
    %1599 = vmatmul.f32.gmra.mxu0 %v1438
    %v1600 = vpop.f32.mrf.mxu0
    %v1601 = vadd.f32 %v1554, %v1600
    %1602 = vmatmul.f32.gmra.mxu0 %v1452
    %v1603 = vpop.f32.mrf.mxu0
    %v1604 = vadd.f32 %v1557, %v1603
    %1605 = vmatmul.f32.gmra.mxu0 %v1440
    %v1606 = vpop.f32.mrf.mxu0
    %v1607 = vadd.f32 %v1560, %v1606
    %1608 = vmatmul.f32.gmra.mxu0 %v1441
    %v1609 = vpop.f32.mrf.mxu0
    %v1610 = vadd.f32 %v1563, %v1609
    %1611 = vmatmul.f32.gmra.mxu0 %v1442
    %v1612 = vpop.f32.mrf.mxu0
    %v1613 = vadd.f32 %v1566, %v1612
    %1614 = vmatmul.f32.gmra.mxu0 %v1443
    %v1615 = vpop.f32.mrf.mxu0
    %v1616 = vadd.f32 %v1569, %v1615
    %1617 = vmatmul.f32.gmra.mxu0 %v1455
    %v1618 = vpop.f32.mrf.mxu0
    %v1619 = vadd.f32 %v1572, %v1618
    %1620 = vdwg.mxu0
    %1621 = vmatpush.msra.mxu0 0.0
    %1622 = vmatpush.msra.mxu0 0.0
    %1623 = vmatpush.msra.mxu0 0.0
    %1624 = vmatpush.msra.mxu0 0.0
    %1625 = vmatpush.msra.mxu0 %v1499
    %1626 = vmatpush.msra.mxu0 %v1498
    %1627 = vmatpush.msra.mxu0 %v1497
    %1628 = vmatpush.msra.mxu0 %v1496
    %1629 = vmatpush.msra.mxu0 %v1495
    %1630 = vmatpush.msra.mxu0 %v1494
    %1631 = vmatpush.msra.mxu0 %v1493
    %1632 = vmatpush.msra.mxu0 %v1492
    %1633 = vmatpush.msra.mxu0 %v1491
    %1634 = vmatpush.msra.mxu0 %v1490
    %1635 = vmatpush.msra.mxu0 %v1489
    %1636 = vmatpush.msra.mxu0 %v1488
    %1637 = vmatmul.f32.gmra.mxu0 %v1501
    %v1638 = vpop.f32.mrf.mxu0
    %v1639 = vadd.f32 %v1592, %v1638
    %1640 = vmatmul.f32.gmra.mxu0 %v1504
    %v1641 = vpop.f32.mrf.mxu0
    %v1642 = vadd.f32 %v1595, %v1641
    %1643 = vmatmul.f32.gmra.mxu0 %v1507
    %v1644 = vpop.f32.mrf.mxu0
    %v1645 = vadd.f32 %v1598, %v1644
    %1646 = vmatmul.f32.gmra.mxu0 %v1510
    %v1647 = vpop.f32.mrf.mxu0
    %v1648 = vadd.f32 %v1601, %v1647
    %1649 = vmatmul.f32.gmra.mxu0 %v1513
    %v1650 = vpop.f32.mrf.mxu0
    %v1651 = vadd.f32 %v1604, %v1650
    %1652 = vmatmul.f32.gmra.mxu0 %v1516
    %v1653 = vpop.f32.mrf.mxu0
    %v1654 = vadd.f32 %v1607, %v1653
    %1655 = vmatmul.f32.gmra.mxu0 %v1519
    %v1656 = vpop.f32.mrf.mxu0
    %v1657 = vadd.f32 %v1610, %v1656
    %1658 = vmatmul.f32.gmra.mxu0 %v1522
    %v1659 = vpop.f32.mrf.mxu0
    %v1660 = vadd.f32 %v1613, %v1659
    %1661 = vmatmul.f32.gmra.mxu0 %v1525
    %v1662 = vpop.f32.mrf.mxu0
    %v1663 = vadd.f32 %v1616, %v1662
    %1664 = vmatmul.f32.gmra.mxu0 %v1513
    %v1665 = vpop.f32.mrf.mxu0
    %v1666 = vadd.f32 %v1619, %v1665
    %1667 = vdwg.mxu0
    %v1668 = vld [vmem:[%s5] sm:$0x1]
    %v1670 = vperm.slane %v1668, 0
    %v1672 = vmul.f32 %v1639, %v1670
    %v1673 = vmul.f32 %v1642, %v1670
    %v1674 = vmul.f32 %v1645, %v1670
    %v1675 = vmul.f32 %v1648, %v1670
    %v1676 = vmul.f32 %v1651, %v1670
    %v1677 = vmul.f32 %v1654, %v1670
    %v1678 = vmul.f32 %v1657, %v1670
    %v1679 = vmul.f32 %v1660, %v1670
    %v1680 = vmul.f32 %v1663, %v1670
    %v1681 = vmul.f32 %v1666, %v1670
    %v1682 = vld [vmem:[%s6] sm:$0x1]
    %v1684 = vperm.slane %v1682, 0
    %v1686 = vadd.f32 %v1672, %v1684
    %v1687 = vadd.f32 %v1673, %v1684
    %v1688 = vadd.f32 %v1674, %v1684
    %v1689 = vadd.f32 %v1675, %v1684
    %v1690 = vadd.f32 %v1676, %v1684
    %v1691 = vadd.f32 %v1677, %v1684
    %v1692 = vadd.f32 %v1678, %v1684
    %v1693 = vadd.f32 %v1679, %v1684
    %v1694 = vadd.f32 %v1680, %v1684
    %v1695 = vadd.f32 %v1681, %v1684
    %vm1696 = vcmp.gt.f32.partialorder %v1686, 0.0
    %vm1697 = vcmp.gt.f32.partialorder %v1687, 0.0
    %vm1698 = vcmp.gt.f32.partialorder %v1688, 0.0
    %vm1699 = vcmp.gt.f32.partialorder %v1689, 0.0
    %vm1700 = vcmp.gt.f32.partialorder %v1690, 0.0
    %vm1701 = vcmp.gt.f32.partialorder %v1691, 0.0
    %vm1702 = vcmp.gt.f32.partialorder %v1692, 0.0
    %vm1703 = vcmp.gt.f32.partialorder %v1693, 0.0
    %vm1704 = vcmp.gt.f32.partialorder %v1694, 0.0
    %vm1705 = vcmp.gt.f32.partialorder %v1695, 0.0
    %v1706 = vmul.f32 %v1686, 0.01
    %v1707 = vmul.f32 %v1687, 0.01
    %v1708 = vmul.f32 %v1688, 0.01
    %v1709 = vmul.f32 %v1689, 0.01
    %v1710 = vmul.f32 %v1690, 0.01
    %v1711 = vmul.f32 %v1691, 0.01
    %v1712 = vmul.f32 %v1692, 0.01
    %v1713 = vmul.f32 %v1693, 0.01
    %v1714 = vmul.f32 %v1694, 0.01
    %v1715 = vmul.f32 %v1695, 0.01
    %v1716 = vsel %vm1696, %v1686, %v1706
    %v1717 = vsel %vm1697, %v1687, %v1707
    %v1718 = vsel %vm1698, %v1688, %v1708
    %v1719 = vsel %vm1699, %v1689, %v1709
    %v1720 = vsel %vm1700, %v1690, %v1710
    %v1721 = vsel %vm1701, %v1691, %v1711
    %v1722 = vsel %vm1702, %v1692, %v1712
    %v1723 = vsel %vm1703, %v1693, %v1713
    %v1724 = vsel %vm1704, %v1694, %v1714
    %v1725 = vsel %vm1705, %v1695, %v1715
    %vm1726 = vcmask 125952
    %v1727 = vsel %vm1726, %v1716, -inf
    %v1728 = vrot.slane %v1727, 4
    %v1729 = vmax.f32 %v1727, %v1728
    %v1730 = vrot.slane %v1729, 2
    %v1731 = vmax.f32 %v1729, %v1730
    %v1732 = vrot.slane %v1731, 1
    %v1733 = vmax.f32 %v1731, %v1732
    %v1734 = vsel %vm1726, %v1721, -inf
    %v1735 = vrot.slane %v1734, 4
    %v1736 = vmax.f32 %v1734, %v1735
    %v1737 = vrot.slane %v1736, 2
    %v1738 = vmax.f32 %v1736, %v1737
    %v1739 = vrot.slane %v1738, 1
    %v1740 = vmax.f32 %v1738, %v1739
    %vm1741 = vcmask 130052
    %v1742 = vsel %vm1741, %v1716, -inf
    %v1743 = vrot.slane %v1742, 4
    %v1744 = vmax.f32 %v1742, %v1743
    %v1745 = vrot.slane %v1744, 2
    %v1746 = vmax.f32 %v1744, %v1745
    %v1747 = vrot.slane %v1746, 1
    %v1748 = vmax.f32 %v1746, %v1747
    %v1749 = vsel %vm1741, %v1721, -inf
    %v1750 = vrot.slane %v1749, 4
    %v1751 = vmax.f32 %v1749, %v1750
    %v1752 = vrot.slane %v1751, 2
    %v1753 = vmax.f32 %v1751, %v1752
    %v1754 = vrot.slane %v1753, 1
    %v1755 = vmax.f32 %v1753, %v1754
    %v1756 = vsel %vm1726, %v1717, -inf
    %v1757 = vrot.slane %v1756, 4
    %v1758 = vmax.f32 %v1756, %v1757
    %v1759 = vrot.slane %v1758, 2
    %v1760 = vmax.f32 %v1758, %v1759
    %v1761 = vrot.slane %v1760, 1
    %v1762 = vmax.f32 %v1760, %v1761
    %v1763 = vsel %vm1726, %v1722, -inf
    %v1764 = vrot.slane %v1763, 4
    %v1765 = vmax.f32 %v1763, %v1764
    %v1766 = vrot.slane %v1765, 2
    %v1767 = vmax.f32 %v1765, %v1766
    %v1768 = vrot.slane %v1767, 1
    %v1769 = vmax.f32 %v1767, %v1768
    %v1770 = vsel %vm1741, %v1717, -inf
    %v1771 = vrot.slane %v1770, 4
    %v1772 = vmax.f32 %v1770, %v1771
    %v1773 = vrot.slane %v1772, 2
    %v1774 = vmax.f32 %v1772, %v1773
    %v1775 = vrot.slane %v1774, 1
    %v1776 = vmax.f32 %v1774, %v1775
    %v1777 = vsel %vm1741, %v1722, -inf
    %v1778 = vrot.slane %v1777, 4
    %v1779 = vmax.f32 %v1777, %v1778
    %v1780 = vrot.slane %v1779, 2
    %v1781 = vmax.f32 %v1779, %v1780
    %v1782 = vrot.slane %v1781, 1
    %v1783 = vmax.f32 %v1781, %v1782
    %v1784 = vsel %vm1726, %v1718, -inf
    %v1785 = vrot.slane %v1784, 4
    %v1786 = vmax.f32 %v1784, %v1785
    %v1787 = vrot.slane %v1786, 2
    %v1788 = vmax.f32 %v1786, %v1787
    %v1789 = vrot.slane %v1788, 1
    %v1790 = vmax.f32 %v1788, %v1789
    %v1791 = vsel %vm1726, %v1723, -inf
    %v1792 = vrot.slane %v1791, 4
    %v1793 = vmax.f32 %v1791, %v1792
    %v1794 = vrot.slane %v1793, 2
    %v1795 = vmax.f32 %v1793, %v1794
    %v1796 = vrot.slane %v1795, 1
    %v1797 = vmax.f32 %v1795, %v1796
    %v1798 = vsel %vm1741, %v1718, -inf
    %v1799 = vrot.slane %v1798, 4
    %v1800 = vmax.f32 %v1798, %v1799
    %v1801 = vrot.slane %v1800, 2
    %v1802 = vmax.f32 %v1800, %v1801
    %v1803 = vrot.slane %v1802, 1
    %v1804 = vmax.f32 %v1802, %v1803
    %v1805 = vsel %vm1741, %v1723, -inf
    %v1806 = vrot.slane %v1805, 4
    %v1807 = vmax.f32 %v1805, %v1806
    %v1808 = vrot.slane %v1807, 2
    %v1809 = vmax.f32 %v1807, %v1808
    %v1810 = vrot.slane %v1809, 1
    %v1811 = vmax.f32 %v1809, %v1810
    %v1812 = vsel %vm1726, %v1719, -inf
    %v1813 = vrot.slane %v1812, 4
    %v1814 = vmax.f32 %v1812, %v1813
    %v1815 = vrot.slane %v1814, 2
    %v1816 = vmax.f32 %v1814, %v1815
    %v1817 = vrot.slane %v1816, 1
    %v1818 = vmax.f32 %v1816, %v1817
    %v1819 = vsel %vm1726, %v1724, -inf
    %v1820 = vrot.slane %v1819, 4
    %v1821 = vmax.f32 %v1819, %v1820
    %v1822 = vrot.slane %v1821, 2
    %v1823 = vmax.f32 %v1821, %v1822
    %v1824 = vrot.slane %v1823, 1
    %v1825 = vmax.f32 %v1823, %v1824
    %v1826 = vsel %vm1741, %v1719, -inf
    %v1827 = vrot.slane %v1826, 4
    %v1828 = vmax.f32 %v1826, %v1827
    %v1829 = vrot.slane %v1828, 2
    %v1830 = vmax.f32 %v1828, %v1829
    %v1831 = vrot.slane %v1830, 1
    %v1832 = vmax.f32 %v1830, %v1831
    %v1833 = vsel %vm1741, %v1724, -inf
    %v1834 = vrot.slane %v1833, 4
    %v1835 = vmax.f32 %v1833, %v1834
    %v1836 = vrot.slane %v1835, 2
    %v1837 = vmax.f32 %v1835, %v1836
    %v1838 = vrot.slane %v1837, 1
    %v1839 = vmax.f32 %v1837, %v1838
    %vm1840 = vcmask 123904
    %v1841 = vsel %vm1840, %v1720, -inf
    %v1842 = vrot.slane %v1841, 4
    %v1843 = vmax.f32 %v1841, %v1842
    %v1844 = vrot.slane %v1843, 2
    %v1845 = vmax.f32 %v1843, %v1844
    %v1846 = vrot.slane %v1845, 1
    %v1847 = vmax.f32 %v1845, %v1846
    %v1848 = vsel %vm1840, %v1725, -inf
    %v1849 = vrot.slane %v1848, 4
    %v1850 = vmax.f32 %v1848, %v1849
    %v1851 = vrot.slane %v1850, 2
    %v1852 = vmax.f32 %v1850, %v1851
    %v1853 = vrot.slane %v1852, 1
    %v1854 = vmax.f32 %v1852, %v1853
    %v1855 = vsel %vm922, %v1733, %v1748
    %v1856 = vsel %vm922, %v1740, %v1755
    %v1857 = vsel %vm925, %v1855, %v1762
    %v1858 = vsel %vm925, %v1856, %v1769
    %v1859 = vsel %vm928, %v1857, %v1776
    %v1860 = vsel %vm928, %v1858, %v1783
    %v1861 = vsel %vm181, %v1859, %v1790
    %v1862 = vsel %vm181, %v1860, %v1797
    %v1863 = vsel %vm933, %v1861, %v1804
    %v1864 = vsel %vm933, %v1862, %v1811
    %v1865 = vsel %vm936, %v1863, %v1818
    %v1866 = vsel %vm936, %v1864, %v1825
    %v1867 = vsel %vm939, %v1865, %v1832
    %v1868 = vsel %vm939, %v1866, %v1839
    %v1873 = vrot.slane %v1867, 5
    %v1874 = vrot.slane %v1847, 5
    %v1875 = vsel %vm928, %v1873, %v1874
    %v1876 = vrot.slane %v1868, 5
    %v1877 = vrot.slane %v1854, 5
    %v1878 = vsel %vm928, %v1876, %v1877
    %v1883 = vsel %vm928, 0.0, %v1873
    %v1884 = vsel %vm928, 0.0, %v1876
    %v1885 = vsel %vm181, %v1875, 0.0
    %v1886 = vsel %vm181, %v1878, 0.0
    %v1891 = vrot.slane %v1883, 1
    %v1892 = vrot.slane %v1885, 1
    %v1893 = vsel %vm939, %v1891, %v1892
    %v1894 = vrot.slane %v1884, 1
    %v1895 = vrot.slane %v1886, 1
    %v1896 = vsel %vm939, %v1894, %v1895
    %1897 = vrot.lane.b32.xlu0 %v1893, 16
    %v1898 = vpop.permute.xlu0 %1897
    %1899 = vrot.lane.b32.xlu0 %v1892, 16
    %v1900 = vpop.permute.xlu0 %1899
    %1901 = vrot.lane.b32.xlu0 %v1896, 16
    %v1902 = vpop.permute.xlu0 %1901
    %1903 = vrot.lane.b32.xlu0 %v1895, 16
    %v1904 = vpop.permute.xlu0 %1903
    %v1909 = vrot.slane %v1883, 2
    %v1910 = vrot.slane %v1885, 2
    %v1911 = vsel %vm936, %v1909, %v1910
    %v1912 = vrot.slane %v1884, 2
    %v1913 = vrot.slane %v1886, 2
    %v1914 = vsel %vm936, %v1912, %v1913
    %1915 = vrot.lane.b32.xlu0 %v1911, 32
    %v1916 = vpop.permute.xlu0 %1915
    %1917 = vrot.lane.b32.xlu0 %v1910, 32
    %v1918 = vpop.permute.xlu0 %1917
    %1919 = vrot.lane.b32.xlu0 %v1914, 32
    %v1920 = vpop.permute.xlu0 %1919
    %1921 = vrot.lane.b32.xlu0 %v1913, 32
    %v1922 = vpop.permute.xlu0 %1921
    %v1927 = vrot.slane %v1883, 3
    %v1928 = vrot.slane %v1885, 3
    %v1929 = vsel %vm933, %v1927, %v1928
    %v1930 = vrot.slane %v1884, 3
    %v1931 = vrot.slane %v1886, 3
    %v1932 = vsel %vm933, %v1930, %v1931
    %1933 = vrot.lane.b32.xlu0 %v1929, 48
    %v1934 = vpop.permute.xlu0 %1933
    %1935 = vrot.lane.b32.xlu0 %v1928, 48
    %v1936 = vpop.permute.xlu0 %1935
    %1937 = vrot.lane.b32.xlu0 %v1932, 48
    %v1938 = vpop.permute.xlu0 %1937
    %1939 = vrot.lane.b32.xlu0 %v1931, 48
    %v1940 = vpop.permute.xlu0 %1939
    %v1945 = vrot.slane %v1883, 4
    %v1946 = vrot.slane %v1885, 4
    %v1947 = vsel %vm181, %v1945, %v1946
    %v1948 = vrot.slane %v1884, 4
    %v1949 = vrot.slane %v1886, 4
    %v1950 = vsel %vm181, %v1948, %v1949
    %1951 = vrot.lane.b32.xlu0 %v1947, 64
    %v1952 = vpop.permute.xlu0 %1951
    %1953 = vrot.lane.b32.xlu0 %v1946, 64
    %v1954 = vpop.permute.xlu0 %1953
    %1955 = vrot.lane.b32.xlu0 %v1950, 64
    %v1956 = vpop.permute.xlu0 %1955
    %1957 = vrot.lane.b32.xlu0 %v1949, 64
    %v1958 = vpop.permute.xlu0 %1957
    %v1963 = vrot.slane %v1883, 5
    %v1964 = vrot.slane %v1885, 5
    %v1965 = vsel %vm928, %v1963, %v1964
    %v1966 = vrot.slane %v1884, 5
    %v1967 = vrot.slane %v1886, 5
    %v1968 = vsel %vm928, %v1966, %v1967
    %1969 = vrot.lane.b32.xlu0 %v1965, 80
    %v1970 = vpop.permute.xlu0 %1969
    %1971 = vrot.lane.b32.xlu0 %v1964, 80
    %v1972 = vpop.permute.xlu0 %1971
    %1973 = vrot.lane.b32.xlu0 %v1968, 80
    %v1974 = vpop.permute.xlu0 %1973
    %1975 = vrot.lane.b32.xlu0 %v1967, 80
    %v1976 = vpop.permute.xlu0 %1975
    %v1981 = vrot.slane %v1883, 6
    %v1982 = vrot.slane %v1885, 6
    %v1983 = vsel %vm925, %v1981, %v1982
    %v1984 = vrot.slane %v1884, 6
    %v1985 = vrot.slane %v1886, 6
    %v1986 = vsel %vm925, %v1984, %v1985
    %1987 = vrot.lane.b32.xlu0 %v1983, 96
    %v1988 = vpop.permute.xlu0 %1987
    %1989 = vrot.lane.b32.xlu0 %v1982, 96
    %v1990 = vpop.permute.xlu0 %1989
    %1991 = vrot.lane.b32.xlu0 %v1986, 96
    %v1992 = vpop.permute.xlu0 %1991
    %1993 = vrot.lane.b32.xlu0 %v1985, 96
    %v1994 = vpop.permute.xlu0 %1993
    %vm1999 = vcmask 130048
    %v2000 = vsel %vm1999, %v1883, %v1898
    %v2001 = vsel %vm1999, %v1885, %v1900
    %v2002 = vsel %vm1999, %v1884, %v1902
    %v2003 = vsel %vm1999, %v1886, %v1904
    %v2004 = vsel %vm1382, %v2000, %v1916
    %v2005 = vsel %vm1382, %v2001, %v1918
    %v2006 = vsel %vm1382, %v2002, %v1920
    %v2007 = vsel %vm1382, %v2003, %v1922
    %vm2008 = vcmask 392192
    %v2009 = vsel %vm2008, %v2004, %v1934
    %v2010 = vsel %vm2008, %v2005, %v1936
    %v2011 = vsel %vm2008, %v2006, %v1938
    %v2012 = vsel %vm2008, %v2007, %v1940
    %v2013 = vsel %vm1393, %v2009, %v1952
    %v2014 = vsel %vm1393, %v2010, %v1954
    %v2015 = vsel %vm1393, %v2011, %v1956
    %v2016 = vsel %vm1393, %v2012, %v1958
    %vm2017 = vcmask 654336
    %v2018 = vsel %vm2017, %v2013, %v1970
    %v2019 = vsel %vm2017, %v2014, %v1972
    %v2020 = vsel %vm2017, %v2015, %v1974
    %v2021 = vsel %vm2017, %v2016, %v1976
    %v2022 = vsel %vm1404, %v2018, %v1988
    %v2023 = vsel %vm1404, %v2019, %v1990
    %v2024 = vsel %vm1404, %v2020, %v1992
    %v2025 = vsel %vm1404, %v2021, %v1994
    %v2026 = vsel %vm922, %v2023, 0.0
    %v2027 = vsel %vm922, %v2025, 0.0
    %v2028 = vld [vmem:[%s7] sm:$0xff]
    %v2029 = vld [vmem:[%s7 + $0x8] sm:$0xff]
    %v2030 = vld [vmem:[%s7 + $0x10] sm:$0xff]
    %v2031 = vld [vmem:[%s7 + $0x18] sm:$0xff]
    %v2032 = vld [vmem:[%s7 + $0x20] sm:$0xff]
    %v2033 = vld [vmem:[%s7 + $0x28] sm:$0xff]
    %v2034 = vld [vmem:[%s7 + $0x30] sm:$0xff]
    %v2035 = vld [vmem:[%s7 + $0x38] sm:$0xff]
    %v2036 = vld [vmem:[%s7 + $0x40] sm:$0xff]
    %v2037 = vld [vmem:[%s7 + $0x48] sm:$0xff]
    %v2038 = vld [vmem:[%s7 + $0x50] sm:$0xff]
    %v2039 = vld [vmem:[%s7 + $0x58] sm:$0xff]
    %v2040 = vld [vmem:[%s7 + $0x60] sm:$0xff]
    %v2041 = vld [vmem:[%s7 + $0x68] sm:$0xff]
    %vm2042 = vcmask 916480
    %v2044 = vsel %vm2042, %v2022, 0
    %v2047 = vsel %vm2042, %v2026, 0
    %v2050 = vsel %vm2042, %v2024, 0
    %v2053 = vsel %vm2042, %v2027, 0
    %2055 = vmatpush.msra.mxu0 0.0
    %2056 = vmatpush.msra.mxu0 0.0
    %2057 = vmatpush.msra.mxu0 %v2041
    %2058 = vmatpush.msra.mxu0 %v2040
    %2059 = vmatpush.msra.mxu0 %v2039
    %2060 = vmatpush.msra.mxu0 %v2038
    %2061 = vmatpush.msra.mxu0 %v2037
    %2062 = vmatpush.msra.mxu0 %v2036
    %2063 = vmatpush.msra.mxu0 %v2035
    %2064 = vmatpush.msra.mxu0 %v2034
    %2065 = vmatpush.msra.mxu0 %v2033
    %2066 = vmatpush.msra.mxu0 %v2032
    %2067 = vmatpush.msra.mxu0 %v2031
    %2068 = vmatpush.msra.mxu0 %v2030
    %2069 = vmatpush.msra.mxu0 %v2029
    %2070 = vmatpush.msra.mxu0 %v2028
    %2071 = vmatmul.f32.gmra.mxu0 %v2044
    %v2072 = vpop.f32.mrf.mxu0
    %v2073 = vadd.f32 0.0, %v2072
    %2074 = vmatmul.f32.gmra.mxu0 %v2047
    %v2075 = vpop.f32.mrf.mxu0
    %v2076 = vadd.f32 0.0, %v2075
    %2077 = vmatmul.f32.gmra.mxu0 %v2050
    %v2078 = vpop.f32.mrf.mxu0
    %v2079 = vadd.f32 0.0, %v2078
    %2080 = vmatmul.f32.gmra.mxu0 %v2053
    %v2081 = vpop.f32.mrf.mxu0
    %v2082 = vadd.f32 0.0, %v2081
    %2083 = vdwg.mxu0
    %v2084 = vld [vmem:[%s8] sm:$0x1]
    %v2086 = vperm.slane %v2084, 0
    %v2088 = vmul.f32 %v2073, %v2086
    %v2089 = vmul.f32 %v2076, %v2086
    %v2090 = vmul.f32 %v2079, %v2086
    %v2091 = vmul.f32 %v2082, %v2086
    %v2092 = vld [vmem:[%s9] sm:$0x1]
    %v2094 = vperm.slane %v2092, 0
    %v2096 = vadd.f32 %v2088, %v2094
    %v2097 = vadd.f32 %v2089, %v2094
    %v2098 = vadd.f32 %v2090, %v2094
    %v2099 = vadd.f32 %v2091, %v2094
    %vm2100 = vcmp.gt.f32.partialorder %v2096, 0.0
    %vm2101 = vcmp.gt.f32.partialorder %v2097, 0.0
    %vm2102 = vcmp.gt.f32.partialorder %v2098, 0.0
    %vm2103 = vcmp.gt.f32.partialorder %v2099, 0.0
    %v2104 = vmul.f32 %v2096, 0.01
    %v2105 = vmul.f32 %v2097, 0.01
    %v2106 = vmul.f32 %v2098, 0.01
    %v2107 = vmul.f32 %v2099, 0.01
    %v2108 = vsel %vm2100, %v2096, %v2104
    %v2109 = vsel %vm2101, %v2097, %v2105
    %v2110 = vsel %vm2102, %v2098, %v2106
    %v2111 = vsel %vm2103, %v2099, %v2107
    %vm2112 = vcmask 60416
    %v2113 = vsel %vm2112, %v2108, -inf
    %v2114 = vrot.slane %v2113, 4
    %v2115 = vmax.f32 %v2113, %v2114
    %v2116 = vrot.slane %v2115, 2
    %v2117 = vmax.f32 %v2115, %v2116
    %v2118 = vrot.slane %v2117, 1
    %v2119 = vmax.f32 %v2117, %v2118
    %v2120 = vsel %vm2112, %v2110, -inf
    %v2121 = vrot.slane %v2120, 4
    %v2122 = vmax.f32 %v2120, %v2121
    %v2123 = vrot.slane %v2122, 2
    %v2124 = vmax.f32 %v2122, %v2123
    %v2125 = vrot.slane %v2124, 1
    %v2126 = vmax.f32 %v2124, %v2125
    %vm2127 = vcmask 64516
    %v2128 = vsel %vm2127, %v2108, -inf
    %v2129 = vrot.slane %v2128, 4
    %v2130 = vmax.f32 %v2128, %v2129
    %v2131 = vrot.slane %v2130, 2
    %v2132 = vmax.f32 %v2130, %v2131
    %v2133 = vrot.slane %v2132, 1
    %v2134 = vmax.f32 %v2132, %v2133
    %v2135 = vsel %vm2127, %v2110, -inf
    %v2136 = vrot.slane %v2135, 4
    %v2137 = vmax.f32 %v2135, %v2136
    %v2138 = vrot.slane %v2137, 2
    %v2139 = vmax.f32 %v2137, %v2138
    %v2140 = vrot.slane %v2139, 1
    %v2141 = vmax.f32 %v2139, %v2140
    %vm2144 = vcmask 1041409
    %v2145 = vsel %vm2144, %v2126, %v2119
    %v2149 = vsel %vm2144, %v2141, %v2134
    %2150 = vrot.lane.b32.xlu0 %v2149, 8
    %v2151 = vpop.permute.xlu0 %2150
    %v2155 = vrot.slane %v2111, 7
    %v2156 = vsel %vm2144, %v2155, %v2109
    %2157 = vrot.lane.b32.xlu0 %v2156, 16
    %v2158 = vpop.permute.xlu0 %2157
    %vm2160 = vcmask 64512
    %v2161 = vsel %vm2160, %v2145, %v2151
    %v2162 = vsel %vm1999, %v2161, %v2158
    %v2163 = vld [vmem:[%s10] sm:$0xff]
    %v2164 = vld [vmem:[%s10 + $0x8] sm:$0xff]
    %v2165 = vld [vmem:[%s10 + $0x10] sm:$0xff]
    %v2166 = vld [vmem:[%s11] sm:$0x1]
    %v2168 = vperm.slane %v2166, 0
    %vm2170 = vcmask 195584
    %v2172 = vsel %vm2170, %v2162, 0
    %2174 = vmatpush.msra.mxu0 0.0
    %2175 = vmatpush.msra.mxu0 0.0
    %2176 = vmatpush.msra.mxu0 0.0
    %2177 = vmatpush.msra.mxu0 0.0
    %2178 = vmatpush.msra.mxu0 0.0
    %2179 = vmatpush.msra.mxu0 0.0
    %2180 = vmatpush.msra.mxu0 0.0
    %2181 = vmatpush.msra.mxu0 0.0
    %2182 = vmatpush.msra.mxu0 0.0
    %2183 = vmatpush.msra.mxu0 0.0
    %2184 = vmatpush.msra.mxu0 0.0
    %2185 = vmatpush.msra.mxu0 0.0
    %2186 = vmatpush.msra.mxu0 0.0
    %2187 = vmatpush.msra.mxu0 %v2165
    %2188 = vmatpush.msra.mxu0 %v2164
    %2189 = vmatpush.msra.mxu0 %v2163
    %2190 = vmatmul.f32.gmra.mxu0 %v2172
    %v2191 = vpop.f32.mrf.mxu0
    %v2192 = vadd.f32 %v2168, %v2191
    %2193 = vdwg.mxu0
    %vm2194 = vcmp.gt.f32.partialorder %v2192, 0.0
    %v2195 = vmul.f32 %v2192, 0.01
    %v2196 = vsel %vm2194, %v2192, %v2195
    %v2197 = vld [vmem:[%s12] sm:$0xff]
    %v2198 = vld [vmem:[%s12 + $0x8] sm:$0xff]
    %v2199 = vld [vmem:[%s13] sm:$0x1]
    %v2201 = vperm.slane %v2199, 0
    %v2204 = vsel %vm1999, %v2196, 0
    %2206 = vmatpush.msra.mxu0 0.0
    %2207 = vmatpush.msra.mxu0 0.0
    %2208 = vmatpush.msra.mxu0 0.0
    %2209 = vmatpush.msra.mxu0 0.0
    %2210 = vmatpush.msra.mxu0 0.0
    %2211 = vmatpush.msra.mxu0 0.0
    %2212 = vmatpush.msra.mxu0 0.0
    %2213 = vmatpush.msra.mxu0 0.0
    %2214 = vmatpush.msra.mxu0 0.0
    %2215 = vmatpush.msra.mxu0 0.0
    %2216 = vmatpush.msra.mxu0 0.0
    %2217 = vmatpush.msra.mxu0 0.0
    %2218 = vmatpush.msra.mxu0 0.0
    %2219 = vmatpush.msra.mxu0 0.0
    %2220 = vmatpush.msra.mxu0 %v2198
    %2221 = vmatpush.msra.mxu0 %v2197
    %2222 = vmatmul.f32.gmra.mxu0 %v2204
    %v2223 = vpop.f32.mrf.mxu0
    %v2224 = vadd.f32 %v2201, %v2223
    %2225 = vdwg.mxu0
    %vm2226 = vcmp.gt.f32.partialorder %v2224, 0.0
    %v2227 = vmul.f32 %v2224, 0.01
    %v2228 = vsel %vm2226, %v2224, %v2227
    %v2229 = vld [vmem:[%s14] sm:$0xff]
    %v2230 = vld [vmem:[%s14 + $0x8] sm:$0xff]
    %v2231 = vld [vmem:[%s14 + $0x10] sm:$0xff]
    %v2232 = vld [vmem:[%s15] sm:$0x1]
    %v2234 = vperm.slane %v2232, 0
    %v2237 = vsel %vm2170, %v2228, 0
    %2239 = vmatpush.msra.mxu0 0.0
    %2240 = vmatpush.msra.mxu0 0.0
    %2241 = vmatpush.msra.mxu0 0.0
    %2242 = vmatpush.msra.mxu0 0.0
    %2243 = vmatpush.msra.mxu0 0.0
    %2244 = vmatpush.msra.mxu0 0.0
    %2245 = vmatpush.msra.mxu0 0.0
    %2246 = vmatpush.msra.mxu0 0.0
    %2247 = vmatpush.msra.mxu0 0.0
    %2248 = vmatpush.msra.mxu0 0.0
    %2249 = vmatpush.msra.mxu0 0.0
    %2250 = vmatpush.msra.mxu0 0.0
    %2251 = vmatpush.msra.mxu0 0.0
    %2252 = vmatpush.msra.mxu0 %v2231
    %2253 = vmatpush.msra.mxu0 %v2230
    %2254 = vmatpush.msra.mxu0 %v2229
    %2255 = vmatmul.f32.gmra.mxu0 %v2237
    %v2256 = vpop.f32.mrf.mxu0
    %v2257 = vadd.f32 %v2234, %v2256
    %2258 = vdwg.mxu0
    %vm2259 = vcmp.gt.f32.partialorder %v2257, 0.0
    %v2260 = vmul.f32 %v2257, 0.01
    %v2261 = vsel %vm2259, %v2257, %v2260
    %v2262 = vld [vmem:[%s16] sm:$0xff]
    %v2263 = vld [vmem:[%s16 + $0x8] sm:$0xff]
    %v2264 = vld [vmem:[%s16 + $0x10] sm:$0xff]
    %v2265 = vld [vmem:[%s16 + $0x18] sm:$0xff]
    %v2266 = vld [vmem:[%s16 + $0x20] sm:$0xff]
    %v2267 = vld [vmem:[%s16 + $0x28] sm:$0xff]
    %v2268 = vld [vmem:[%s16 + $0x30] sm:$0xff]
    %v2269 = vld [vmem:[%s16 + $0x38] sm:$0xff]
    %v2270 = vld [vmem:[%s17] sm:$0x1]
    %v2272 = vperm.slane %v2270, 0
    %v2275 = vsel %vm1393, %v2261, 0
    %2277 = vmatpush.msra.mxu0 0.0
    %2278 = vmatpush.msra.mxu0 0.0
    %2279 = vmatpush.msra.mxu0 0.0
    %2280 = vmatpush.msra.mxu0 0.0
    %2281 = vmatpush.msra.mxu0 0.0
    %2282 = vmatpush.msra.mxu0 0.0
    %2283 = vmatpush.msra.mxu0 0.0
    %2284 = vmatpush.msra.mxu0 0.0
    %2285 = vmatpush.msra.mxu0 %v2269
    %2286 = vmatpush.msra.mxu0 %v2268
    %2287 = vmatpush.msra.mxu0 %v2267
    %2288 = vmatpush.msra.mxu0 %v2266
    %2289 = vmatpush.msra.mxu0 %v2265
    %2290 = vmatpush.msra.mxu0 %v2264
    %2291 = vmatpush.msra.mxu0 %v2263
    %2292 = vmatpush.msra.mxu0 %v2262
    %2293 = vmatmul.f32.gmra.mxu0 %v2275
    %v2294 = vpop.f32.mrf.mxu0
    %v2295 = vadd.f32 %v2272, %v2294
    %2296 = vdwg.mxu0
    %vm2297 = vcmp.gt.f32.partialorder %v2295, 0.0
    %v2298 = vmul.f32 %v2295, 0.01
    %v2299 = vsel %vm2297, %v2295, %v2298
    %v2300 = vld [vmem:[%s18] sm:$0xff]
    %v2301 = vld [vmem:[%s18 + $0x8] sm:$0xff]
    %v2302 = vld [vmem:[%s18 + $0x10] sm:$0xff]
    %v2303 = vld [vmem:[%s18 + $0x18] sm:$0xff]
    %v2304 = vld [vmem:[%s18 + $0x20] sm:$0xff]
    %v2305 = vld [vmem:[%s18 + $0x28] sm:$0xff]
    %v2306 = vld [vmem:[%s18 + $0x30] sm:$0xff]
    %v2307 = vld [vmem:[%s18 + $0x38] sm:$0xff]
    %v2308 = vld [vmem:[%s18 + $0x40] sm:$0xff]
    %v2309 = vld [vmem:[%s18 + $0x48] sm:$0xff]
    %v2310 = vld [vmem:[%s18 + $0x50] sm:$0xff]
    %v2311 = vld [vmem:[%s18 + $0x58] sm:$0xff]
    %v2312 = vld [vmem:[%s18 + $0x60] sm:$0xff]
    %v2313 = vld [vmem:[%s18 + $0x68] sm:$0xff]
    %v2314 = vld [vmem:[%s18 + $0x70] sm:$0xff]
    %v2315 = vld [vmem:[%s18 + $0x78] sm:$0xff]
    %v2316 = vld [vmem:[%s18 + $0x80] sm:$0xff]
    %v2317 = vld [vmem:[%s18 + $0x88] sm:$0xff]
    %v2318 = vld [vmem:[%s18 + $0x90] sm:$0xff]
    %v2319 = vld [vmem:[%s18 + $0x98] sm:$0xff]
    %v2320 = vld [vmem:[%s18 + $0xa0] sm:$0xff]
    %v2321 = vld [vmem:[%s18 + $0xa8] sm:$0xff]
    %v2322 = vld [vmem:[%s18 + $0xb0] sm:$0xff]
    %v2323 = vld [vmem:[%s18 + $0xb8] sm:$0xff]
    %v2324 = vld [vmem:[%s18 + $0xc0] sm:$0xff]
    %v2325 = vld [vmem:[%s18 + $0xc8] sm:$0xff]
    %v2326 = vld [vmem:[%s18 + $0xd0] sm:$0xff]
    %v2327 = vld [vmem:[%s18 + $0xd8] sm:$0xff]
    %v2328 = vld [vmem:[%s18 + $0xe0] sm:$0xff]
    %v2329 = vld [vmem:[%s18 + $0xe8] sm:$0xff]
    %v2330 = vld [vmem:[%s18 + $0xf0] sm:$0xff]
    %v2331 = vld [vmem:[%s18 + $0xf8] sm:$0xff]
    %v2332 = vld [vmem:[%s18 + $0x100] sm:$0xff]
    %v2333 = vld [vmem:[%s18 + $0x108] sm:$0xff]
    %v2334 = vld [vmem:[%s18 + $0x110] sm:$0xff]
    %v2335 = vld [vmem:[%s18 + $0x118] sm:$0xff]
    %v2336 = vld [vmem:[%s18 + $0x120] sm:$0xff]
    %v2337 = vld [vmem:[%s18 + $0x128] sm:$0xff]
    %v2338 = vld [vmem:[%s18 + $0x130] sm:$0xff]
    %v2339 = vld [vmem:[%s18 + $0x138] sm:$0xff]
    %v2340 = vld [vmem:[%s18 + $0x140] sm:$0xff]
    %v2341 = vld [vmem:[%s18 + $0x148] sm:$0xff]
    %v2342 = vld [vmem:[%s18 + $0x150] sm:$0xff]
    %v2343 = vld [vmem:[%s18 + $0x158] sm:$0xff]
    %v2344 = vld [vmem:[%s18 + $0x160] sm:$0xff]
    %v2345 = vld [vmem:[%s18 + $0x168] sm:$0xff]
    %v2346 = vld [vmem:[%s18 + $0x170] sm:$0xff]
    %v2347 = vld [vmem:[%s18 + $0x178] sm:$0xff]
    %v2348 = vld [vmem:[%s18 + $0x180] sm:$0xff]
    %v2349 = vld [vmem:[%s18 + $0x188] sm:$0xff]
    %v2350 = vld [vmem:[%s18 + $0x190] sm:$0xff]
    %v2351 = vld [vmem:[%s18 + $0x198] sm:$0xff]
    %v2352 = vld [vmem:[%s18 + $0x1a0] sm:$0xff]
    %v2353 = vld [vmem:[%s18 + $0x1a8] sm:$0xff]
    %v2354 = vld [vmem:[%s18 + $0x1b0] sm:$0xff]
    %v2355 = vld [vmem:[%s18 + $0x1b8] sm:$0xff]
    %v2356 = vld [vmem:[%s18 + $0x1c0] sm:$0xff]
    %v2357 = vld [vmem:[%s18 + $0x1c8] sm:$0xff]
    %v2358 = vld [vmem:[%s18 + $0x1d0] sm:$0xff]
    %v2359 = vld [vmem:[%s18 + $0x1d8] sm:$0xff]
    %v2360 = vld [vmem:[%s18 + $0x1e0] sm:$0xff]
    %v2361 = vld [vmem:[%s18 + $0x1e8] sm:$0xff]
    %v2362 = vld [vmem:[%s18 + $0x1f0] sm:$0xff]
    %v2363 = vld [vmem:[%s18 + $0x1f8] sm:$0xff]
    %v2364 = vld [vmem:[%s19] sm:$0xf]
    %v2366 = vperm.slane %v2364, 0
    %v2367 = vperm.slane %v2364, 1
    %v2368 = vperm.slane %v2364, 2
    %v2369 = vperm.slane %v2364, 3
    %2374 = vmatpush.msra.mxu0 %v2360
    %2375 = vmatpush.msra.mxu0 %v2356
    %2376 = vmatpush.msra.mxu0 %v2352
    %2377 = vmatpush.msra.mxu0 %v2348
    %2378 = vmatpush.msra.mxu0 %v2344
    %2379 = vmatpush.msra.mxu0 %v2340
    %2380 = vmatpush.msra.mxu0 %v2336
    %2381 = vmatpush.msra.mxu0 %v2332
    %2382 = vmatpush.msra.mxu0 %v2328
    %2383 = vmatpush.msra.mxu0 %v2324
    %2384 = vmatpush.msra.mxu0 %v2320
    %2385 = vmatpush.msra.mxu0 %v2316
    %2386 = vmatpush.msra.mxu0 %v2312
    %2387 = vmatpush.msra.mxu0 %v2308
    %2388 = vmatpush.msra.mxu0 %v2304
    %2389 = vmatpush.msra.mxu0 %v2300
    %2390 = vmatmul.f32.gmra.mxu0 %v2299
    %v2391 = vpop.f32.mrf.mxu0
    %v2392 = vadd.f32 %v2366, %v2391
    %2393 = vdwg.mxu0
    %2394 = vmatpush.msra.mxu0 %v2361
    %2395 = vmatpush.msra.mxu0 %v2357
    %2396 = vmatpush.msra.mxu0 %v2353
    %2397 = vmatpush.msra.mxu0 %v2349
    %2398 = vmatpush.msra.mxu0 %v2345
    %2399 = vmatpush.msra.mxu0 %v2341
    %2400 = vmatpush.msra.mxu0 %v2337
    %2401 = vmatpush.msra.mxu0 %v2333
    %2402 = vmatpush.msra.mxu0 %v2329
    %2403 = vmatpush.msra.mxu0 %v2325
    %2404 = vmatpush.msra.mxu0 %v2321
    %2405 = vmatpush.msra.mxu0 %v2317
    %2406 = vmatpush.msra.mxu0 %v2313
    %2407 = vmatpush.msra.mxu0 %v2309
    %2408 = vmatpush.msra.mxu0 %v2305
    %2409 = vmatpush.msra.mxu0 %v2301
    %2410 = vmatmul.f32.gmra.mxu0 %v2299
    %v2411 = vpop.f32.mrf.mxu0
    %v2412 = vadd.f32 %v2367, %v2411
    %2413 = vdwg.mxu0
    %2414 = vmatpush.msra.mxu0 %v2362
    %2415 = vmatpush.msra.mxu0 %v2358
    %2416 = vmatpush.msra.mxu0 %v2354
    %2417 = vmatpush.msra.mxu0 %v2350
    %2418 = vmatpush.msra.mxu0 %v2346
    %2419 = vmatpush.msra.mxu0 %v2342
    %2420 = vmatpush.msra.mxu0 %v2338
    %2421 = vmatpush.msra.mxu0 %v2334
    %2422 = vmatpush.msra.mxu0 %v2330
    %2423 = vmatpush.msra.mxu0 %v2326
    %2424 = vmatpush.msra.mxu0 %v2322
    %2425 = vmatpush.msra.mxu0 %v2318
    %2426 = vmatpush.msra.mxu0 %v2314
    %2427 = vmatpush.msra.mxu0 %v2310
    %2428 = vmatpush.msra.mxu0 %v2306
    %2429 = vmatpush.msra.mxu0 %v2302
    %2430 = vmatmul.f32.gmra.mxu0 %v2299
    %v2431 = vpop.f32.mrf.mxu0
    %v2432 = vadd.f32 %v2368, %v2431
    %2433 = vdwg.mxu0
    %2434 = vmatpush.msra.mxu0 %v2363
    %2435 = vmatpush.msra.mxu0 %v2359
    %2436 = vmatpush.msra.mxu0 %v2355
    %2437 = vmatpush.msra.mxu0 %v2351
    %2438 = vmatpush.msra.mxu0 %v2347
    %2439 = vmatpush.msra.mxu0 %v2343
    %2440 = vmatpush.msra.mxu0 %v2339
    %2441 = vmatpush.msra.mxu0 %v2335
    %2442 = vmatpush.msra.mxu0 %v2331
    %2443 = vmatpush.msra.mxu0 %v2327
    %2444 = vmatpush.msra.mxu0 %v2323
    %2445 = vmatpush.msra.mxu0 %v2319
    %2446 = vmatpush.msra.mxu0 %v2315
    %2447 = vmatpush.msra.mxu0 %v2311
    %2448 = vmatpush.msra.mxu0 %v2307
    %2449 = vmatpush.msra.mxu0 %v2303
    %2450 = vmatmul.f32.gmra.mxu0 %v2299
    %v2451 = vpop.f32.mrf.mxu0
    %v2452 = vadd.f32 %v2369, %v2451
    %2453 = vdwg.mxu0
    %2456 = vrot.lane.b32.xlu0 %v2392, 28
    %v2457 = vpop.permute.xlu0 %2456
    %2458 = vrot.lane.b32.xlu0 %v2412, 28
    %v2459 = vpop.permute.xlu0 %2458
    %vm2460 = vcmask 228352
    %v2461 = vsel %vm2460, %v2457, %v2459
    %v2463 = vmax.f32 %v2392, %v2461
    %2466 = vrot.lane.b32.xlu0 %v2432, 28
    %v2467 = vpop.permute.xlu0 %2466
    %2468 = vrot.lane.b32.xlu0 %v2452, 28
    %v2469 = vpop.permute.xlu0 %2468
    %v2470 = vsel %vm2460, %v2467, %v2469
    %v2473 = vmax.f32 %v2412, %v2467
    %v2474 = vmax.f32 %v2432, %v2470
    %2477 = vrot.lane.b32.xlu0 %v2473, 56
    %v2478 = vpop.permute.xlu0 %2477
    %2479 = vrot.lane.b32.xlu0 %v2474, 56
    %v2480 = vpop.permute.xlu0 %2479
    %vm2481 = vcmask 457728
    %v2482 = vsel %vm2481, %v2478, %v2480
    %v2484 = vmax.f32 %v2463, %v2482
    %v2485 = vsub.f32 %v2392, %v2484
    %v2486 = vmul.f32 %v2485, 1.442695
    %v2487 = vpow.pop %v2486
    %2489 = vrot.lane.b32.xlu0 %v2484, 100
    %v2490 = vpop.permute.xlu0 %2489
    %v2492 = vsub.f32 %v2392, %v2490
    %v2493 = vsub.f32 %v2412, %v2490
    %v2494 = vmul.f32 %v2492, 1.442695
    %v2495 = vpow.pop %v2494
    %v2496 = vmul.f32 %v2493, 1.442695
    %v2497 = vpow.pop %v2496
    %2498 = vrot.lane.b32.xlu0 %v2484, 72
    %v2499 = vpop.permute.xlu0 %2498
    %v2501 = vsub.f32 %v2412, %v2499
    %v2502 = vsub.f32 %v2432, %v2499
    %v2503 = vmul.f32 %v2501, 1.442695
    %v2504 = vpow.pop %v2503
    %v2505 = vmul.f32 %v2502, 1.442695
    %v2506 = vpow.pop %v2505
    %2507 = vrot.lane.b32.xlu0 %v2484, 44
    %v2508 = vpop.permute.xlu0 %2507
    %v2510 = vsub.f32 %v2432, %v2508
    %v2511 = vsub.f32 %v2452, %v2508
    %v2512 = vmul.f32 %v2510, 1.442695
    %v2513 = vpow.pop %v2512
    %v2514 = vmul.f32 %v2511, 1.442695
    %v2515 = vpow.pop %v2514
    %2518 = vrot.lane.b32.xlu0 %v2495, 28
    %v2519 = vpop.permute.xlu0 %2518
    %2520 = vrot.lane.b32.xlu0 %v2497, 28
    %v2521 = vpop.permute.xlu0 %2520
    %v2522 = vsel %vm2460, %v2519, %v2521
    %v2524 = vadd.f32 %v2487, %v2522
    %2527 = vrot.lane.b32.xlu0 %v2504, 56
    %v2528 = vpop.permute.xlu0 %2527
    %2529 = vrot.lane.b32.xlu0 %v2506, 56
    %v2530 = vpop.permute.xlu0 %2529
    %v2531 = vsel %vm2481, %v2528, %v2530
    %v2533 = vadd.f32 %v2524, %v2531
    %2536 = vrot.lane.b32.xlu0 %v2513, 84
    %v2537 = vpop.permute.xlu0 %2536
    %2538 = vrot.lane.b32.xlu0 %v2515, 84
    %v2539 = vpop.permute.xlu0 %2538
    %vm2540 = vcmask 687104
    %v2541 = vsel %vm2540, %v2537, %v2539
    %v2543 = vadd.f32 %v2533, %v2541
    %v2544 = vrcp.pop %v2543
    %v2545 = vmul.f32 %v2543, %v2544
    %v2546 = vsub.f32 1.0, %v2545
    %v2547 = vmul.f32 %v2544, %v2546
    %v2548 = vadd.f32 %v2544, %v2547
    %vm2549 = vweird.f32 %v2543
    %vm2550 = vweird.f32 %v2544
    %vm2551 = vmor %vm2549, %vm2550
    %v2552 = vsel %vm2551, %v2544, %v2548
    %v2553 = vand.u32 2147483647, %v2543
    %vm2554 = vcmp.eq.f32.partialorder %v2553, 8.507059e+37
    %v2555 = vand.u32 %v2543, 2147483648
    %v2556 = vor.u32 1.1754944e-38, %v2555
    %v2557 = vsel %vm2554, %v2556, %v2552
    %v2558 = vmul.f32 %v2487, %v2557
    %2560 = vrot.lane.b32.xlu0 %v2557, 100
    %v2561 = vpop.permute.xlu0 %2560
    %v2563 = vmul.f32 %v2495, %v2561
    %v2564 = vmul.f32 %v2497, %v2561
    %2565 = vrot.lane.b32.xlu0 %v2557, 72
    %v2566 = vpop.permute.xlu0 %2565
    %v2568 = vmul.f32 %v2504, %v2566
    %v2569 = vmul.f32 %v2506, %v2566
    %2570 = vrot.lane.b32.xlu0 %v2557, 44
    %v2571 = vpop.permute.xlu0 %2570
    %v2573 = vmul.f32 %v2513, %v2571
    %v2574 = vmul.f32 %v2515, %v2571
    %vm2575 = vcmask 818176
    %v2576 = vsel %vm2575, %v2558, %v2563
    %vm2577 = vcmask 588800
    %v2578 = vsel %vm2577, %v2564, %v2568
    %vm2579 = vcmask 359424
    %v2580 = vsel %vm2579, %v2569, %v2573
    %v2581 = vsel %vm1999, %v2574, 0.0
    %v2586 = vrot.slane %v2578, 6
    %v2587 = vrot.slane %v2580, 4
    %v2588 = vrot.slane %v2581, 2
    %v2589 = vsel %vm925, %v2576, %v2586
    %vm2590 = vcmask 1045508
    %v2591 = vsel %vm2590, %v2587, %v2588
    %v2592 = vsel %vm181, %v2589, %v2591
    %2594 = vst [vmem:[#allocation2] sm:$0xff] %v2592
    // Predicated region
    $region82: #{tpu_custom_call.1} parent=1 // pred_check
      _
    $region83: #{tpu_custom_call.1} parent=1 // pred_check_branch
      %2596 = sbr.rel (0) target = $region85
    $region84: #{tpu_custom_call.1} parent=1 // pred_region
      %2598 = vsyncadd [#allocation3], 0
      %s2600 = sshll.u32 [#allocation2], 4
      %s2601 = int_to_ptr.vmem [resolvable:$true] %s2600
      %s2602 = sshll.u32 %s20, 4
      %s2603 = int_to_ptr.hbm [resolvable:$true] %s2602
      %2605 = dma.vmem_to_hbm [thread:$0]  %s2601, 128, %s2603, [#allocation3]
    $region85: #{tpu_custom_call.1} parent=1 // pred_fallthru
      _
    // Predicated region
    $region86: #{tpu_custom_call.1} parent=1 // pred_check
      _
    $region87: #{tpu_custom_call.1} parent=1 // pred_check_branch
      %2607 = sbr.rel (0) target = $region89
    $region88: #{tpu_custom_call.1} parent=1 // pred_region
      %2609 = dma.done [#allocation3], 128
    $region89: #{tpu_custom_call.1} parent=1 // pred_fallthru
      _
    %2610 = vsyncpa [#allocation3], 1

</llo_original>
